<compile_context>
chip_gen: v7x
topology: tpu7x:2x2x1
jax: 0.10.0
libtpu: 0.0.40
codegen_flags: <defaults>
</compile_context>

<pallas_src>
import jax
import jax.numpy as jnp
from jax import lax
from jax.experimental import pallas as pl
from jax.experimental.pallas import tpu as pltpu

# ---- static configuration (torch hyper-params, scaled down) ----
B = 2              # batch
S = 16             # sequence length (tokens)
H_BERT = 16        # BERT hidden size (must equal S, see note above)
C_OUT = 8          # cnn_out_channels
HID = 16           # lstm_hidden_size
NUM_CLASSES = 3
T = H_BERT         # LSTM "time" axis after the permute chain
H2 = 2 * HID       # 32 : concatenated bi-directional hidden
NG = 8 * HID       # 128: fused gate lanes [i_f i_b | f_f f_b | o_f o_b | g_f g_b]
LANES = 128

# packed-parameter slab row offsets (all multiples of 8)
R_WX = 0           # rows [0:128)  : conv∘W_ih for both dirs + bias row at 6*S
R_WHH = 128        # rows [128:160): block recurrent weights (2*HID, NG)
R_ATTN = 160       # row 160       : attention weight (lanes [0:2*HID))
R_WCLS = 168       # rows [168:200): classifier weight (lanes [0:NUM_CLASSES))
R_BCLS = 200       # row 200       : classifier bias (lanes [0:NUM_CLASSES))
PACK_ROWS = 208

assert S == H_BERT, "torch forward's squeeze(3)/permute chain requires seq_len == bert hidden size"


def _sigmoid(x):
    # Exact sigmoid: approximation error would compound through the 16-step
    # recurrence, so approx reciprocal is reserved for the softmax denominator.
    return 1.0 / (1.0 + jnp.exp(-x))


def _fused_kernel(x_ref, p_ref, out_ref, gbuf, hbuf):
    # ---- Conv2d + both directions' input projections (+ biases via the constant-1
    # column of x): ONE lane-dense (128,128)x(128,128) MXU matmul, staged to VMEM. ----
    gbuf[...] = jnp.dot(x_ref[...], p_ref[:T * 8, :],
                        preferred_element_type=jnp.float32)

    w_hh = p_ref[R_WHH:R_WHH + H2, :]            # (2*HID, NG) block recurrent weights

    hc = jnp.zeros((8, H2), jnp.float32)         # [h_fwd | h_bwd]
    cc = jnp.zeros((8, H2), jnp.float32)         # [c_fwd | c_bwd]

    # ---- fully-unrolled BiLSTM: ONE fused recurrent matmul per step drives both
    # directions (fwd consumes time t, bwd consumes time T-1-t). ----
    for t in range(T):
        tb = T - 1 - t
        pre = gbuf[t * 8:(t + 1) * 8, :] + jnp.dot(
            hc, w_hh, preferred_element_type=jnp.float32)          # (8, 128)
        i_g = _sigmoid(pre[:, 0 * H2:1 * H2])
        f_g = _sigmoid(pre[:, 1 * H2:2 * H2])
        o_g = _sigmoid(pre[:, 2 * H2:3 * H2])
        g_g = jnp.tanh(pre[:, 3 * H2:4 * H2])
        cc = f_g * cc + i_g * g_g
        hc = o_g * jnp.tanh(cc)
        # unified hidden history: forward output at row t, backward at row T-1-t
        hbuf[t, :, :HID] = hc[:, :HID]
        hbuf[tb, :, HID:] = hc[:, HID:]

    # ---- Attention (softmax over time) + classifier: fully batched epilogue ----
    h_all = hbuf[...]                                              # (T, 8, 2*HID)
    w_attn = p_ref[R_ATTN:R_ATTN + 1, :H2]                         # (1, 2*HID)
    s = jnp.sum(h_all * w_attn, axis=-1, keepdims=True)            # (T, 8, 1) VPU+XLU
    m = jnp.max(s, axis=0, keepdims=True)
    e = jnp.exp(s - m)
    wts = e * pl.reciprocal(jnp.sum(e, axis=0, keepdims=True), approx=True)
    pooled = jnp.sum(wts * h_all, axis=0)                          # (8, 2*HID)
    # TODO(synk): torch does `attention_output[:, -1, :]`, an IndexError on the
    # already-pooled 2-D tensor; the classifier is applied to the pooled vector.
    logits = (jnp.dot(pooled, p_ref[R_WCLS:R_WCLS + H2, :],
                      preferred_element_type=jnp.float32)
              + p_ref[R_BCLS:R_BCLS + 1, :])                       # (8, 128)
    out_ref[...] = logits[:B, :NUM_CLASSES]


_GATE_ORDER = (0, 1, 3, 2)   # torch blocks [i, f, g, o] -> kernel groups [i, f, o, g]


def _interleave_gates(m_f, m_b):
    """(..., 4*HID) pair in torch gate order -> (..., 8*HID) kernel layout
    [i_f i_b | f_f f_b | o_f o_b | g_f g_b]."""
    blocks = []
    for gi in _GATE_ORDER:
        blocks.append(m_f[..., gi * HID:(gi + 1) * HID])
        blocks.append(m_b[..., gi * HID:(gi + 1) * HID])
    return jnp.concatenate(blocks, axis=-1)


def bert_2dcnn_bilstm_attn_pallas(last_hidden_state, params):
    conv_w, conv_b, lstm_params, attn_w, cls_w, cls_b = params
    f32 = jnp.float32
    hi = lax.Precision.HIGHEST

    # ---- x slab: row (t*8+b) = [fwd conv window at t | bwd window at T-1-t | 1 | 0-pad]
    xT = jnp.pad(jnp.transpose(last_hidden_state, (0, 2, 1)).astype(f32),
                 ((0, 0), (1, 1), (0, 0)))                                    # (B, H+2, S)
    windows = jnp.concatenate([xT[:, kh:kh + T, :] for kh in range(3)], axis=-1)  # (B, T, 3S)
    xcomb = jnp.concatenate([windows, windows[:, ::-1, :],
                             jnp.ones((B, T, 1), f32),
                             jnp.zeros((B, T, LANES - 6 * S - 1), f32)], axis=-1)  # (B, T, 128)
    x_slab = jnp.pad(jnp.transpose(xcomb, (1, 0, 2)),
                     ((0, 0), (0, 8 - B), (0, 0))).reshape(T * 8, LANES)      # (128, 128)

    # ---- pre-compose conv weights with both directions' LSTM input projections ----
    wconv = jnp.transpose(conv_w[:, 0], (1, 2, 0)).reshape(3 * S, C_OUT).astype(f32)
    comp, bias, whhT = [], [], []
    for d in range(2):
        w_ih, w_hh, b_ih, b_hh = lstm_params[d]
        comp.append(jnp.dot(wconv, w_ih.T.astype(f32), precision=hi))         # (3S, 4*HID)
        bias.append(jnp.dot(conv_b.astype(f32), w_ih.T.astype(f32), precision=hi)
                    + b_ih.astype(f32) + b_hh.astype(f32))                    # (4*HID,)
        whhT.append(w_hh.T.astype(f32))                                       # (HID, 4*HID)

    z3s = jnp.zeros_like(comp[0])
    zh = jnp.zeros_like(whhT[0])
    w_x = jnp.zeros((T * 8, NG), f32)
    w_x = w_x.at[0:3 * S].set(_interleave_gates(comp[0], z3s))                # fwd window rows
    w_x = w_x.at[3 * S:6 * S].set(_interleave_gates(z3s, comp[1]))            # bwd window rows
    w_x = w_x.at[6 * S].set(_interleave_gates(bias[0], bias[1]))              # bias row (x lane 96 == 1)
    w_hh_blk = jnp.concatenate([_interleave_gates(whhT[0], zh),
                                _interleave_gates(zh, whhT[1])], axis=0)      # (2*HID, NG)

    packed = jnp.zeros((PACK_ROWS, NG), f32)
    packed = packed.at[R_WX:R_WX + T * 8].set(w_x)
    packed = packed.at[R_WHH:R_WHH + H2].set(w_hh_blk)
    packed = packed.at[R_ATTN, :H2].set(attn_w[0].astype(f32))
    packed = packed.at[R_WCLS:R_WCLS + H2, :NUM_CLASSES].set(cls_w.T.astype(f32))
    packed = packed.at[R_BCLS, :NUM_CLASSES].set(cls_b.astype(f32))

    grid_spec = pltpu.PrefetchScalarGridSpec(
        num_scalar_prefetch=0,
        grid=(1,),
        in_specs=[pl.BlockSpec((T * 8, LANES), lambda i: (0, 0)),
                  pl.BlockSpec((PACK_ROWS, NG), lambda i: (0, 0))],
        out_specs=pl.BlockSpec((B, NUM_CLASSES), lambda i: (0, 0)),
        scratch_shapes=[pltpu.VMEM((T * 8, NG), jnp.float32),
                        pltpu.VMEM((T, 8, H2), jnp.float32)],
    )
    # TODO(synk): at real (larger) batch sizes, add a leading "parallel" batch grid
    # axis so v7x's second TensorCore is used; at B=2 everything fits one invocation.
    return pl.pallas_call(
        _fused_kernel,
        out_shape=jax.ShapeDtypeStruct((B, NUM_CLASSES), jnp.float32),
        grid_spec=grid_spec,
        compiler_params=pltpu.CompilerParams(dimension_semantics=("arbitrary",)),
    )(x_slab, packed)


# ---------------- pure-JAX reference mirroring the torch ops ----------------
def reference_forward(last_hidden_state, params):
    conv_w, conv_b, lstm_params, attn_w, cls_w, cls_b = params
    x = jnp.transpose(last_hidden_state, (0, 2, 1))[:, None]              # (B,1,H,S) NCHW
    cnn = lax.conv_general_dilated(x, conv_w, window_strides=(1, 1),
                                   padding=((1, 1), (0, 0)),
                                   dimension_numbers=("NCHW", "OIHW", "NCHW"))
    cnn = cnn + conv_b[None, :, None, None]
    cnn = jnp.squeeze(cnn, 3)                                             # (B, C_OUT, T)
    cnn = jnp.transpose(cnn, (0, 2, 1))                                   # (B, T, C_OUT)

    def lstm_dir(seq, w_ih, w_hh, b_ih, b_hh, reverse):
        xs = seq[::-1] if reverse else seq

        def step(carry, x_t):
            h, c = carry
            gates = x_t @ w_ih.T + b_ih + h @ w_hh.T + b_hh
            i, f, g, o = jnp.split(gates, 4)
            i = jax.nn.sigmoid(i); f = jax.nn.sigmoid(f)
            g = jnp.tanh(g); o = jax.nn.sigmoid(o)
            c = f * c + i * g
            h = o * jnp.tanh(c)
            return (h, c), h

        _, hs = lax.scan(step, (jnp.zeros(HID), jnp.zeros(HID)), xs)
        return hs[::-1] if reverse else hs

    logits = []
    for b in range(B):
        hf = lstm_dir(cnn[b], *lstm_params[0], reverse=False)
        hb = lstm_dir(cnn[b], *lstm_params[1], reverse=True)
        lstm_out = jnp.concatenate([hf, hb], axis=-1)                     # (T, 2*HID)
        scores = (lstm_out @ attn_w.T)[:, 0]                              # (T,)
        wts = jax.nn.softmax(scores)
        pooled = wts @ lstm_out                                           # (2*HID,)
        logits.append(pooled @ cls_w.T + cls_b)
    return jnp.stack(logits)


def init_params(key):
    ks = jax.random.split(key, 13)
    conv_w = 0.1 * jax.random.normal(ks[0], (C_OUT, 1, 3, H_BERT), jnp.float32)
    conv_b = 0.1 * jax.random.normal(ks[1], (C_OUT,), jnp.float32)
    lstm_params, i = [], 2
    for _ in range(2):
        w_ih = 0.1 * jax.random.normal(ks[i], (4 * HID, C_OUT), jnp.float32); i += 1
        w_hh = 0.1 * jax.random.normal(ks[i], (4 * HID, HID), jnp.float32); i += 1
        b_ih = 0.1 * jax.random.normal(ks[i], (4 * HID,), jnp.float32); i += 1
        b_hh = 0.1 * jax.random.normal(ks[i], (4 * HID,), jnp.float32); i += 1
        lstm_params.append((w_ih, w_hh, b_ih, b_hh))
    attn_w = 0.1 * jax.random.normal(ks[10], (1, 2 * HID), jnp.float32)
    cls_w = 0.1 * jax.random.normal(ks[11], (NUM_CLASSES, 2 * HID), jnp.float32)
    cls_b = 0.1 * jax.random.normal(ks[12], (NUM_CLASSES,), jnp.float32)
    return conv_w, conv_b, lstm_params, attn_w, cls_w, cls_b


if __name__ == "__main__":
    key = jax.random.PRNGKey(0)
    k_hidden, k_params = jax.random.split(key)
    # TODO(synk): the pretrained BERT encoder (AutoModel.from_pretrained) cannot be reproduced
    # in-script; its last_hidden_state is supplied as a deterministic synthetic input
    # (attention_mask only feeds BERT and is therefore unused downstream).
    last_hidden_state = jax.random.normal(k_hidden, (B, S, H_BERT), jnp.float32)
    params = init_params(k_params)

    out = jax.block_until_ready(bert_2dcnn_bilstm_attn_pallas(last_hidden_state, params))

    with jax.default_matmul_precision("highest"):
        ref = reference_forward(last_hidden_state, params)
    assert out.shape == (B, NUM_CLASSES)
    max_err = float(jnp.max(jnp.abs(out - ref)))
    assert max_err < 2e-3, f"mismatch vs reference: {max_err}"
    print("KERNEL_OK")
</pallas_src>

<mosaic_0001>
module attributes {stable_mosaic.version = 11 : i64} {
  func.func @_fused_kernel(%arg0: i32, %arg1: memref<128x128xf32, #tpu.memory_space<vmem>>, %arg2: memref<208x128xf32, #tpu.memory_space<vmem>>, %arg3: memref<2x3xf32, #tpu.memory_space<vmem>>, %arg4: memref<128x128xf32, #tpu.memory_space<vmem>>, %arg5: memref<16x8x32xf32, #tpu.memory_space<vmem>>) attributes {dimension_semantics = [#tpu.dimension_semantics<arbitrary>], iteration_bounds = array<i64: 1>, scalar_prefetch = 0 : i64, scratch_operands = 2 : i64, tpu.core_type = #tpu.core_type<tc>, window_params = [{pipeline_mode = #tpu.pipeline_mode<synchronous>, transform_indices = @transform_0, window_bounds = array<i64: 128, 128>}, {pipeline_mode = #tpu.pipeline_mode<synchronous>, transform_indices = @transform_1, window_bounds = array<i64: 208, 128>}, {pipeline_mode = #tpu.pipeline_mode<synchronous>, transform_indices = @transform_2, window_bounds = array<i64: 2, 3>}]} {
    %c0 = arith.constant 0 : index
    %c0_0 = arith.constant 0 : index
    %0 = vector.load %arg1[%c0, %c0_0] : memref<128x128xf32, #tpu.memory_space<vmem>>, vector<128x128xf32>
    %c0_1 = arith.constant 0 : index
    %c0_2 = arith.constant 0 : index
    %1 = vector.load %arg2[%c0_1, %c0_2] : memref<208x128xf32, #tpu.memory_space<vmem>>, vector<128x128xf32>
    %cst = arith.constant dense<0.000000e+00> : vector<128x128xf32>
    %2 = tpu.matmul %0, %1, %cst {dimension_numbers = #tpu.dot_dimension_numbers<[1], [0], [0], [1], [0, 0, 1, 1], [], []>} : vector<128x128xf32>, vector<128x128xf32>, vector<128x128xf32> -> vector<128x128xf32>
    %c0_3 = arith.constant 0 : index
    %c0_4 = arith.constant 0 : index
    %3 = vector.load %arg4[%c0_3, %c0_4] : memref<128x128xf32, #tpu.memory_space<vmem>>, vector<128x128xf32>
    tpu.vector_store %arg4[%c0_3, %c0_4], %2 {strides = array<i32>} : memref<128x128xf32, #tpu.memory_space<vmem>>, vector<128x128xf32>,
    %c128 = arith.constant 128 : index
    %c0_5 = arith.constant 0 : index
    %4 = vector.load %arg2[%c128, %c0_5] : memref<208x128xf32, #tpu.memory_space<vmem>>, vector<32x128xf32>
    %cst_6 = arith.constant 0.000000e+00 : f32
    %5 = vector.broadcast %cst_6 : f32 to vector<8x32xf32>
    %cst_7 = arith.constant 0.000000e+00 : f32
    %6 = vector.broadcast %cst_7 : f32 to vector<8x32xf32>
    %c0_8 = arith.constant 0 : index
    %c0_9 = arith.constant 0 : index
    %7 = vector.load %arg4[%c0_8, %c0_9] : memref<128x128xf32, #tpu.memory_space<vmem>>, vector<8x128xf32>
    %cst_10 = arith.constant dense<0.000000e+00> : vector<8x128xf32>
    %8 = tpu.matmul %5, %4, %cst_10 {dimension_numbers = #tpu.dot_dimension_numbers<[1], [0], [0], [1], [0, 0, 1, 1], [], []>} : vector<8x32xf32>, vector<32x128xf32>, vector<8x128xf32> -> vector<8x128xf32>
    %9 = arith.addf %7, %8 : vector<8x128xf32>
    %10 = vector.extract_strided_slice %9 {offsets = [0, 0], sizes = [8, 32], strides = [1, 1]} : vector<8x128xf32> to vector<8x32xf32>
    %cst_11 = arith.constant 0.000000e+00 : f32
    %11 = vector.broadcast %cst_11 : f32 to vector<8x32xf32>
    %12 = arith.subf %11, %10 : vector<8x32xf32>
    %13 = math.exp %12 : vector<8x32xf32>
    %cst_12 = arith.constant 1.000000e+00 : f32
    %14 = vector.broadcast %cst_12 : f32 to vector<8x32xf32>
    %15 = arith.addf %14, %13 : vector<8x32xf32>
    %cst_13 = arith.constant 1.000000e+00 : f32
    %16 = vector.broadcast %cst_13 : f32 to vector<8x32xf32>
    %17 = arith.divf %16, %15 : vector<8x32xf32>
    %18 = vector.extract_strided_slice %9 {offsets = [0, 32], sizes = [8, 32], strides = [1, 1]} : vector<8x128xf32> to vector<8x32xf32>
    %cst_14 = arith.constant 0.000000e+00 : f32
    %19 = vector.broadcast %cst_14 : f32 to vector<8x32xf32>
    %20 = arith.subf %19, %18 : vector<8x32xf32>
    %21 = math.exp %20 : vector<8x32xf32>
    %cst_15 = arith.constant 1.000000e+00 : f32
    %22 = vector.broadcast %cst_15 : f32 to vector<8x32xf32>
    %23 = arith.addf %22, %21 : vector<8x32xf32>
    %cst_16 = arith.constant 1.000000e+00 : f32
    %24 = vector.broadcast %cst_16 : f32 to vector<8x32xf32>
    %25 = arith.divf %24, %23 : vector<8x32xf32>
    %26 = vector.extract_strided_slice %9 {offsets = [0, 64], sizes = [8, 32], strides = [1, 1]} : vector<8x128xf32> to vector<8x32xf32>
    %cst_17 = arith.constant 0.000000e+00 : f32
    %27 = vector.broadcast %cst_17 : f32 to vector<8x32xf32>
    %28 = arith.subf %27, %26 : vector<8x32xf32>
    %29 = math.exp %28 : vector<8x32xf32>
    %cst_18 = arith.constant 1.000000e+00 : f32
    %30 = vector.broadcast %cst_18 : f32 to vector<8x32xf32>
    %31 = arith.addf %30, %29 : vector<8x32xf32>
    %cst_19 = arith.constant 1.000000e+00 : f32
    %32 = vector.broadcast %cst_19 : f32 to vector<8x32xf32>
    %33 = arith.divf %32, %31 : vector<8x32xf32>
    %34 = vector.extract_strided_slice %9 {offsets = [0, 96], sizes = [8, 32], strides = [1, 1]} : vector<8x128xf32> to vector<8x32xf32>
    %35 = math.tanh %34 : vector<8x32xf32>
    %36 = arith.mulf %25, %6 : vector<8x32xf32>
    %37 = arith.mulf %17, %35 : vector<8x32xf32>
    %38 = arith.addf %36, %37 : vector<8x32xf32>
    %39 = math.tanh %38 : vector<8x32xf32>
    %40 = arith.mulf %33, %39 : vector<8x32xf32>
    %41 = vector.extract_strided_slice %40 {offsets = [0, 0], sizes = [8, 16], strides = [1, 1]} : vector<8x32xf32> to vector<8x16xf32>
    %c0_20 = arith.constant 0 : index
    %c0_21 = arith.constant 0 : index
    %c0_22 = arith.constant 0 : index
    %42 = vector.load %arg5[%c0_20, %c0_21, %c0_22] : memref<16x8x32xf32, #tpu.memory_space<vmem>>, vector<1x8x16xf32>
    %43 = vector.shape_cast %42 : vector<1x8x16xf32> to vector<8x16xf32>
    %44 = vector.shape_cast %41 : vector<8x16xf32> to vector<1x8x16xf32>
    tpu.vector_store %arg5[%c0_20, %c0_21, %c0_22], %44 {strides = array<i32>} : memref<16x8x32xf32, #tpu.memory_space<vmem>>, vector<1x8x16xf32>,
    %45 = vector.extract_strided_slice %40 {offsets = [0, 16], sizes = [8, 16], strides = [1, 1]} : vector<8x32xf32> to vector<8x16xf32>
    %c15 = arith.constant 15 : index
    %c0_23 = arith.constant 0 : index
    %c16 = arith.constant 16 : index
    %46 = vector.load %arg5[%c15, %c0_23, %c16] : memref<16x8x32xf32, #tpu.memory_space<vmem>>, vector<1x8x16xf32>
    %47 = vector.shape_cast %46 : vector<1x8x16xf32> to vector<8x16xf32>
    %48 = vector.shape_cast %45 : vector<8x16xf32> to vector<1x8x16xf32>
    tpu.vector_store %arg5[%c15, %c0_23, %c16], %48 {strides = array<i32>} : memref<16x8x32xf32, #tpu.memory_space<vmem>>, vector<1x8x16xf32>,
    %c8 = arith.constant 8 : index
    %c0_24 = arith.constant 0 : index
    %49 = vector.load %arg4[%c8, %c0_24] : memref<128x128xf32, #tpu.memory_space<vmem>>, vector<8x128xf32>
    %cst_25 = arith.constant dense<0.000000e+00> : vector<8x128xf32>
    %50 = tpu.matmul %40, %4, %cst_25 {dimension_numbers = #tpu.dot_dimension_numbers<[1], [0], [0], [1], [0, 0, 1, 1], [], []>} : vector<8x32xf32>, vector<32x128xf32>, vector<8x128xf32> -> vector<8x128xf32>
    %51 = arith.addf %49, %50 : vector<8x128xf32>
    %52 = vector.extract_strided_slice %51 {offsets = [0, 0], sizes = [8, 32], strides = [1, 1]} : vector<8x128xf32> to vector<8x32xf32>
    %cst_26 = arith.constant 0.000000e+00 : f32
    %53 = vector.broadcast %cst_26 : f32 to vector<8x32xf32>
    %54 = arith.subf %53, %52 : vector<8x32xf32>
    %55 = math.exp %54 : vector<8x32xf32>
    %cst_27 = arith.constant 1.000000e+00 : f32
    %56 = vector.broadcast %cst_27 : f32 to vector<8x32xf32>
    %57 = arith.addf %56, %55 : vector<8x32xf32>
    %cst_28 = arith.constant 1.000000e+00 : f32
    %58 = vector.broadcast %cst_28 : f32 to vector<8x32xf32>
    %59 = arith.divf %58, %57 : vector<8x32xf32>
    %60 = vector.extract_strided_slice %51 {offsets = [0, 32], sizes = [8, 32], strides = [1, 1]} : vector<8x128xf32> to vector<8x32xf32>
    %cst_29 = arith.constant 0.000000e+00 : f32
    %61 = vector.broadcast %cst_29 : f32 to vector<8x32xf32>
    %62 = arith.subf %61, %60 : vector<8x32xf32>
    %63 = math.exp %62 : vector<8x32xf32>
    %cst_30 = arith.constant 1.000000e+00 : f32
    %64 = vector.broadcast %cst_30 : f32 to vector<8x32xf32>
    %65 = arith.addf %64, %63 : vector<8x32xf32>
    %cst_31 = arith.constant 1.000000e+00 : f32
    %66 = vector.broadcast %cst_31 : f32 to vector<8x32xf32>
    %67 = arith.divf %66, %65 : vector<8x32xf32>
    %68 = vector.extract_strided_slice %51 {offsets = [0, 64], sizes = [8, 32], strides = [1, 1]} : vector<8x128xf32> to vector<8x32xf32>
    %cst_32 = arith.constant 0.000000e+00 : f32
    %69 = vector.broadcast %cst_32 : f32 to vector<8x32xf32>
    %70 = arith.subf %69, %68 : vector<8x32xf32>
    %71 = math.exp %70 : vector<8x32xf32>
    %cst_33 = arith.constant 1.000000e+00 : f32
    %72 = vector.broadcast %cst_33 : f32 to vector<8x32xf32>
    %73 = arith.addf %72, %71 : vector<8x32xf32>
    %cst_34 = arith.constant 1.000000e+00 : f32
    %74 = vector.broadcast %cst_34 : f32 to vector<8x32xf32>
    %75 = arith.divf %74, %73 : vector<8x32xf32>
    %76 = vector.extract_strided_slice %51 {offsets = [0, 96], sizes = [8, 32], strides = [1, 1]} : vector<8x128xf32> to vector<8x32xf32>
    %77 = math.tanh %76 : vector<8x32xf32>
    %78 = arith.mulf %67, %38 : vector<8x32xf32>
    %79 = arith.mulf %59, %77 : vector<8x32xf32>
    %80 = arith.addf %78, %79 : vector<8x32xf32>
    %81 = math.tanh %80 : vector<8x32xf32>
    %82 = arith.mulf %75, %81 : vector<8x32xf32>
    %83 = vector.extract_strided_slice %82 {offsets = [0, 0], sizes = [8, 16], strides = [1, 1]} : vector<8x32xf32> to vector<8x16xf32>
    %c1 = arith.constant 1 : index
    %c0_35 = arith.constant 0 : index
    %c0_36 = arith.constant 0 : index
    %84 = vector.load %arg5[%c1, %c0_35, %c0_36] : memref<16x8x32xf32, #tpu.memory_space<vmem>>, vector<1x8x16xf32>
    %85 = vector.shape_cast %84 : vector<1x8x16xf32> to vector<8x16xf32>
    %86 = vector.shape_cast %83 : vector<8x16xf32> to vector<1x8x16xf32>
    tpu.vector_store %arg5[%c1, %c0_35, %c0_36], %86 {strides = array<i32>} : memref<16x8x32xf32, #tpu.memory_space<vmem>>, vector<1x8x16xf32>,
    %87 = vector.extract_strided_slice %82 {offsets = [0, 16], sizes = [8, 16], strides = [1, 1]} : vector<8x32xf32> to vector<8x16xf32>
    %c14 = arith.constant 14 : index
    %c0_37 = arith.constant 0 : index
    %c16_38 = arith.constant 16 : index
    %88 = vector.load %arg5[%c14, %c0_37, %c16_38] : memref<16x8x32xf32, #tpu.memory_space<vmem>>, vector<1x8x16xf32>
    %89 = vector.shape_cast %88 : vector<1x8x16xf32> to vector<8x16xf32>
    %90 = vector.shape_cast %87 : vector<8x16xf32> to vector<1x8x16xf32>
    tpu.vector_store %arg5[%c14, %c0_37, %c16_38], %90 {strides = array<i32>} : memref<16x8x32xf32, #tpu.memory_space<vmem>>, vector<1x8x16xf32>,
    %c16_39 = arith.constant 16 : index
    %c0_40 = arith.constant 0 : index
    %91 = vector.load %arg4[%c16_39, %c0_40] : memref<128x128xf32, #tpu.memory_space<vmem>>, vector<8x128xf32>
    %cst_41 = arith.constant dense<0.000000e+00> : vector<8x128xf32>
    %92 = tpu.matmul %82, %4, %cst_41 {dimension_numbers = #tpu.dot_dimension_numbers<[1], [0], [0], [1], [0, 0, 1, 1], [], []>} : vector<8x32xf32>, vector<32x128xf32>, vector<8x128xf32> -> vector<8x128xf32>
    %93 = arith.addf %91, %92 : vector<8x128xf32>
    %94 = vector.extract_strided_slice %93 {offsets = [0, 0], sizes = [8, 32], strides = [1, 1]} : vector<8x128xf32> to vector<8x32xf32>
    %cst_42 = arith.constant 0.000000e+00 : f32
    %95 = vector.broadcast %cst_42 : f32 to vector<8x32xf32>
    %96 = arith.subf %95, %94 : vector<8x32xf32>
    %97 = math.exp %96 : vector<8x32xf32>
    %cst_43 = arith.constant 1.000000e+00 : f32
    %98 = vector.broadcast %cst_43 : f32 to vector<8x32xf32>
    %99 = arith.addf %98, %97 : vector<8x32xf32>
    %cst_44 = arith.constant 1.000000e+00 : f32
    %100 = vector.broadcast %cst_44 : f32 to vector<8x32xf32>
    %101 = arith.divf %100, %99 : vector<8x32xf32>
    %102 = vector.extract_strided_slice %93 {offsets = [0, 32], sizes = [8, 32], strides = [1, 1]} : vector<8x128xf32> to vector<8x32xf32>
    %cst_45 = arith.constant 0.000000e+00 : f32
    %103 = vector.broadcast %cst_45 : f32 to vector<8x32xf32>
    %104 = arith.subf %103, %102 : vector<8x32xf32>
    %105 = math.exp %104 : vector<8x32xf32>
    %cst_46 = arith.constant 1.000000e+00 : f32
    %106 = vector.broadcast %cst_46 : f32 to vector<8x32xf32>
    %107 = arith.addf %106, %105 : vector<8x32xf32>
    %cst_47 = arith.constant 1.000000e+00 : f32
    %108 = vector.broadcast %cst_47 : f32 to vector<8x32xf32>
    %109 = arith.divf %108, %107 : vector<8x32xf32>
    %110 = vector.extract_strided_slice %93 {offsets = [0, 64], sizes = [8, 32], strides = [1, 1]} : vector<8x128xf32> to vector<8x32xf32>
    %cst_48 = arith.constant 0.000000e+00 : f32
    %111 = vector.broadcast %cst_48 : f32 to vector<8x32xf32>
    %112 = arith.subf %111, %110 : vector<8x32xf32>
    %113 = math.exp %112 : vector<8x32xf32>
    %cst_49 = arith.constant 1.000000e+00 : f32
    %114 = vector.broadcast %cst_49 : f32 to vector<8x32xf32>
    %115 = arith.addf %114, %113 : vector<8x32xf32>
    %cst_50 = arith.constant 1.000000e+00 : f32
    %116 = vector.broadcast %cst_50 : f32 to vector<8x32xf32>
    %117 = arith.divf %116, %115 : vector<8x32xf32>
    %118 = vector.extract_strided_slice %93 {offsets = [0, 96], sizes = [8, 32], strides = [1, 1]} : vector<8x128xf32> to vector<8x32xf32>
    %119 = math.tanh %118 : vector<8x32xf32>
    %120 = arith.mulf %109, %80 : vector<8x32xf32>
    %121 = arith.mulf %101, %119 : vector<8x32xf32>
    %122 = arith.addf %120, %121 : vector<8x32xf32>
    %123 = math.tanh %122 : vector<8x32xf32>
    %124 = arith.mulf %117, %123 : vector<8x32xf32>
    %125 = vector.extract_strided_slice %124 {offsets = [0, 0], sizes = [8, 16], strides = [1, 1]} : vector<8x32xf32> to vector<8x16xf32>
    %c2 = arith.constant 2 : index
    %c0_51 = arith.constant 0 : index
    %c0_52 = arith.constant 0 : index
    %126 = vector.load %arg5[%c2, %c0_51, %c0_52] : memref<16x8x32xf32, #tpu.memory_space<vmem>>, vector<1x8x16xf32>
    %127 = vector.shape_cast %126 : vector<1x8x16xf32> to vector<8x16xf32>
    %128 = vector.shape_cast %125 : vector<8x16xf32> to vector<1x8x16xf32>
    tpu.vector_store %arg5[%c2, %c0_51, %c0_52], %128 {strides = array<i32>} : memref<16x8x32xf32, #tpu.memory_space<vmem>>, vector<1x8x16xf32>,
    %129 = vector.extract_strided_slice %124 {offsets = [0, 16], sizes = [8, 16], strides = [1, 1]} : vector<8x32xf32> to vector<8x16xf32>
    %c13 = arith.constant 13 : index
    %c0_53 = arith.constant 0 : index
    %c16_54 = arith.constant 16 : index
    %130 = vector.load %arg5[%c13, %c0_53, %c16_54] : memref<16x8x32xf32, #tpu.memory_space<vmem>>, vector<1x8x16xf32>
    %131 = vector.shape_cast %130 : vector<1x8x16xf32> to vector<8x16xf32>
    %132 = vector.shape_cast %129 : vector<8x16xf32> to vector<1x8x16xf32>
    tpu.vector_store %arg5[%c13, %c0_53, %c16_54], %132 {strides = array<i32>} : memref<16x8x32xf32, #tpu.memory_space<vmem>>, vector<1x8x16xf32>,
    %c24 = arith.constant 24 : index
    %c0_55 = arith.constant 0 : index
    %133 = vector.load %arg4[%c24, %c0_55] : memref<128x128xf32, #tpu.memory_space<vmem>>, vector<8x128xf32>
    %cst_56 = arith.constant dense<0.000000e+00> : vector<8x128xf32>
    %134 = tpu.matmul %124, %4, %cst_56 {dimension_numbers = #tpu.dot_dimension_numbers<[1], [0], [0], [1], [0, 0, 1, 1], [], []>} : vector<8x32xf32>, vector<32x128xf32>, vector<8x128xf32> -> vector<8x128xf32>
    %135 = arith.addf %133, %134 : vector<8x128xf32>
    %136 = vector.extract_strided_slice %135 {offsets = [0, 0], sizes = [8, 32], strides = [1, 1]} : vector<8x128xf32> to vector<8x32xf32>
    %cst_57 = arith.constant 0.000000e+00 : f32
    %137 = vector.broadcast %cst_57 : f32 to vector<8x32xf32>
    %138 = arith.subf %137, %136 : vector<8x32xf32>
    %139 = math.exp %138 : vector<8x32xf32>
    %cst_58 = arith.constant 1.000000e+00 : f32
    %140 = vector.broadcast %cst_58 : f32 to vector<8x32xf32>
    %141 = arith.addf %140, %139 : vector<8x32xf32>
    %cst_59 = arith.constant 1.000000e+00 : f32
    %142 = vector.broadcast %cst_59 : f32 to vector<8x32xf32>
    %143 = arith.divf %142, %141 : vector<8x32xf32>
    %144 = vector.extract_strided_slice %135 {offsets = [0, 32], sizes = [8, 32], strides = [1, 1]} : vector<8x128xf32> to vector<8x32xf32>
    %cst_60 = arith.constant 0.000000e+00 : f32
    %145 = vector.broadcast %cst_60 : f32 to vector<8x32xf32>
    %146 = arith.subf %145, %144 : vector<8x32xf32>
    %147 = math.exp %146 : vector<8x32xf32>
    %cst_61 = arith.constant 1.000000e+00 : f32
    %148 = vector.broadcast %cst_61 : f32 to vector<8x32xf32>
    %149 = arith.addf %148, %147 : vector<8x32xf32>
    %cst_62 = arith.constant 1.000000e+00 : f32
    %150 = vector.broadcast %cst_62 : f32 to vector<8x32xf32>
    %151 = arith.divf %150, %149 : vector<8x32xf32>
    %152 = vector.extract_strided_slice %135 {offsets = [0, 64], sizes = [8, 32], strides = [1, 1]} : vector<8x128xf32> to vector<8x32xf32>
    %cst_63 = arith.constant 0.000000e+00 : f32
    %153 = vector.broadcast %cst_63 : f32 to vector<8x32xf32>
    %154 = arith.subf %153, %152 : vector<8x32xf32>
    %155 = math.exp %154 : vector<8x32xf32>
    %cst_64 = arith.constant 1.000000e+00 : f32
    %156 = vector.broadcast %cst_64 : f32 to vector<8x32xf32>
    %157 = arith.addf %156, %155 : vector<8x32xf32>
    %cst_65 = arith.constant 1.000000e+00 : f32
    %158 = vector.broadcast %cst_65 : f32 to vector<8x32xf32>
    %159 = arith.divf %158, %157 : vector<8x32xf32>
    %160 = vector.extract_strided_slice %135 {offsets = [0, 96], sizes = [8, 32], strides = [1, 1]} : vector<8x128xf32> to vector<8x32xf32>
    %161 = math.tanh %160 : vector<8x32xf32>
    %162 = arith.mulf %151, %122 : vector<8x32xf32>
    %163 = arith.mulf %143, %161 : vector<8x32xf32>
    %164 = arith.addf %162, %163 : vector<8x32xf32>
    %165 = math.tanh %164 : vector<8x32xf32>
    %166 = arith.mulf %159, %165 : vector<8x32xf32>
    %167 = vector.extract_strided_slice %166 {offsets = [0, 0], sizes = [8, 16], strides = [1, 1]} : vector<8x32xf32> to vector<8x16xf32>
    %c3 = arith.constant 3 : index
    %c0_66 = arith.constant 0 : index
    %c0_67 = arith.constant 0 : index
    %168 = vector.load %arg5[%c3, %c0_66, %c0_67] : memref<16x8x32xf32, #tpu.memory_space<vmem>>, vector<1x8x16xf32>
    %169 = vector.shape_cast %168 : vector<1x8x16xf32> to vector<8x16xf32>
    %170 = vector.shape_cast %167 : vector<8x16xf32> to vector<1x8x16xf32>
    tpu.vector_store %arg5[%c3, %c0_66, %c0_67], %170 {strides = array<i32>} : memref<16x8x32xf32, #tpu.memory_space<vmem>>, vector<1x8x16xf32>,
    %171 = vector.extract_strided_slice %166 {offsets = [0, 16], sizes = [8, 16], strides = [1, 1]} : vector<8x32xf32> to vector<8x16xf32>
    %c12 = arith.constant 12 : index
    %c0_68 = arith.constant 0 : index
    %c16_69 = arith.constant 16 : index
    %172 = vector.load %arg5[%c12, %c0_68, %c16_69] : memref<16x8x32xf32, #tpu.memory_space<vmem>>, vector<1x8x16xf32>
    %173 = vector.shape_cast %172 : vector<1x8x16xf32> to vector<8x16xf32>
    %174 = vector.shape_cast %171 : vector<8x16xf32> to vector<1x8x16xf32>
    tpu.vector_store %arg5[%c12, %c0_68, %c16_69], %174 {strides = array<i32>} : memref<16x8x32xf32, #tpu.memory_space<vmem>>, vector<1x8x16xf32>,
    %c32 = arith.constant 32 : index
    %c0_70 = arith.constant 0 : index
    %175 = vector.load %arg4[%c32, %c0_70] : memref<128x128xf32, #tpu.memory_space<vmem>>, vector<8x128xf32>
    %cst_71 = arith.constant dense<0.000000e+00> : vector<8x128xf32>
    %176 = tpu.matmul %166, %4, %cst_71 {dimension_numbers = #tpu.dot_dimension_numbers<[1], [0], [0], [1], [0, 0, 1, 1], [], []>} : vector<8x32xf32>, vector<32x128xf32>, vector<8x128xf32> -> vector<8x128xf32>
    %177 = arith.addf %175, %176 : vector<8x128xf32>
    %178 = vector.extract_strided_slice %177 {offsets = [0, 0], sizes = [8, 32], strides = [1, 1]} : vector<8x128xf32> to vector<8x32xf32>
    %cst_72 = arith.constant 0.000000e+00 : f32
    %179 = vector.broadcast %cst_72 : f32 to vector<8x32xf32>
    %180 = arith.subf %179, %178 : vector<8x32xf32>
    %181 = math.exp %180 : vector<8x32xf32>
    %cst_73 = arith.constant 1.000000e+00 : f32
    %182 = vector.broadcast %cst_73 : f32 to vector<8x32xf32>
    %183 = arith.addf %182, %181 : vector<8x32xf32>
    %cst_74 = arith.constant 1.000000e+00 : f32
    %184 = vector.broadcast %cst_74 : f32 to vector<8x32xf32>
    %185 = arith.divf %184, %183 : vector<8x32xf32>
    %186 = vector.extract_strided_slice %177 {offsets = [0, 32], sizes = [8, 32], strides = [1, 1]} : vector<8x128xf32> to vector<8x32xf32>
    %cst_75 = arith.constant 0.000000e+00 : f32
    %187 = vector.broadcast %cst_75 : f32 to vector<8x32xf32>
    %188 = arith.subf %187, %186 : vector<8x32xf32>
    %189 = math.exp %188 : vector<8x32xf32>
    %cst_76 = arith.constant 1.000000e+00 : f32
    %190 = vector.broadcast %cst_76 : f32 to vector<8x32xf32>
    %191 = arith.addf %190, %189 : vector<8x32xf32>
    %cst_77 = arith.constant 1.000000e+00 : f32
    %192 = vector.broadcast %cst_77 : f32 to vector<8x32xf32>
    %193 = arith.divf %192, %191 : vector<8x32xf32>
    %194 = vector.extract_strided_slice %177 {offsets = [0, 64], sizes = [8, 32], strides = [1, 1]} : vector<8x128xf32> to vector<8x32xf32>
    %cst_78 = arith.constant 0.000000e+00 : f32
    %195 = vector.broadcast %cst_78 : f32 to vector<8x32xf32>
    %196 = arith.subf %195, %194 : vector<8x32xf32>
    %197 = math.exp %196 : vector<8x32xf32>
    %cst_79 = arith.constant 1.000000e+00 : f32
    %198 = vector.broadcast %cst_79 : f32 to vector<8x32xf32>
    %199 = arith.addf %198, %197 : vector<8x32xf32>
    %cst_80 = arith.constant 1.000000e+00 : f32
    %200 = vector.broadcast %cst_80 : f32 to vector<8x32xf32>
    %201 = arith.divf %200, %199 : vector<8x32xf32>
    %202 = vector.extract_strided_slice %177 {offsets = [0, 96], sizes = [8, 32], strides = [1, 1]} : vector<8x128xf32> to vector<8x32xf32>
    %203 = math.tanh %202 : vector<8x32xf32>
    %204 = arith.mulf %193, %164 : vector<8x32xf32>
    %205 = arith.mulf %185, %203 : vector<8x32xf32>
    %206 = arith.addf %204, %205 : vector<8x32xf32>
    %207 = math.tanh %206 : vector<8x32xf32>
    %208 = arith.mulf %201, %207 : vector<8x32xf32>
    %209 = vector.extract_strided_slice %208 {offsets = [0, 0], sizes = [8, 16], strides = [1, 1]} : vector<8x32xf32> to vector<8x16xf32>
    %c4 = arith.constant 4 : index
    %c0_81 = arith.constant 0 : index
    %c0_82 = arith.constant 0 : index
    %210 = vector.load %arg5[%c4, %c0_81, %c0_82] : memref<16x8x32xf32, #tpu.memory_space<vmem>>, vector<1x8x16xf32>
    %211 = vector.shape_cast %210 : vector<1x8x16xf32> to vector<8x16xf32>
    %212 = vector.shape_cast %209 : vector<8x16xf32> to vector<1x8x16xf32>
    tpu.vector_store %arg5[%c4, %c0_81, %c0_82], %212 {strides = array<i32>} : memref<16x8x32xf32, #tpu.memory_space<vmem>>, vector<1x8x16xf32>,
    %213 = vector.extract_strided_slice %208 {offsets = [0, 16], sizes = [8, 16], strides = [1, 1]} : vector<8x32xf32> to vector<8x16xf32>
    %c11 = arith.constant 11 : index
    %c0_83 = arith.constant 0 : index
    %c16_84 = arith.constant 16 : index
    %214 = vector.load %arg5[%c11, %c0_83, %c16_84] : memref<16x8x32xf32, #tpu.memory_space<vmem>>, vector<1x8x16xf32>
    %215 = vector.shape_cast %214 : vector<1x8x16xf32> to vector<8x16xf32>
    %216 = vector.shape_cast %213 : vector<8x16xf32> to vector<1x8x16xf32>
    tpu.vector_store %arg5[%c11, %c0_83, %c16_84], %216 {strides = array<i32>} : memref<16x8x32xf32, #tpu.memory_space<vmem>>, vector<1x8x16xf32>,
    %c40 = arith.constant 40 : index
    %c0_85 = arith.constant 0 : index
    %217 = vector.load %arg4[%c40, %c0_85] : memref<128x128xf32, #tpu.memory_space<vmem>>, vector<8x128xf32>
    %cst_86 = arith.constant dense<0.000000e+00> : vector<8x128xf32>
    %218 = tpu.matmul %208, %4, %cst_86 {dimension_numbers = #tpu.dot_dimension_numbers<[1], [0], [0], [1], [0, 0, 1, 1], [], []>} : vector<8x32xf32>, vector<32x128xf32>, vector<8x128xf32> -> vector<8x128xf32>
    %219 = arith.addf %217, %218 : vector<8x128xf32>
    %220 = vector.extract_strided_slice %219 {offsets = [0, 0], sizes = [8, 32], strides = [1, 1]} : vector<8x128xf32> to vector<8x32xf32>
    %cst_87 = arith.constant 0.000000e+00 : f32
    %221 = vector.broadcast %cst_87 : f32 to vector<8x32xf32>
    %222 = arith.subf %221, %220 : vector<8x32xf32>
    %223 = math.exp %222 : vector<8x32xf32>
    %cst_88 = arith.constant 1.000000e+00 : f32
    %224 = vector.broadcast %cst_88 : f32 to vector<8x32xf32>
    %225 = arith.addf %224, %223 : vector<8x32xf32>
    %cst_89 = arith.constant 1.000000e+00 : f32
    %226 = vector.broadcast %cst_89 : f32 to vector<8x32xf32>
    %227 = arith.divf %226, %225 : vector<8x32xf32>
    %228 = vector.extract_strided_slice %219 {offsets = [0, 32], sizes = [8, 32], strides = [1, 1]} : vector<8x128xf32> to vector<8x32xf32>
    %cst_90 = arith.constant 0.000000e+00 : f32
    %229 = vector.broadcast %cst_90 : f32 to vector<8x32xf32>
    %230 = arith.subf %229, %228 : vector<8x32xf32>
    %231 = math.exp %230 : vector<8x32xf32>
    %cst_91 = arith.constant 1.000000e+00 : f32
    %232 = vector.broadcast %cst_91 : f32 to vector<8x32xf32>
    %233 = arith.addf %232, %231 : vector<8x32xf32>
    %cst_92 = arith.constant 1.000000e+00 : f32
    %234 = vector.broadcast %cst_92 : f32 to vector<8x32xf32>
    %235 = arith.divf %234, %233 : vector<8x32xf32>
    %236 = vector.extract_strided_slice %219 {offsets = [0, 64], sizes = [8, 32], strides = [1, 1]} : vector<8x128xf32> to vector<8x32xf32>
    %cst_93 = arith.constant 0.000000e+00 : f32
    %237 = vector.broadcast %cst_93 : f32 to vector<8x32xf32>
    %238 = arith.subf %237, %236 : vector<8x32xf32>
    %239 = math.exp %238 : vector<8x32xf32>
    %cst_94 = arith.constant 1.000000e+00 : f32
    %240 = vector.broadcast %cst_94 : f32 to vector<8x32xf32>
    %241 = arith.addf %240, %239 : vector<8x32xf32>
    %cst_95 = arith.constant 1.000000e+00 : f32
    %242 = vector.broadcast %cst_95 : f32 to vector<8x32xf32>
    %243 = arith.divf %242, %241 : vector<8x32xf32>
    %244 = vector.extract_strided_slice %219 {offsets = [0, 96], sizes = [8, 32], strides = [1, 1]} : vector<8x128xf32> to vector<8x32xf32>
    %245 = math.tanh %244 : vector<8x32xf32>
    %246 = arith.mulf %235, %206 : vector<8x32xf32>
    %247 = arith.mulf %227, %245 : vector<8x32xf32>
    %248 = arith.addf %246, %247 : vector<8x32xf32>
    %249 = math.tanh %248 : vector<8x32xf32>
    %250 = arith.mulf %243, %249 : vector<8x32xf32>
    %251 = vector.extract_strided_slice %250 {offsets = [0, 0], sizes = [8, 16], strides = [1, 1]} : vector<8x32xf32> to vector<8x16xf32>
    %c5 = arith.constant 5 : index
    %c0_96 = arith.constant 0 : index
    %c0_97 = arith.constant 0 : index
    %252 = vector.load %arg5[%c5, %c0_96, %c0_97] : memref<16x8x32xf32, #tpu.memory_space<vmem>>, vector<1x8x16xf32>
    %253 = vector.shape_cast %252 : vector<1x8x16xf32> to vector<8x16xf32>
    %254 = vector.shape_cast %251 : vector<8x16xf32> to vector<1x8x16xf32>
    tpu.vector_store %arg5[%c5, %c0_96, %c0_97], %254 {strides = array<i32>} : memref<16x8x32xf32, #tpu.memory_space<vmem>>, vector<1x8x16xf32>,
    %255 = vector.extract_strided_slice %250 {offsets = [0, 16], sizes = [8, 16], strides = [1, 1]} : vector<8x32xf32> to vector<8x16xf32>
    %c10 = arith.constant 10 : index
    %c0_98 = arith.constant 0 : index
    %c16_99 = arith.constant 16 : index
    %256 = vector.load %arg5[%c10, %c0_98, %c16_99] : memref<16x8x32xf32, #tpu.memory_space<vmem>>, vector<1x8x16xf32>
    %257 = vector.shape_cast %256 : vector<1x8x16xf32> to vector<8x16xf32>
    %258 = vector.shape_cast %255 : vector<8x16xf32> to vector<1x8x16xf32>
    tpu.vector_store %arg5[%c10, %c0_98, %c16_99], %258 {strides = array<i32>} : memref<16x8x32xf32, #tpu.memory_space<vmem>>, vector<1x8x16xf32>,
    %c48 = arith.constant 48 : index
    %c0_100 = arith.constant 0 : index
    %259 = vector.load %arg4[%c48, %c0_100] : memref<128x128xf32, #tpu.memory_space<vmem>>, vector<8x128xf32>
    %cst_101 = arith.constant dense<0.000000e+00> : vector<8x128xf32>
    %260 = tpu.matmul %250, %4, %cst_101 {dimension_numbers = #tpu.dot_dimension_numbers<[1], [0], [0], [1], [0, 0, 1, 1], [], []>} : vector<8x32xf32>, vector<32x128xf32>, vector<8x128xf32> -> vector<8x128xf32>
    %261 = arith.addf %259, %260 : vector<8x128xf32>
    %262 = vector.extract_strided_slice %261 {offsets = [0, 0], sizes = [8, 32], strides = [1, 1]} : vector<8x128xf32> to vector<8x32xf32>
    %cst_102 = arith.constant 0.000000e+00 : f32
    %263 = vector.broadcast %cst_102 : f32 to vector<8x32xf32>
    %264 = arith.subf %263, %262 : vector<8x32xf32>
    %265 = math.exp %264 : vector<8x32xf32>
    %cst_103 = arith.constant 1.000000e+00 : f32
    %266 = vector.broadcast %cst_103 : f32 to vector<8x32xf32>
    %267 = arith.addf %266, %265 : vector<8x32xf32>
    %cst_104 = arith.constant 1.000000e+00 : f32
    %268 = vector.broadcast %cst_104 : f32 to vector<8x32xf32>
    %269 = arith.divf %268, %267 : vector<8x32xf32>
    %270 = vector.extract_strided_slice %261 {offsets = [0, 32], sizes = [8, 32], strides = [1, 1]} : vector<8x128xf32> to vector<8x32xf32>
    %cst_105 = arith.constant 0.000000e+00 : f32
    %271 = vector.broadcast %cst_105 : f32 to vector<8x32xf32>
    %272 = arith.subf %271, %270 : vector<8x32xf32>
    %273 = math.exp %272 : vector<8x32xf32>
    %cst_106 = arith.constant 1.000000e+00 : f32
    %274 = vector.broadcast %cst_106 : f32 to vector<8x32xf32>
    %275 = arith.addf %274, %273 : vector<8x32xf32>
    %cst_107 = arith.constant 1.000000e+00 : f32
    %276 = vector.broadcast %cst_107 : f32 to vector<8x32xf32>
    %277 = arith.divf %276, %275 : vector<8x32xf32>
    %278 = vector.extract_strided_slice %261 {offsets = [0, 64], sizes = [8, 32], strides = [1, 1]} : vector<8x128xf32> to vector<8x32xf32>
    %cst_108 = arith.constant 0.000000e+00 : f32
    %279 = vector.broadcast %cst_108 : f32 to vector<8x32xf32>
    %280 = arith.subf %279, %278 : vector<8x32xf32>
    %281 = math.exp %280 : vector<8x32xf32>
    %cst_109 = arith.constant 1.000000e+00 : f32
    %282 = vector.broadcast %cst_109 : f32 to vector<8x32xf32>
    %283 = arith.addf %282, %281 : vector<8x32xf32>
    %cst_110 = arith.constant 1.000000e+00 : f32
    %284 = vector.broadcast %cst_110 : f32 to vector<8x32xf32>
    %285 = arith.divf %284, %283 : vector<8x32xf32>
    %286 = vector.extract_strided_slice %261 {offsets = [0, 96], sizes = [8, 32], strides = [1, 1]} : vector<8x128xf32> to vector<8x32xf32>
    %287 = math.tanh %286 : vector<8x32xf32>
    %288 = arith.mulf %277, %248 : vector<8x32xf32>
    %289 = arith.mulf %269, %287 : vector<8x32xf32>
    %290 = arith.addf %288, %289 : vector<8x32xf32>
    %291 = math.tanh %290 : vector<8x32xf32>
    %292 = arith.mulf %285, %291 : vector<8x32xf32>
    %293 = vector.extract_strided_slice %292 {offsets = [0, 0], sizes = [8, 16], strides = [1, 1]} : vector<8x32xf32> to vector<8x16xf32>
    %c6 = arith.constant 6 : index
    %c0_111 = arith.constant 0 : index
    %c0_112 = arith.constant 0 : index
    %294 = vector.load %arg5[%c6, %c0_111, %c0_112] : memref<16x8x32xf32, #tpu.memory_space<vmem>>, vector<1x8x16xf32>
    %295 = vector.shape_cast %294 : vector<1x8x16xf32> to vector<8x16xf32>
    %296 = vector.shape_cast %293 : vector<8x16xf32> to vector<1x8x16xf32>
    tpu.vector_store %arg5[%c6, %c0_111, %c0_112], %296 {strides = array<i32>} : memref<16x8x32xf32, #tpu.memory_space<vmem>>, vector<1x8x16xf32>,
    %297 = vector.extract_strided_slice %292 {offsets = [0, 16], sizes = [8, 16], strides = [1, 1]} : vector<8x32xf32> to vector<8x16xf32>
    %c9 = arith.constant 9 : index
    %c0_113 = arith.constant 0 : index
    %c16_114 = arith.constant 16 : index
    %298 = vector.load %arg5[%c9, %c0_113, %c16_114] : memref<16x8x32xf32, #tpu.memory_space<vmem>>, vector<1x8x16xf32>
    %299 = vector.shape_cast %298 : vector<1x8x16xf32> to vector<8x16xf32>
    %300 = vector.shape_cast %297 : vector<8x16xf32> to vector<1x8x16xf32>
    tpu.vector_store %arg5[%c9, %c0_113, %c16_114], %300 {strides = array<i32>} : memref<16x8x32xf32, #tpu.memory_space<vmem>>, vector<1x8x16xf32>,
    %c56 = arith.constant 56 : index
    %c0_115 = arith.constant 0 : index
    %301 = vector.load %arg4[%c56, %c0_115] : memref<128x128xf32, #tpu.memory_space<vmem>>, vector<8x128xf32>
    %cst_116 = arith.constant dense<0.000000e+00> : vector<8x128xf32>
    %302 = tpu.matmul %292, %4, %cst_116 {dimension_numbers = #tpu.dot_dimension_numbers<[1], [0], [0], [1], [0, 0, 1, 1], [], []>} : vector<8x32xf32>, vector<32x128xf32>, vector<8x128xf32> -> vector<8x128xf32>
    %303 = arith.addf %301, %302 : vector<8x128xf32>
    %304 = vector.extract_strided_slice %303 {offsets = [0, 0], sizes = [8, 32], strides = [1, 1]} : vector<8x128xf32> to vector<8x32xf32>
    %cst_117 = arith.constant 0.000000e+00 : f32
    %305 = vector.broadcast %cst_117 : f32 to vector<8x32xf32>
    %306 = arith.subf %305, %304 : vector<8x32xf32>
    %307 = math.exp %306 : vector<8x32xf32>
    %cst_118 = arith.constant 1.000000e+00 : f32
    %308 = vector.broadcast %cst_118 : f32 to vector<8x32xf32>
    %309 = arith.addf %308, %307 : vector<8x32xf32>
    %cst_119 = arith.constant 1.000000e+00 : f32
    %310 = vector.broadcast %cst_119 : f32 to vector<8x32xf32>
    %311 = arith.divf %310, %309 : vector<8x32xf32>
    %312 = vector.extract_strided_slice %303 {offsets = [0, 32], sizes = [8, 32], strides = [1, 1]} : vector<8x128xf32> to vector<8x32xf32>
    %cst_120 = arith.constant 0.000000e+00 : f32
    %313 = vector.broadcast %cst_120 : f32 to vector<8x32xf32>
    %314 = arith.subf %313, %312 : vector<8x32xf32>
    %315 = math.exp %314 : vector<8x32xf32>
    %cst_121 = arith.constant 1.000000e+00 : f32
    %316 = vector.broadcast %cst_121 : f32 to vector<8x32xf32>
    %317 = arith.addf %316, %315 : vector<8x32xf32>
    %cst_122 = arith.constant 1.000000e+00 : f32
    %318 = vector.broadcast %cst_122 : f32 to vector<8x32xf32>
    %319 = arith.divf %318, %317 : vector<8x32xf32>
    %320 = vector.extract_strided_slice %303 {offsets = [0, 64], sizes = [8, 32], strides = [1, 1]} : vector<8x128xf32> to vector<8x32xf32>
    %cst_123 = arith.constant 0.000000e+00 : f32
    %321 = vector.broadcast %cst_123 : f32 to vector<8x32xf32>
    %322 = arith.subf %321, %320 : vector<8x32xf32>
    %323 = math.exp %322 : vector<8x32xf32>
    %cst_124 = arith.constant 1.000000e+00 : f32
    %324 = vector.broadcast %cst_124 : f32 to vector<8x32xf32>
    %325 = arith.addf %324, %323 : vector<8x32xf32>
    %cst_125 = arith.constant 1.000000e+00 : f32
    %326 = vector.broadcast %cst_125 : f32 to vector<8x32xf32>
    %327 = arith.divf %326, %325 : vector<8x32xf32>
    %328 = vector.extract_strided_slice %303 {offsets = [0, 96], sizes = [8, 32], strides = [1, 1]} : vector<8x128xf32> to vector<8x32xf32>
    %329 = math.tanh %328 : vector<8x32xf32>
    %330 = arith.mulf %319, %290 : vector<8x32xf32>
    %331 = arith.mulf %311, %329 : vector<8x32xf32>
    %332 = arith.addf %330, %331 : vector<8x32xf32>
    %333 = math.tanh %332 : vector<8x32xf32>
    %334 = arith.mulf %327, %333 : vector<8x32xf32>
    %335 = vector.extract_strided_slice %334 {offsets = [0, 0], sizes = [8, 16], strides = [1, 1]} : vector<8x32xf32> to vector<8x16xf32>
    %c7 = arith.constant 7 : index
    %c0_126 = arith.constant 0 : index
    %c0_127 = arith.constant 0 : index
    %336 = vector.load %arg5[%c7, %c0_126, %c0_127] : memref<16x8x32xf32, #tpu.memory_space<vmem>>, vector<1x8x16xf32>
    %337 = vector.shape_cast %336 : vector<1x8x16xf32> to vector<8x16xf32>
    %338 = vector.shape_cast %335 : vector<8x16xf32> to vector<1x8x16xf32>
    tpu.vector_store %arg5[%c7, %c0_126, %c0_127], %338 {strides = array<i32>} : memref<16x8x32xf32, #tpu.memory_space<vmem>>, vector<1x8x16xf32>,
    %339 = vector.extract_strided_slice %334 {offsets = [0, 16], sizes = [8, 16], strides = [1, 1]} : vector<8x32xf32> to vector<8x16xf32>
    %c8_128 = arith.constant 8 : index
    %c0_129 = arith.constant 0 : index
    %c16_130 = arith.constant 16 : index
    %340 = vector.load %arg5[%c8_128, %c0_129, %c16_130] : memref<16x8x32xf32, #tpu.memory_space<vmem>>, vector<1x8x16xf32>
    %341 = vector.shape_cast %340 : vector<1x8x16xf32> to vector<8x16xf32>
    %342 = vector.shape_cast %339 : vector<8x16xf32> to vector<1x8x16xf32>
    tpu.vector_store %arg5[%c8_128, %c0_129, %c16_130], %342 {strides = array<i32>} : memref<16x8x32xf32, #tpu.memory_space<vmem>>, vector<1x8x16xf32>,
    %c64 = arith.constant 64 : index
    %c0_131 = arith.constant 0 : index
    %343 = vector.load %arg4[%c64, %c0_131] : memref<128x128xf32, #tpu.memory_space<vmem>>, vector<8x128xf32>
    %cst_132 = arith.constant dense<0.000000e+00> : vector<8x128xf32>
    %344 = tpu.matmul %334, %4, %cst_132 {dimension_numbers = #tpu.dot_dimension_numbers<[1], [0], [0], [1], [0, 0, 1, 1], [], []>} : vector<8x32xf32>, vector<32x128xf32>, vector<8x128xf32> -> vector<8x128xf32>
    %345 = arith.addf %343, %344 : vector<8x128xf32>
    %346 = vector.extract_strided_slice %345 {offsets = [0, 0], sizes = [8, 32], strides = [1, 1]} : vector<8x128xf32> to vector<8x32xf32>
    %cst_133 = arith.constant 0.000000e+00 : f32
    %347 = vector.broadcast %cst_133 : f32 to vector<8x32xf32>
    %348 = arith.subf %347, %346 : vector<8x32xf32>
    %349 = math.exp %348 : vector<8x32xf32>
    %cst_134 = arith.constant 1.000000e+00 : f32
    %350 = vector.broadcast %cst_134 : f32 to vector<8x32xf32>
    %351 = arith.addf %350, %349 : vector<8x32xf32>
    %cst_135 = arith.constant 1.000000e+00 : f32
    %352 = vector.broadcast %cst_135 : f32 to vector<8x32xf32>
    %353 = arith.divf %352, %351 : vector<8x32xf32>
    %354 = vector.extract_strided_slice %345 {offsets = [0, 32], sizes = [8, 32], strides = [1, 1]} : vector<8x128xf32> to vector<8x32xf32>
    %cst_136 = arith.constant 0.000000e+00 : f32
    %355 = vector.broadcast %cst_136 : f32 to vector<8x32xf32>
    %356 = arith.subf %355, %354 : vector<8x32xf32>
    %357 = math.exp %356 : vector<8x32xf32>
    %cst_137 = arith.constant 1.000000e+00 : f32
    %358 = vector.broadcast %cst_137 : f32 to vector<8x32xf32>
    %359 = arith.addf %358, %357 : vector<8x32xf32>
    %cst_138 = arith.constant 1.000000e+00 : f32
    %360 = vector.broadcast %cst_138 : f32 to vector<8x32xf32>
    %361 = arith.divf %360, %359 : vector<8x32xf32>
    %362 = vector.extract_strided_slice %345 {offsets = [0, 64], sizes = [8, 32], strides = [1, 1]} : vector<8x128xf32> to vector<8x32xf32>
    %cst_139 = arith.constant 0.000000e+00 : f32
    %363 = vector.broadcast %cst_139 : f32 to vector<8x32xf32>
    %364 = arith.subf %363, %362 : vector<8x32xf32>
    %365 = math.exp %364 : vector<8x32xf32>
    %cst_140 = arith.constant 1.000000e+00 : f32
    %366 = vector.broadcast %cst_140 : f32 to vector<8x32xf32>
    %367 = arith.addf %366, %365 : vector<8x32xf32>
    %cst_141 = arith.constant 1.000000e+00 : f32
    %368 = vector.broadcast %cst_141 : f32 to vector<8x32xf32>
    %369 = arith.divf %368, %367 : vector<8x32xf32>
    %370 = vector.extract_strided_slice %345 {offsets = [0, 96], sizes = [8, 32], strides = [1, 1]} : vector<8x128xf32> to vector<8x32xf32>
    %371 = math.tanh %370 : vector<8x32xf32>
    %372 = arith.mulf %361, %332 : vector<8x32xf32>
    %373 = arith.mulf %353, %371 : vector<8x32xf32>
    %374 = arith.addf %372, %373 : vector<8x32xf32>
    %375 = math.tanh %374 : vector<8x32xf32>
    %376 = arith.mulf %369, %375 : vector<8x32xf32>
    %377 = vector.extract_strided_slice %376 {offsets = [0, 0], sizes = [8, 16], strides = [1, 1]} : vector<8x32xf32> to vector<8x16xf32>
    %c8_142 = arith.constant 8 : index
    %c0_143 = arith.constant 0 : index
    %c0_144 = arith.constant 0 : index
    %378 = vector.load %arg5[%c8_142, %c0_143, %c0_144] : memref<16x8x32xf32, #tpu.memory_space<vmem>>, vector<1x8x16xf32>
    %379 = vector.shape_cast %378 : vector<1x8x16xf32> to vector<8x16xf32>
    %380 = vector.shape_cast %377 : vector<8x16xf32> to vector<1x8x16xf32>
    tpu.vector_store %arg5[%c8_142, %c0_143, %c0_144], %380 {strides = array<i32>} : memref<16x8x32xf32, #tpu.memory_space<vmem>>, vector<1x8x16xf32>,
    %381 = vector.extract_strided_slice %376 {offsets = [0, 16], sizes = [8, 16], strides = [1, 1]} : vector<8x32xf32> to vector<8x16xf32>
    %c7_145 = arith.constant 7 : index
    %c0_146 = arith.constant 0 : index
    %c16_147 = arith.constant 16 : index
    %382 = vector.load %arg5[%c7_145, %c0_146, %c16_147] : memref<16x8x32xf32, #tpu.memory_space<vmem>>, vector<1x8x16xf32>
    %383 = vector.shape_cast %382 : vector<1x8x16xf32> to vector<8x16xf32>
    %384 = vector.shape_cast %381 : vector<8x16xf32> to vector<1x8x16xf32>
    tpu.vector_store %arg5[%c7_145, %c0_146, %c16_147], %384 {strides = array<i32>} : memref<16x8x32xf32, #tpu.memory_space<vmem>>, vector<1x8x16xf32>,
    %c72 = arith.constant 72 : index
    %c0_148 = arith.constant 0 : index
    %385 = vector.load %arg4[%c72, %c0_148] : memref<128x128xf32, #tpu.memory_space<vmem>>, vector<8x128xf32>
    %cst_149 = arith.constant dense<0.000000e+00> : vector<8x128xf32>
    %386 = tpu.matmul %376, %4, %cst_149 {dimension_numbers = #tpu.dot_dimension_numbers<[1], [0], [0], [1], [0, 0, 1, 1], [], []>} : vector<8x32xf32>, vector<32x128xf32>, vector<8x128xf32> -> vector<8x128xf32>
    %387 = arith.addf %385, %386 : vector<8x128xf32>
    %388 = vector.extract_strided_slice %387 {offsets = [0, 0], sizes = [8, 32], strides = [1, 1]} : vector<8x128xf32> to vector<8x32xf32>
    %cst_150 = arith.constant 0.000000e+00 : f32
    %389 = vector.broadcast %cst_150 : f32 to vector<8x32xf32>
    %390 = arith.subf %389, %388 : vector<8x32xf32>
    %391 = math.exp %390 : vector<8x32xf32>
    %cst_151 = arith.constant 1.000000e+00 : f32
    %392 = vector.broadcast %cst_151 : f32 to vector<8x32xf32>
    %393 = arith.addf %392, %391 : vector<8x32xf32>
    %cst_152 = arith.constant 1.000000e+00 : f32
    %394 = vector.broadcast %cst_152 : f32 to vector<8x32xf32>
    %395 = arith.divf %394, %393 : vector<8x32xf32>
    %396 = vector.extract_strided_slice %387 {offsets = [0, 32], sizes = [8, 32], strides = [1, 1]} : vector<8x128xf32> to vector<8x32xf32>
    %cst_153 = arith.constant 0.000000e+00 : f32
    %397 = vector.broadcast %cst_153 : f32 to vector<8x32xf32>
    %398 = arith.subf %397, %396 : vector<8x32xf32>
    %399 = math.exp %398 : vector<8x32xf32>
    %cst_154 = arith.constant 1.000000e+00 : f32
    %400 = vector.broadcast %cst_154 : f32 to vector<8x32xf32>
    %401 = arith.addf %400, %399 : vector<8x32xf32>
    %cst_155 = arith.constant 1.000000e+00 : f32
    %402 = vector.broadcast %cst_155 : f32 to vector<8x32xf32>
    %403 = arith.divf %402, %401 : vector<8x32xf32>
    %404 = vector.extract_strided_slice %387 {offsets = [0, 64], sizes = [8, 32], strides = [1, 1]} : vector<8x128xf32> to vector<8x32xf32>
    %cst_156 = arith.constant 0.000000e+00 : f32
    %405 = vector.broadcast %cst_156 : f32 to vector<8x32xf32>
    %406 = arith.subf %405, %404 : vector<8x32xf32>
    %407 = math.exp %406 : vector<8x32xf32>
    %cst_157 = arith.constant 1.000000e+00 : f32
    %408 = vector.broadcast %cst_157 : f32 to vector<8x32xf32>
    %409 = arith.addf %408, %407 : vector<8x32xf32>
    %cst_158 = arith.constant 1.000000e+00 : f32
    %410 = vector.broadcast %cst_158 : f32 to vector<8x32xf32>
    %411 = arith.divf %410, %409 : vector<8x32xf32>
    %412 = vector.extract_strided_slice %387 {offsets = [0, 96], sizes = [8, 32], strides = [1, 1]} : vector<8x128xf32> to vector<8x32xf32>
    %413 = math.tanh %412 : vector<8x32xf32>
    %414 = arith.mulf %403, %374 : vector<8x32xf32>
    %415 = arith.mulf %395, %413 : vector<8x32xf32>
    %416 = arith.addf %414, %415 : vector<8x32xf32>
    %417 = math.tanh %416 : vector<8x32xf32>
    %418 = arith.mulf %411, %417 : vector<8x32xf32>
    %419 = vector.extract_strided_slice %418 {offsets = [0, 0], sizes = [8, 16], strides = [1, 1]} : vector<8x32xf32> to vector<8x16xf32>
    %c9_159 = arith.constant 9 : index
    %c0_160 = arith.constant 0 : index
    %c0_161 = arith.constant 0 : index
    %420 = vector.load %arg5[%c9_159, %c0_160, %c0_161] : memref<16x8x32xf32, #tpu.memory_space<vmem>>, vector<1x8x16xf32>
    %421 = vector.shape_cast %420 : vector<1x8x16xf32> to vector<8x16xf32>
    %422 = vector.shape_cast %419 : vector<8x16xf32> to vector<1x8x16xf32>
    tpu.vector_store %arg5[%c9_159, %c0_160, %c0_161], %422 {strides = array<i32>} : memref<16x8x32xf32, #tpu.memory_space<vmem>>, vector<1x8x16xf32>,
    %423 = vector.extract_strided_slice %418 {offsets = [0, 16], sizes = [8, 16], strides = [1, 1]} : vector<8x32xf32> to vector<8x16xf32>
    %c6_162 = arith.constant 6 : index
    %c0_163 = arith.constant 0 : index
    %c16_164 = arith.constant 16 : index
    %424 = vector.load %arg5[%c6_162, %c0_163, %c16_164] : memref<16x8x32xf32, #tpu.memory_space<vmem>>, vector<1x8x16xf32>
    %425 = vector.shape_cast %424 : vector<1x8x16xf32> to vector<8x16xf32>
    %426 = vector.shape_cast %423 : vector<8x16xf32> to vector<1x8x16xf32>
    tpu.vector_store %arg5[%c6_162, %c0_163, %c16_164], %426 {strides = array<i32>} : memref<16x8x32xf32, #tpu.memory_space<vmem>>, vector<1x8x16xf32>,
    %c80 = arith.constant 80 : index
    %c0_165 = arith.constant 0 : index
    %427 = vector.load %arg4[%c80, %c0_165] : memref<128x128xf32, #tpu.memory_space<vmem>>, vector<8x128xf32>
    %cst_166 = arith.constant dense<0.000000e+00> : vector<8x128xf32>
    %428 = tpu.matmul %418, %4, %cst_166 {dimension_numbers = #tpu.dot_dimension_numbers<[1], [0], [0], [1], [0, 0, 1, 1], [], []>} : vector<8x32xf32>, vector<32x128xf32>, vector<8x128xf32> -> vector<8x128xf32>
    %429 = arith.addf %427, %428 : vector<8x128xf32>
    %430 = vector.extract_strided_slice %429 {offsets = [0, 0], sizes = [8, 32], strides = [1, 1]} : vector<8x128xf32> to vector<8x32xf32>
    %cst_167 = arith.constant 0.000000e+00 : f32
    %431 = vector.broadcast %cst_167 : f32 to vector<8x32xf32>
    %432 = arith.subf %431, %430 : vector<8x32xf32>
    %433 = math.exp %432 : vector<8x32xf32>
    %cst_168 = arith.constant 1.000000e+00 : f32
    %434 = vector.broadcast %cst_168 : f32 to vector<8x32xf32>
    %435 = arith.addf %434, %433 : vector<8x32xf32>
    %cst_169 = arith.constant 1.000000e+00 : f32
    %436 = vector.broadcast %cst_169 : f32 to vector<8x32xf32>
    %437 = arith.divf %436, %435 : vector<8x32xf32>
    %438 = vector.extract_strided_slice %429 {offsets = [0, 32], sizes = [8, 32], strides = [1, 1]} : vector<8x128xf32> to vector<8x32xf32>
    %cst_170 = arith.constant 0.000000e+00 : f32
    %439 = vector.broadcast %cst_170 : f32 to vector<8x32xf32>
    %440 = arith.subf %439, %438 : vector<8x32xf32>
    %441 = math.exp %440 : vector<8x32xf32>
    %cst_171 = arith.constant 1.000000e+00 : f32
    %442 = vector.broadcast %cst_171 : f32 to vector<8x32xf32>
    %443 = arith.addf %442, %441 : vector<8x32xf32>
    %cst_172 = arith.constant 1.000000e+00 : f32
    %444 = vector.broadcast %cst_172 : f32 to vector<8x32xf32>
    %445 = arith.divf %444, %443 : vector<8x32xf32>
    %446 = vector.extract_strided_slice %429 {offsets = [0, 64], sizes = [8, 32], strides = [1, 1]} : vector<8x128xf32> to vector<8x32xf32>
    %cst_173 = arith.constant 0.000000e+00 : f32
    %447 = vector.broadcast %cst_173 : f32 to vector<8x32xf32>
    %448 = arith.subf %447, %446 : vector<8x32xf32>
    %449 = math.exp %448 : vector<8x32xf32>
    %cst_174 = arith.constant 1.000000e+00 : f32
    %450 = vector.broadcast %cst_174 : f32 to vector<8x32xf32>
    %451 = arith.addf %450, %449 : vector<8x32xf32>
    %cst_175 = arith.constant 1.000000e+00 : f32
    %452 = vector.broadcast %cst_175 : f32 to vector<8x32xf32>
    %453 = arith.divf %452, %451 : vector<8x32xf32>
    %454 = vector.extract_strided_slice %429 {offsets = [0, 96], sizes = [8, 32], strides = [1, 1]} : vector<8x128xf32> to vector<8x32xf32>
    %455 = math.tanh %454 : vector<8x32xf32>
    %456 = arith.mulf %445, %416 : vector<8x32xf32>
    %457 = arith.mulf %437, %455 : vector<8x32xf32>
    %458 = arith.addf %456, %457 : vector<8x32xf32>
    %459 = math.tanh %458 : vector<8x32xf32>
    %460 = arith.mulf %453, %459 : vector<8x32xf32>
    %461 = vector.extract_strided_slice %460 {offsets = [0, 0], sizes = [8, 16], strides = [1, 1]} : vector<8x32xf32> to vector<8x16xf32>
    %c10_176 = arith.constant 10 : index
    %c0_177 = arith.constant 0 : index
    %c0_178 = arith.constant 0 : index
    %462 = vector.load %arg5[%c10_176, %c0_177, %c0_178] : memref<16x8x32xf32, #tpu.memory_space<vmem>>, vector<1x8x16xf32>
    %463 = vector.shape_cast %462 : vector<1x8x16xf32> to vector<8x16xf32>
    %464 = vector.shape_cast %461 : vector<8x16xf32> to vector<1x8x16xf32>
    tpu.vector_store %arg5[%c10_176, %c0_177, %c0_178], %464 {strides = array<i32>} : memref<16x8x32xf32, #tpu.memory_space<vmem>>, vector<1x8x16xf32>,
    %465 = vector.extract_strided_slice %460 {offsets = [0, 16], sizes = [8, 16], strides = [1, 1]} : vector<8x32xf32> to vector<8x16xf32>
    %c5_179 = arith.constant 5 : index
    %c0_180 = arith.constant 0 : index
    %c16_181 = arith.constant 16 : index
    %466 = vector.load %arg5[%c5_179, %c0_180, %c16_181] : memref<16x8x32xf32, #tpu.memory_space<vmem>>, vector<1x8x16xf32>
    %467 = vector.shape_cast %466 : vector<1x8x16xf32> to vector<8x16xf32>
    %468 = vector.shape_cast %465 : vector<8x16xf32> to vector<1x8x16xf32>
    tpu.vector_store %arg5[%c5_179, %c0_180, %c16_181], %468 {strides = array<i32>} : memref<16x8x32xf32, #tpu.memory_space<vmem>>, vector<1x8x16xf32>,
    %c88 = arith.constant 88 : index
    %c0_182 = arith.constant 0 : index
    %469 = vector.load %arg4[%c88, %c0_182] : memref<128x128xf32, #tpu.memory_space<vmem>>, vector<8x128xf32>
    %cst_183 = arith.constant dense<0.000000e+00> : vector<8x128xf32>
    %470 = tpu.matmul %460, %4, %cst_183 {dimension_numbers = #tpu.dot_dimension_numbers<[1], [0], [0], [1], [0, 0, 1, 1], [], []>} : vector<8x32xf32>, vector<32x128xf32>, vector<8x128xf32> -> vector<8x128xf32>
    %471 = arith.addf %469, %470 : vector<8x128xf32>
    %472 = vector.extract_strided_slice %471 {offsets = [0, 0], sizes = [8, 32], strides = [1, 1]} : vector<8x128xf32> to vector<8x32xf32>
    %cst_184 = arith.constant 0.000000e+00 : f32
    %473 = vector.broadcast %cst_184 : f32 to vector<8x32xf32>
    %474 = arith.subf %473, %472 : vector<8x32xf32>
    %475 = math.exp %474 : vector<8x32xf32>
    %cst_185 = arith.constant 1.000000e+00 : f32
    %476 = vector.broadcast %cst_185 : f32 to vector<8x32xf32>
    %477 = arith.addf %476, %475 : vector<8x32xf32>
    %cst_186 = arith.constant 1.000000e+00 : f32
    %478 = vector.broadcast %cst_186 : f32 to vector<8x32xf32>
    %479 = arith.divf %478, %477 : vector<8x32xf32>
    %480 = vector.extract_strided_slice %471 {offsets = [0, 32], sizes = [8, 32], strides = [1, 1]} : vector<8x128xf32> to vector<8x32xf32>
    %cst_187 = arith.constant 0.000000e+00 : f32
    %481 = vector.broadcast %cst_187 : f32 to vector<8x32xf32>
    %482 = arith.subf %481, %480 : vector<8x32xf32>
    %483 = math.exp %482 : vector<8x32xf32>
    %cst_188 = arith.constant 1.000000e+00 : f32
    %484 = vector.broadcast %cst_188 : f32 to vector<8x32xf32>
    %485 = arith.addf %484, %483 : vector<8x32xf32>
    %cst_189 = arith.constant 1.000000e+00 : f32
    %486 = vector.broadcast %cst_189 : f32 to vector<8x32xf32>
    %487 = arith.divf %486, %485 : vector<8x32xf32>
    %488 = vector.extract_strided_slice %471 {offsets = [0, 64], sizes = [8, 32], strides = [1, 1]} : vector<8x128xf32> to vector<8x32xf32>
    %cst_190 = arith.constant 0.000000e+00 : f32
    %489 = vector.broadcast %cst_190 : f32 to vector<8x32xf32>
    %490 = arith.subf %489, %488 : vector<8x32xf32>
    %491 = math.exp %490 : vector<8x32xf32>
    %cst_191 = arith.constant 1.000000e+00 : f32
    %492 = vector.broadcast %cst_191 : f32 to vector<8x32xf32>
    %493 = arith.addf %492, %491 : vector<8x32xf32>
    %cst_192 = arith.constant 1.000000e+00 : f32
    %494 = vector.broadcast %cst_192 : f32 to vector<8x32xf32>
    %495 = arith.divf %494, %493 : vector<8x32xf32>
    %496 = vector.extract_strided_slice %471 {offsets = [0, 96], sizes = [8, 32], strides = [1, 1]} : vector<8x128xf32> to vector<8x32xf32>
    %497 = math.tanh %496 : vector<8x32xf32>
    %498 = arith.mulf %487, %458 : vector<8x32xf32>
    %499 = arith.mulf %479, %497 : vector<8x32xf32>
    %500 = arith.addf %498, %499 : vector<8x32xf32>
    %501 = math.tanh %500 : vector<8x32xf32>
    %502 = arith.mulf %495, %501 : vector<8x32xf32>
    %503 = vector.extract_strided_slice %502 {offsets = [0, 0], sizes = [8, 16], strides = [1, 1]} : vector<8x32xf32> to vector<8x16xf32>
    %c11_193 = arith.constant 11 : index
    %c0_194 = arith.constant 0 : index
    %c0_195 = arith.constant 0 : index
    %504 = vector.load %arg5[%c11_193, %c0_194, %c0_195] : memref<16x8x32xf32, #tpu.memory_space<vmem>>, vector<1x8x16xf32>
    %505 = vector.shape_cast %504 : vector<1x8x16xf32> to vector<8x16xf32>
    %506 = vector.shape_cast %503 : vector<8x16xf32> to vector<1x8x16xf32>
    tpu.vector_store %arg5[%c11_193, %c0_194, %c0_195], %506 {strides = array<i32>} : memref<16x8x32xf32, #tpu.memory_space<vmem>>, vector<1x8x16xf32>,
    %507 = vector.extract_strided_slice %502 {offsets = [0, 16], sizes = [8, 16], strides = [1, 1]} : vector<8x32xf32> to vector<8x16xf32>
    %c4_196 = arith.constant 4 : index
    %c0_197 = arith.constant 0 : index
    %c16_198 = arith.constant 16 : index
    %508 = vector.load %arg5[%c4_196, %c0_197, %c16_198] : memref<16x8x32xf32, #tpu.memory_space<vmem>>, vector<1x8x16xf32>
    %509 = vector.shape_cast %508 : vector<1x8x16xf32> to vector<8x16xf32>
    %510 = vector.shape_cast %507 : vector<8x16xf32> to vector<1x8x16xf32>
    tpu.vector_store %arg5[%c4_196, %c0_197, %c16_198], %510 {strides = array<i32>} : memref<16x8x32xf32, #tpu.memory_space<vmem>>, vector<1x8x16xf32>,
    %c96 = arith.constant 96 : index
    %c0_199 = arith.constant 0 : index
    %511 = vector.load %arg4[%c96, %c0_199] : memref<128x128xf32, #tpu.memory_space<vmem>>, vector<8x128xf32>
    %cst_200 = arith.constant dense<0.000000e+00> : vector<8x128xf32>
    %512 = tpu.matmul %502, %4, %cst_200 {dimension_numbers = #tpu.dot_dimension_numbers<[1], [0], [0], [1], [0, 0, 1, 1], [], []>} : vector<8x32xf32>, vector<32x128xf32>, vector<8x128xf32> -> vector<8x128xf32>
    %513 = arith.addf %511, %512 : vector<8x128xf32>
    %514 = vector.extract_strided_slice %513 {offsets = [0, 0], sizes = [8, 32], strides = [1, 1]} : vector<8x128xf32> to vector<8x32xf32>
    %cst_201 = arith.constant 0.000000e+00 : f32
    %515 = vector.broadcast %cst_201 : f32 to vector<8x32xf32>
    %516 = arith.subf %515, %514 : vector<8x32xf32>
    %517 = math.exp %516 : vector<8x32xf32>
    %cst_202 = arith.constant 1.000000e+00 : f32
    %518 = vector.broadcast %cst_202 : f32 to vector<8x32xf32>
    %519 = arith.addf %518, %517 : vector<8x32xf32>
    %cst_203 = arith.constant 1.000000e+00 : f32
    %520 = vector.broadcast %cst_203 : f32 to vector<8x32xf32>
    %521 = arith.divf %520, %519 : vector<8x32xf32>
    %522 = vector.extract_strided_slice %513 {offsets = [0, 32], sizes = [8, 32], strides = [1, 1]} : vector<8x128xf32> to vector<8x32xf32>
    %cst_204 = arith.constant 0.000000e+00 : f32
    %523 = vector.broadcast %cst_204 : f32 to vector<8x32xf32>
    %524 = arith.subf %523, %522 : vector<8x32xf32>
    %525 = math.exp %524 : vector<8x32xf32>
    %cst_205 = arith.constant 1.000000e+00 : f32
    %526 = vector.broadcast %cst_205 : f32 to vector<8x32xf32>
    %527 = arith.addf %526, %525 : vector<8x32xf32>
    %cst_206 = arith.constant 1.000000e+00 : f32
    %528 = vector.broadcast %cst_206 : f32 to vector<8x32xf32>
    %529 = arith.divf %528, %527 : vector<8x32xf32>
    %530 = vector.extract_strided_slice %513 {offsets = [0, 64], sizes = [8, 32], strides = [1, 1]} : vector<8x128xf32> to vector<8x32xf32>
    %cst_207 = arith.constant 0.000000e+00 : f32
    %531 = vector.broadcast %cst_207 : f32 to vector<8x32xf32>
    %532 = arith.subf %531, %530 : vector<8x32xf32>
    %533 = math.exp %532 : vector<8x32xf32>
    %cst_208 = arith.constant 1.000000e+00 : f32
    %534 = vector.broadcast %cst_208 : f32 to vector<8x32xf32>
    %535 = arith.addf %534, %533 : vector<8x32xf32>
    %cst_209 = arith.constant 1.000000e+00 : f32
    %536 = vector.broadcast %cst_209 : f32 to vector<8x32xf32>
    %537 = arith.divf %536, %535 : vector<8x32xf32>
    %538 = vector.extract_strided_slice %513 {offsets = [0, 96], sizes = [8, 32], strides = [1, 1]} : vector<8x128xf32> to vector<8x32xf32>
    %539 = math.tanh %538 : vector<8x32xf32>
    %540 = arith.mulf %529, %500 : vector<8x32xf32>
    %541 = arith.mulf %521, %539 : vector<8x32xf32>
    %542 = arith.addf %540, %541 : vector<8x32xf32>
    %543 = math.tanh %542 : vector<8x32xf32>
    %544 = arith.mulf %537, %543 : vector<8x32xf32>
    %545 = vector.extract_strided_slice %544 {offsets = [0, 0], sizes = [8, 16], strides = [1, 1]} : vector<8x32xf32> to vector<8x16xf32>
    %c12_210 = arith.constant 12 : index
    %c0_211 = arith.constant 0 : index
    %c0_212 = arith.constant 0 : index
    %546 = vector.load %arg5[%c12_210, %c0_211, %c0_212] : memref<16x8x32xf32, #tpu.memory_space<vmem>>, vector<1x8x16xf32>
    %547 = vector.shape_cast %546 : vector<1x8x16xf32> to vector<8x16xf32>
    %548 = vector.shape_cast %545 : vector<8x16xf32> to vector<1x8x16xf32>
    tpu.vector_store %arg5[%c12_210, %c0_211, %c0_212], %548 {strides = array<i32>} : memref<16x8x32xf32, #tpu.memory_space<vmem>>, vector<1x8x16xf32>,
    %549 = vector.extract_strided_slice %544 {offsets = [0, 16], sizes = [8, 16], strides = [1, 1]} : vector<8x32xf32> to vector<8x16xf32>
    %c3_213 = arith.constant 3 : index
    %c0_214 = arith.constant 0 : index
    %c16_215 = arith.constant 16 : index
    %550 = vector.load %arg5[%c3_213, %c0_214, %c16_215] : memref<16x8x32xf32, #tpu.memory_space<vmem>>, vector<1x8x16xf32>
    %551 = vector.shape_cast %550 : vector<1x8x16xf32> to vector<8x16xf32>
    %552 = vector.shape_cast %549 : vector<8x16xf32> to vector<1x8x16xf32>
    tpu.vector_store %arg5[%c3_213, %c0_214, %c16_215], %552 {strides = array<i32>} : memref<16x8x32xf32, #tpu.memory_space<vmem>>, vector<1x8x16xf32>,
    %c104 = arith.constant 104 : index
    %c0_216 = arith.constant 0 : index
    %553 = vector.load %arg4[%c104, %c0_216] : memref<128x128xf32, #tpu.memory_space<vmem>>, vector<8x128xf32>
    %cst_217 = arith.constant dense<0.000000e+00> : vector<8x128xf32>
    %554 = tpu.matmul %544, %4, %cst_217 {dimension_numbers = #tpu.dot_dimension_numbers<[1], [0], [0], [1], [0, 0, 1, 1], [], []>} : vector<8x32xf32>, vector<32x128xf32>, vector<8x128xf32> -> vector<8x128xf32>
    %555 = arith.addf %553, %554 : vector<8x128xf32>
    %556 = vector.extract_strided_slice %555 {offsets = [0, 0], sizes = [8, 32], strides = [1, 1]} : vector<8x128xf32> to vector<8x32xf32>
    %cst_218 = arith.constant 0.000000e+00 : f32
    %557 = vector.broadcast %cst_218 : f32 to vector<8x32xf32>
    %558 = arith.subf %557, %556 : vector<8x32xf32>
    %559 = math.exp %558 : vector<8x32xf32>
    %cst_219 = arith.constant 1.000000e+00 : f32
    %560 = vector.broadcast %cst_219 : f32 to vector<8x32xf32>
    %561 = arith.addf %560, %559 : vector<8x32xf32>
    %cst_220 = arith.constant 1.000000e+00 : f32
    %562 = vector.broadcast %cst_220 : f32 to vector<8x32xf32>
    %563 = arith.divf %562, %561 : vector<8x32xf32>
    %564 = vector.extract_strided_slice %555 {offsets = [0, 32], sizes = [8, 32], strides = [1, 1]} : vector<8x128xf32> to vector<8x32xf32>
    %cst_221 = arith.constant 0.000000e+00 : f32
    %565 = vector.broadcast %cst_221 : f32 to vector<8x32xf32>
    %566 = arith.subf %565, %564 : vector<8x32xf32>
    %567 = math.exp %566 : vector<8x32xf32>
    %cst_222 = arith.constant 1.000000e+00 : f32
    %568 = vector.broadcast %cst_222 : f32 to vector<8x32xf32>
    %569 = arith.addf %568, %567 : vector<8x32xf32>
    %cst_223 = arith.constant 1.000000e+00 : f32
    %570 = vector.broadcast %cst_223 : f32 to vector<8x32xf32>
    %571 = arith.divf %570, %569 : vector<8x32xf32>
    %572 = vector.extract_strided_slice %555 {offsets = [0, 64], sizes = [8, 32], strides = [1, 1]} : vector<8x128xf32> to vector<8x32xf32>
    %cst_224 = arith.constant 0.000000e+00 : f32
    %573 = vector.broadcast %cst_224 : f32 to vector<8x32xf32>
    %574 = arith.subf %573, %572 : vector<8x32xf32>
    %575 = math.exp %574 : vector<8x32xf32>
    %cst_225 = arith.constant 1.000000e+00 : f32
    %576 = vector.broadcast %cst_225 : f32 to vector<8x32xf32>
    %577 = arith.addf %576, %575 : vector<8x32xf32>
    %cst_226 = arith.constant 1.000000e+00 : f32
    %578 = vector.broadcast %cst_226 : f32 to vector<8x32xf32>
    %579 = arith.divf %578, %577 : vector<8x32xf32>
    %580 = vector.extract_strided_slice %555 {offsets = [0, 96], sizes = [8, 32], strides = [1, 1]} : vector<8x128xf32> to vector<8x32xf32>
    %581 = math.tanh %580 : vector<8x32xf32>
    %582 = arith.mulf %571, %542 : vector<8x32xf32>
    %583 = arith.mulf %563, %581 : vector<8x32xf32>
    %584 = arith.addf %582, %583 : vector<8x32xf32>
    %585 = math.tanh %584 : vector<8x32xf32>
    %586 = arith.mulf %579, %585 : vector<8x32xf32>
    %587 = vector.extract_strided_slice %586 {offsets = [0, 0], sizes = [8, 16], strides = [1, 1]} : vector<8x32xf32> to vector<8x16xf32>
    %c13_227 = arith.constant 13 : index
    %c0_228 = arith.constant 0 : index
    %c0_229 = arith.constant 0 : index
    %588 = vector.load %arg5[%c13_227, %c0_228, %c0_229] : memref<16x8x32xf32, #tpu.memory_space<vmem>>, vector<1x8x16xf32>
    %589 = vector.shape_cast %588 : vector<1x8x16xf32> to vector<8x16xf32>
    %590 = vector.shape_cast %587 : vector<8x16xf32> to vector<1x8x16xf32>
    tpu.vector_store %arg5[%c13_227, %c0_228, %c0_229], %590 {strides = array<i32>} : memref<16x8x32xf32, #tpu.memory_space<vmem>>, vector<1x8x16xf32>,
    %591 = vector.extract_strided_slice %586 {offsets = [0, 16], sizes = [8, 16], strides = [1, 1]} : vector<8x32xf32> to vector<8x16xf32>
    %c2_230 = arith.constant 2 : index
    %c0_231 = arith.constant 0 : index
    %c16_232 = arith.constant 16 : index
    %592 = vector.load %arg5[%c2_230, %c0_231, %c16_232] : memref<16x8x32xf32, #tpu.memory_space<vmem>>, vector<1x8x16xf32>
    %593 = vector.shape_cast %592 : vector<1x8x16xf32> to vector<8x16xf32>
    %594 = vector.shape_cast %591 : vector<8x16xf32> to vector<1x8x16xf32>
    tpu.vector_store %arg5[%c2_230, %c0_231, %c16_232], %594 {strides = array<i32>} : memref<16x8x32xf32, #tpu.memory_space<vmem>>, vector<1x8x16xf32>,
    %c112 = arith.constant 112 : index
    %c0_233 = arith.constant 0 : index
    %595 = vector.load %arg4[%c112, %c0_233] : memref<128x128xf32, #tpu.memory_space<vmem>>, vector<8x128xf32>
    %cst_234 = arith.constant dense<0.000000e+00> : vector<8x128xf32>
    %596 = tpu.matmul %586, %4, %cst_234 {dimension_numbers = #tpu.dot_dimension_numbers<[1], [0], [0], [1], [0, 0, 1, 1], [], []>} : vector<8x32xf32>, vector<32x128xf32>, vector<8x128xf32> -> vector<8x128xf32>
    %597 = arith.addf %595, %596 : vector<8x128xf32>
    %598 = vector.extract_strided_slice %597 {offsets = [0, 0], sizes = [8, 32], strides = [1, 1]} : vector<8x128xf32> to vector<8x32xf32>
    %cst_235 = arith.constant 0.000000e+00 : f32
    %599 = vector.broadcast %cst_235 : f32 to vector<8x32xf32>
    %600 = arith.subf %599, %598 : vector<8x32xf32>
    %601 = math.exp %600 : vector<8x32xf32>
    %cst_236 = arith.constant 1.000000e+00 : f32
    %602 = vector.broadcast %cst_236 : f32 to vector<8x32xf32>
    %603 = arith.addf %602, %601 : vector<8x32xf32>
    %cst_237 = arith.constant 1.000000e+00 : f32
    %604 = vector.broadcast %cst_237 : f32 to vector<8x32xf32>
    %605 = arith.divf %604, %603 : vector<8x32xf32>
    %606 = vector.extract_strided_slice %597 {offsets = [0, 32], sizes = [8, 32], strides = [1, 1]} : vector<8x128xf32> to vector<8x32xf32>
    %cst_238 = arith.constant 0.000000e+00 : f32
    %607 = vector.broadcast %cst_238 : f32 to vector<8x32xf32>
    %608 = arith.subf %607, %606 : vector<8x32xf32>
    %609 = math.exp %608 : vector<8x32xf32>
    %cst_239 = arith.constant 1.000000e+00 : f32
    %610 = vector.broadcast %cst_239 : f32 to vector<8x32xf32>
    %611 = arith.addf %610, %609 : vector<8x32xf32>
    %cst_240 = arith.constant 1.000000e+00 : f32
    %612 = vector.broadcast %cst_240 : f32 to vector<8x32xf32>
    %613 = arith.divf %612, %611 : vector<8x32xf32>
    %614 = vector.extract_strided_slice %597 {offsets = [0, 64], sizes = [8, 32], strides = [1, 1]} : vector<8x128xf32> to vector<8x32xf32>
    %cst_241 = arith.constant 0.000000e+00 : f32
    %615 = vector.broadcast %cst_241 : f32 to vector<8x32xf32>
    %616 = arith.subf %615, %614 : vector<8x32xf32>
    %617 = math.exp %616 : vector<8x32xf32>
    %cst_242 = arith.constant 1.000000e+00 : f32
    %618 = vector.broadcast %cst_242 : f32 to vector<8x32xf32>
    %619 = arith.addf %618, %617 : vector<8x32xf32>
    %cst_243 = arith.constant 1.000000e+00 : f32
    %620 = vector.broadcast %cst_243 : f32 to vector<8x32xf32>
    %621 = arith.divf %620, %619 : vector<8x32xf32>
    %622 = vector.extract_strided_slice %597 {offsets = [0, 96], sizes = [8, 32], strides = [1, 1]} : vector<8x128xf32> to vector<8x32xf32>
    %623 = math.tanh %622 : vector<8x32xf32>
    %624 = arith.mulf %613, %584 : vector<8x32xf32>
    %625 = arith.mulf %605, %623 : vector<8x32xf32>
    %626 = arith.addf %624, %625 : vector<8x32xf32>
    %627 = math.tanh %626 : vector<8x32xf32>
    %628 = arith.mulf %621, %627 : vector<8x32xf32>
    %629 = vector.extract_strided_slice %628 {offsets = [0, 0], sizes = [8, 16], strides = [1, 1]} : vector<8x32xf32> to vector<8x16xf32>
    %c14_244 = arith.constant 14 : index
    %c0_245 = arith.constant 0 : index
    %c0_246 = arith.constant 0 : index
    %630 = vector.load %arg5[%c14_244, %c0_245, %c0_246] : memref<16x8x32xf32, #tpu.memory_space<vmem>>, vector<1x8x16xf32>
    %631 = vector.shape_cast %630 : vector<1x8x16xf32> to vector<8x16xf32>
    %632 = vector.shape_cast %629 : vector<8x16xf32> to vector<1x8x16xf32>
    tpu.vector_store %arg5[%c14_244, %c0_245, %c0_246], %632 {strides = array<i32>} : memref<16x8x32xf32, #tpu.memory_space<vmem>>, vector<1x8x16xf32>,
    %633 = vector.extract_strided_slice %628 {offsets = [0, 16], sizes = [8, 16], strides = [1, 1]} : vector<8x32xf32> to vector<8x16xf32>
    %c1_247 = arith.constant 1 : index
    %c0_248 = arith.constant 0 : index
    %c16_249 = arith.constant 16 : index
    %634 = vector.load %arg5[%c1_247, %c0_248, %c16_249] : memref<16x8x32xf32, #tpu.memory_space<vmem>>, vector<1x8x16xf32>
    %635 = vector.shape_cast %634 : vector<1x8x16xf32> to vector<8x16xf32>
    %636 = vector.shape_cast %633 : vector<8x16xf32> to vector<1x8x16xf32>
    tpu.vector_store %arg5[%c1_247, %c0_248, %c16_249], %636 {strides = array<i32>} : memref<16x8x32xf32, #tpu.memory_space<vmem>>, vector<1x8x16xf32>,
    %c120 = arith.constant 120 : index
    %c0_250 = arith.constant 0 : index
    %637 = vector.load %arg4[%c120, %c0_250] : memref<128x128xf32, #tpu.memory_space<vmem>>, vector<8x128xf32>
    %cst_251 = arith.constant dense<0.000000e+00> : vector<8x128xf32>
    %638 = tpu.matmul %628, %4, %cst_251 {dimension_numbers = #tpu.dot_dimension_numbers<[1], [0], [0], [1], [0, 0, 1, 1], [], []>} : vector<8x32xf32>, vector<32x128xf32>, vector<8x128xf32> -> vector<8x128xf32>
    %639 = arith.addf %637, %638 : vector<8x128xf32>
    %640 = vector.extract_strided_slice %639 {offsets = [0, 0], sizes = [8, 32], strides = [1, 1]} : vector<8x128xf32> to vector<8x32xf32>
    %cst_252 = arith.constant 0.000000e+00 : f32
    %641 = vector.broadcast %cst_252 : f32 to vector<8x32xf32>
    %642 = arith.subf %641, %640 : vector<8x32xf32>
    %643 = math.exp %642 : vector<8x32xf32>
    %cst_253 = arith.constant 1.000000e+00 : f32
    %644 = vector.broadcast %cst_253 : f32 to vector<8x32xf32>
    %645 = arith.addf %644, %643 : vector<8x32xf32>
    %cst_254 = arith.constant 1.000000e+00 : f32
    %646 = vector.broadcast %cst_254 : f32 to vector<8x32xf32>
    %647 = arith.divf %646, %645 : vector<8x32xf32>
    %648 = vector.extract_strided_slice %639 {offsets = [0, 32], sizes = [8, 32], strides = [1, 1]} : vector<8x128xf32> to vector<8x32xf32>
    %cst_255 = arith.constant 0.000000e+00 : f32
    %649 = vector.broadcast %cst_255 : f32 to vector<8x32xf32>
    %650 = arith.subf %649, %648 : vector<8x32xf32>
    %651 = math.exp %650 : vector<8x32xf32>
    %cst_256 = arith.constant 1.000000e+00 : f32
    %652 = vector.broadcast %cst_256 : f32 to vector<8x32xf32>
    %653 = arith.addf %652, %651 : vector<8x32xf32>
    %cst_257 = arith.constant 1.000000e+00 : f32
    %654 = vector.broadcast %cst_257 : f32 to vector<8x32xf32>
    %655 = arith.divf %654, %653 : vector<8x32xf32>
    %656 = vector.extract_strided_slice %639 {offsets = [0, 64], sizes = [8, 32], strides = [1, 1]} : vector<8x128xf32> to vector<8x32xf32>
    %cst_258 = arith.constant 0.000000e+00 : f32
    %657 = vector.broadcast %cst_258 : f32 to vector<8x32xf32>
    %658 = arith.subf %657, %656 : vector<8x32xf32>
    %659 = math.exp %658 : vector<8x32xf32>
    %cst_259 = arith.constant 1.000000e+00 : f32
    %660 = vector.broadcast %cst_259 : f32 to vector<8x32xf32>
    %661 = arith.addf %660, %659 : vector<8x32xf32>
    %cst_260 = arith.constant 1.000000e+00 : f32
    %662 = vector.broadcast %cst_260 : f32 to vector<8x32xf32>
    %663 = arith.divf %662, %661 : vector<8x32xf32>
    %664 = vector.extract_strided_slice %639 {offsets = [0, 96], sizes = [8, 32], strides = [1, 1]} : vector<8x128xf32> to vector<8x32xf32>
    %665 = math.tanh %664 : vector<8x32xf32>
    %666 = arith.mulf %655, %626 : vector<8x32xf32>
    %667 = arith.mulf %647, %665 : vector<8x32xf32>
    %668 = arith.addf %666, %667 : vector<8x32xf32>
    %669 = math.tanh %668 : vector<8x32xf32>
    %670 = arith.mulf %663, %669 : vector<8x32xf32>
    %671 = vector.extract_strided_slice %670 {offsets = [0, 0], sizes = [8, 16], strides = [1, 1]} : vector<8x32xf32> to vector<8x16xf32>
    %c15_261 = arith.constant 15 : index
    %c0_262 = arith.constant 0 : index
    %c0_263 = arith.constant 0 : index
    %672 = vector.load %arg5[%c15_261, %c0_262, %c0_263] : memref<16x8x32xf32, #tpu.memory_space<vmem>>, vector<1x8x16xf32>
    %673 = vector.shape_cast %672 : vector<1x8x16xf32> to vector<8x16xf32>
    %674 = vector.shape_cast %671 : vector<8x16xf32> to vector<1x8x16xf32>
    tpu.vector_store %arg5[%c15_261, %c0_262, %c0_263], %674 {strides = array<i32>} : memref<16x8x32xf32, #tpu.memory_space<vmem>>, vector<1x8x16xf32>,
    %675 = vector.extract_strided_slice %670 {offsets = [0, 16], sizes = [8, 16], strides = [1, 1]} : vector<8x32xf32> to vector<8x16xf32>
    %c0_264 = arith.constant 0 : index
    %c0_265 = arith.constant 0 : index
    %c16_266 = arith.constant 16 : index
    %676 = vector.load %arg5[%c0_264, %c0_265, %c16_266] : memref<16x8x32xf32, #tpu.memory_space<vmem>>, vector<1x8x16xf32>
    %677 = vector.shape_cast %676 : vector<1x8x16xf32> to vector<8x16xf32>
    %678 = vector.shape_cast %675 : vector<8x16xf32> to vector<1x8x16xf32>
    tpu.vector_store %arg5[%c0_264, %c0_265, %c16_266], %678 {strides = array<i32>} : memref<16x8x32xf32, #tpu.memory_space<vmem>>, vector<1x8x16xf32>,
    %c0_267 = arith.constant 0 : index
    %c0_268 = arith.constant 0 : index
    %c0_269 = arith.constant 0 : index
    %679 = vector.load %arg5[%c0_267, %c0_268, %c0_269] : memref<16x8x32xf32, #tpu.memory_space<vmem>>, vector<16x8x32xf32>
    %c160 = arith.constant 160 : index
    %c0_270 = arith.constant 0 : index
    %680 = vector.load %arg2[%c160, %c0_270] : memref<208x128xf32, #tpu.memory_space<vmem>>, vector<1x32xf32>
    %681 = vector.shape_cast %680 : vector<1x32xf32> to vector<1x1x32xf32>
    %682 = vector.broadcast %681 : vector<1x1x32xf32> to vector<16x8x32xf32>
    %683 = arith.mulf %679, %682 : vector<16x8x32xf32>
    %cst_271 = arith.constant dense<0.000000e+00> : vector<16x8xf32>
    %684 = vector.multi_reduction <add>, %683, %cst_271 [2] : vector<16x8x32xf32> to vector<16x8xf32>
    %685 = vector.shape_cast %684 : vector<16x8xf32> to vector<16x8x1xf32>
    %cst_272 = arith.constant dense<0xFF800000> : vector<8x1xf32>
    %686 = vector.multi_reduction <maximumf>, %685, %cst_272 [0] : vector<16x8x1xf32> to vector<8x1xf32>
    %687 = vector.shape_cast %686 : vector<8x1xf32> to vector<1x8x1xf32>
    %688 = vector.broadcast %687 : vector<1x8x1xf32> to vector<16x8x1xf32>
    %689 = arith.subf %685, %688 : vector<16x8x1xf32>
    %690 = math.exp %689 : vector<16x8x1xf32>
    %cst_273 = arith.constant dense<0.000000e+00> : vector<8x1xf32>
    %691 = vector.multi_reduction <add>, %690, %cst_273 [0] : vector<16x8x1xf32> to vector<8x1xf32>
    %692 = vector.shape_cast %691 : vector<8x1xf32> to vector<1x8x1xf32>
    %693 = tpu.reciprocal %692 {approx = true} : vector<1x8x1xf32> -> vector<1x8x1xf32>
    %694 = vector.broadcast %693 : vector<1x8x1xf32> to vector<16x8x1xf32>
    %695 = arith.mulf %690, %694 : vector<16x8x1xf32>
    %696 = vector.broadcast %695 : vector<16x8x1xf32> to vector<16x8x32xf32>
    %697 = arith.mulf %696, %679 : vector<16x8x32xf32>
    %cst_274 = arith.constant dense<0.000000e+00> : vector<8x32xf32>
    %698 = vector.multi_reduction <add>, %697, %cst_274 [0] : vector<16x8x32xf32> to vector<8x32xf32>
    %c168 = arith.constant 168 : index
    %c0_275 = arith.constant 0 : index
    %699 = vector.load %arg2[%c168, %c0_275] : memref<208x128xf32, #tpu.memory_space<vmem>>, vector<32x128xf32>
    %cst_276 = arith.constant dense<0.000000e+00> : vector<8x128xf32>
    %700 = tpu.matmul %698, %699, %cst_276 {dimension_numbers = #tpu.dot_dimension_numbers<[1], [0], [0], [1], [0, 0, 1, 1], [], []>} : vector<8x32xf32>, vector<32x128xf32>, vector<8x128xf32> -> vector<8x128xf32>
    %c200 = arith.constant 200 : index
    %c0_277 = arith.constant 0 : index
    %701 = vector.load %arg2[%c200, %c0_277] : memref<208x128xf32, #tpu.memory_space<vmem>>, vector<1x128xf32>
    %702 = vector.broadcast %701 : vector<1x128xf32> to vector<8x128xf32>
    %703 = arith.addf %700, %702 : vector<8x128xf32>
    %704 = vector.extract_strided_slice %703 {offsets = [0, 0], sizes = [2, 3], strides = [1, 1]} : vector<8x128xf32> to vector<2x3xf32>
    %c0_278 = arith.constant 0 : index
    %c0_279 = arith.constant 0 : index
    %705 = vector.load %arg3[%c0_278, %c0_279] : memref<2x3xf32, #tpu.memory_space<vmem>>, vector<2x3xf32>
    tpu.vector_store %arg3[%c0_278, %c0_279], %704 {strides = array<i32>} : memref<2x3xf32, #tpu.memory_space<vmem>>, vector<2x3xf32>,
    return
  }
  func.func @transform_0(%arg0: i32) -> (i32, i32) {
    %c0_i32 = arith.constant 0 : i32
    %c0_i32_0 = arith.constant 0 : i32
    %c0_i32_1 = arith.constant 0 : i32
    return %c0_i32, %c0_i32_0 : i32, i32
  }
  func.func @transform_1(%arg0: i32) -> (i32, i32) {
    %c0_i32 = arith.constant 0 : i32
    %c0_i32_0 = arith.constant 0 : i32
    %c0_i32_1 = arith.constant 0 : i32
    return %c0_i32, %c0_i32_0 : i32, i32
  }
  func.func @transform_2(%arg0: i32) -> (i32, i32) {
    %c0_i32 = arith.constant 0 : i32
    %c0_i32_0 = arith.constant 0 : i32
    %c0_i32_1 = arith.constant 0 : i32
    return %c0_i32, %c0_i32_0 : i32, i32
  }
}

</mosaic_0001>

<llo_original>
// kernel: tpu_custom_call.1
$region0: #{tpu_custom_call.1}
  #allocation0 [shape = 'u32[]', space=smem, size = 0x4, offset = 0x4, fixed_abs, tag = 'smem constant byte address 0x4 - core index']
  #allocation1 [shape = 'u32[144,128]{1,0:T(1,128)}', space=vmem, size = 0x12000, scoped, tag = 'internal scratch']
  #allocation2 [shape = 'f32[128,128]{1,0:T(8,128)}', space=vmem, size = 0x10000, scoped, tag = 'scratch operand']
  #allocation3 [shape = 'f32[16,8,32]{2,1,0:T(8,128)}', space=vmem, size = 0x10000, scoped, tag = 'scratch operand']
  %s0 = inlined_call_operand.hbm [shape: f32[128,128], index: 0, kind: input, shape index: {}]
  %s1 = inlined_call_operand.hbm [shape: f32[208,128], index: 1, kind: input, shape index: {}]
  %s2 = inlined_call_operand.hbm [shape: f32[2,3], index: 2, kind: output, shape index: {}]
  %s3 = sld [smem:[#allocation0]]
  $region26: #{tpu_custom_call.1} parent=0
    _
  %s5 = ssub.s32 1, %s3
  %s6 = scalar_select 0, %s5, %s3
  $region1: #{tpu_custom_call.1} parent=0
    #allocation4 [shape = 'u8[65536]{0}', space=vmem, size = 0x10000, scoped, tag = 'input window, operand 0, single buffered']
    #allocation5 [shape = 's32[1]{0}', space=sflag, size = 0x4, scoped, tag = 'scoped memory for tpu_custom_call.1']
    #allocation6 [shape = 's32[1]{0}', space=sflag, size = 0x4, scoped, tag = 'scoped memory for tpu_custom_call.1']
    #allocation7 [shape = 'u8[106496]{0}', space=vmem, size = 0x1a000, scoped, tag = 'input window, operand 1, single buffered']
    #allocation8 [shape = 's32[1]{0}', space=sflag, size = 0x4, scoped, tag = 'scoped memory for tpu_custom_call.1']
    #allocation9 [shape = 'u8[1024]{0}', space=vmem, size = 0x400, scoped, tag = 'output window, operand 0, single buffered']
    %7 = vsyncpa [#allocation5], 0
    %8 = vsyncpa [#allocation8], 0
    %9 = vsyncpa [#allocation6], 0
    // Predicated region
    $region2: #{tpu_custom_call.1} parent=1 // pred_check
      _
    $region3: #{tpu_custom_call.1} parent=1 // pred_check_branch
      %11 = sbr.rel (0) target = $region5
    $region4: #{tpu_custom_call.1} parent=1 // pred_region
      %s13 = ssub.s32 2048, 2048
      %14 = vsyncadd [#allocation5], %s13
      %s15 = sshll.u32 [#allocation4], 4
      %s16 = int_to_ptr.vmem [resolvable:$true] %s15
      %21 = dma.hbm_to_vmem [thread:$0]  %s0, 2048, %s16, [#allocation5], 128, 128, 8
    $region5: #{tpu_custom_call.1} parent=1 // pred_fallthru
      _
    // Predicated region
    $region6: #{tpu_custom_call.1} parent=1 // pred_check
      _
    $region7: #{tpu_custom_call.1} parent=1 // pred_check_branch
      %23 = sbr.rel (0) target = $region9
    $region8: #{tpu_custom_call.1} parent=1 // pred_region
      %s25 = ssub.s32 3328, 3328
      %26 = vsyncadd [#allocation8], %s25
      %s27 = sshll.u32 [#allocation7], 4
      %s28 = int_to_ptr.vmem [resolvable:$true] %s27
      %33 = dma.hbm_to_vmem [thread:$0]  %s1, 3328, %s28, [#allocation8], 128, 128, 8
    $region9: #{tpu_custom_call.1} parent=1 // pred_fallthru
      _
    // Predicated region
    $region10: #{tpu_custom_call.1} parent=1 // pred_check
      _
    $region11: #{tpu_custom_call.1} parent=1 // pred_check_branch
      %35 = sbr.rel (0) target = $region13
    $region12: #{tpu_custom_call.1} parent=1 // pred_region
      %36 = dma.done [#allocation5], 2048
    $region13: #{tpu_custom_call.1} parent=1 // pred_fallthru
      _
    // Predicated region
    $region14: #{tpu_custom_call.1} parent=1 // pred_check
      _
    $region15: #{tpu_custom_call.1} parent=1 // pred_check_branch
      %38 = sbr.rel (0) target = $region17
    $region16: #{tpu_custom_call.1} parent=1 // pred_region
      %39 = dma.done [#allocation8], 3328
    $region17: #{tpu_custom_call.1} parent=1 // pred_fallthru
      _
    %v40 = vld [vmem:[#allocation4] sm:$0xff]
    %v41 = vld [vmem:[#allocation4 + $0x8] sm:$0xff]
    %v42 = vld [vmem:[#allocation4 + $0x10] sm:$0xff]
    %v43 = vld [vmem:[#allocation4 + $0x18] sm:$0xff]
    %v44 = vld [vmem:[#allocation4 + $0x20] sm:$0xff]
    %v45 = vld [vmem:[#allocation4 + $0x28] sm:$0xff]
    %v46 = vld [vmem:[#allocation4 + $0x30] sm:$0xff]
    %v47 = vld [vmem:[#allocation4 + $0x38] sm:$0xff]
    %v48 = vld [vmem:[#allocation4 + $0x40] sm:$0xff]
    %v49 = vld [vmem:[#allocation4 + $0x48] sm:$0xff]
    %v50 = vld [vmem:[#allocation4 + $0x50] sm:$0xff]
    %v51 = vld [vmem:[#allocation4 + $0x58] sm:$0xff]
    %v52 = vld [vmem:[#allocation4 + $0x60] sm:$0xff]
    %v53 = vld [vmem:[#allocation4 + $0x68] sm:$0xff]
    %v54 = vld [vmem:[#allocation4 + $0x70] sm:$0xff]
    %v55 = vld [vmem:[#allocation4 + $0x78] sm:$0xff]
    %v56 = vld [vmem:[#allocation7] sm:$0xff]
    %v57 = vld [vmem:[#allocation7 + $0x8] sm:$0xff]
    %v58 = vld [vmem:[#allocation7 + $0x10] sm:$0xff]
    %v59 = vld [vmem:[#allocation7 + $0x18] sm:$0xff]
    %v60 = vld [vmem:[#allocation7 + $0x20] sm:$0xff]
    %v61 = vld [vmem:[#allocation7 + $0x28] sm:$0xff]
    %v62 = vld [vmem:[#allocation7 + $0x30] sm:$0xff]
    %v63 = vld [vmem:[#allocation7 + $0x38] sm:$0xff]
    %v64 = vld [vmem:[#allocation7 + $0x40] sm:$0xff]
    %v65 = vld [vmem:[#allocation7 + $0x48] sm:$0xff]
    %v66 = vld [vmem:[#allocation7 + $0x50] sm:$0xff]
    %v67 = vld [vmem:[#allocation7 + $0x58] sm:$0xff]
    %v68 = vld [vmem:[#allocation7 + $0x60] sm:$0xff]
    %v69 = vld [vmem:[#allocation7 + $0x68] sm:$0xff]
    %v70 = vld [vmem:[#allocation7 + $0x70] sm:$0xff]
    %v71 = vld [vmem:[#allocation7 + $0x78] sm:$0xff]
    %72 = vmatprep.subr.mxu0 0.0
    %73 = vmatpush1.msra.mxu0 %v56
    %74 = vmatprep.subr.mxu0 0.0
    %75 = vmatpush1.msra.mxu0 %v57
    %76 = vmatprep.subr.mxu0 0.0
    %77 = vmatpush1.msra.mxu0 %v58
    %78 = vmatprep.subr.mxu0 0.0
    %79 = vmatpush1.msra.mxu0 %v59
    %80 = vmatprep.subr.mxu0 0.0
    %81 = vmatpush1.msra.mxu0 %v60
    %82 = vmatprep.subr.mxu0 0.0
    %83 = vmatpush1.msra.mxu0 %v61
    %84 = vmatprep.subr.mxu0 0.0
    %85 = vmatpush1.msra.mxu0 %v62
    %86 = vmatprep.subr.mxu0 0.0
    %87 = vmatpush1.msra.mxu0 %v63
    %88 = vmatprep.subr.mxu0 0.0
    %89 = vmatpush1.msra.mxu0 %v64
    %90 = vmatprep.subr.mxu0 0.0
    %91 = vmatpush1.msra.mxu0 %v65
    %92 = vmatprep.subr.mxu0 0.0
    %93 = vmatpush1.msra.mxu0 %v66
    %94 = vmatprep.subr.mxu0 0.0
    %95 = vmatpush1.msra.mxu0 %v67
    %96 = vmatprep.subr.mxu0 0.0
    %97 = vmatpush1.msra.mxu0 %v68
    %98 = vmatprep.subr.mxu0 0.0
    %99 = vmatpush1.msra.mxu0 %v69
    %100 = vmatprep.subr.mxu0 0.0
    %101 = vmatpush1.msra.mxu0 %v70
    %102 = vmatprep.subr.mxu0 0.0
    %103 = vmatpush1.msra.mxu0 %v71
    %104 = vmatprep.subr.mxu0 0.0
    %105 = vmatpush1.msra.mxu0 0.0
    %106 = vmatprep.subr.mxu0 0.0
    %107 = vmatpush1.msra.mxu0 0.0
    %108 = vmatprep.subr.mxu0 0.0
    %109 = vmatpush1.msra.mxu0 0.0
    %110 = vmatprep.subr.mxu0 0.0
    %111 = vmatpush1.msra.mxu0 0.0
    %112 = vmatprep.subr.mxu0 0.0
    %113 = vmatpush1.msra.mxu0 0.0
    %114 = vmatprep.subr.mxu0 0.0
    %115 = vmatpush1.msra.mxu0 0.0
    %116 = vmatprep.subr.mxu0 0.0
    %117 = vmatpush1.msra.mxu0 0.0
    %118 = vmatprep.subr.mxu0 0.0
    %119 = vmatpush1.msra.mxu0 0.0
    %120 = vmatprep.subr.mxu0 0.0
    %121 = vmatpush1.msra.mxu0 0.0
    %122 = vmatprep.subr.mxu0 0.0
    %123 = vmatpush1.msra.mxu0 0.0
    %124 = vmatprep.subr.mxu0 0.0
    %125 = vmatpush1.msra.mxu0 0.0
    %126 = vmatprep.subr.mxu0 0.0
    %127 = vmatpush1.msra.mxu0 0.0
    %128 = vmatprep.subr.mxu0 0.0
    %129 = vmatpush1.msra.mxu0 0.0
    %130 = vmatprep.subr.mxu0 0.0
    %131 = vmatpush1.msra.mxu0 0.0
    %132 = vmatprep.subr.mxu0 0.0
    %133 = vmatpush1.msra.mxu0 0.0
    %134 = vmatprep.subr.mxu0 0.0
    %135 = vmatpush1.msra.mxu0 0.0
    %136 = vmatprep.mubr.f32.mxu0 0.0
    %137 = vmatmul.mubr.f32.gmra.mrb[0].mxu0 %v40
    %v138 = vpop.f32.mrb[0].mxu0
    %v139 = vadd.f32 0.0, %v138
    %v140 = vpop.f32.mrb[0].mxu0
    %141 = vmatprep.mubr.f32.mxu0 0.0
    %142 = vmatmul.mubr.f32.gmra.mrb[0].mxu0 %v41
    %v143 = vpop.f32.mrb[0].mxu0
    %v144 = vadd.f32 0.0, %v143
    %v145 = vpop.f32.mrb[0].mxu0
    %146 = vmatprep.mubr.f32.mxu0 0.0
    %147 = vmatmul.mubr.f32.gmra.mrb[0].mxu0 %v42
    %v148 = vpop.f32.mrb[0].mxu0
    %v149 = vadd.f32 0.0, %v148
    %v150 = vpop.f32.mrb[0].mxu0
    %151 = vmatprep.mubr.f32.mxu0 0.0
    %152 = vmatmul.mubr.f32.gmra.mrb[0].mxu0 %v43
    %v153 = vpop.f32.mrb[0].mxu0
    %v154 = vadd.f32 0.0, %v153
    %v155 = vpop.f32.mrb[0].mxu0
    %156 = vmatprep.mubr.f32.mxu0 0.0
    %157 = vmatmul.mubr.f32.gmra.mrb[0].mxu0 %v44
    %v158 = vpop.f32.mrb[0].mxu0
    %v159 = vadd.f32 0.0, %v158
    %v160 = vpop.f32.mrb[0].mxu0
    %161 = vmatprep.mubr.f32.mxu0 0.0
    %162 = vmatmul.mubr.f32.gmra.mrb[0].mxu0 %v45
    %v163 = vpop.f32.mrb[0].mxu0
    %v164 = vadd.f32 0.0, %v163
    %v165 = vpop.f32.mrb[0].mxu0
    %166 = vmatprep.mubr.f32.mxu0 0.0
    %167 = vmatmul.mubr.f32.gmra.mrb[0].mxu0 %v46
    %v168 = vpop.f32.mrb[0].mxu0
    %v169 = vadd.f32 0.0, %v168
    %v170 = vpop.f32.mrb[0].mxu0
    %171 = vmatprep.mubr.f32.mxu0 0.0
    %172 = vmatmul.mubr.f32.gmra.mrb[0].mxu0 %v47
    %v173 = vpop.f32.mrb[0].mxu0
    %v174 = vadd.f32 0.0, %v173
    %v175 = vpop.f32.mrb[0].mxu0
    %176 = vmatprep.mubr.f32.mxu0 0.0
    %177 = vmatmul.mubr.f32.gmra.mrb[0].mxu0 %v48
    %v178 = vpop.f32.mrb[0].mxu0
    %v179 = vadd.f32 0.0, %v178
    %v180 = vpop.f32.mrb[0].mxu0
    %181 = vmatprep.mubr.f32.mxu0 0.0
    %182 = vmatmul.mubr.f32.gmra.mrb[0].mxu0 %v49
    %v183 = vpop.f32.mrb[0].mxu0
    %v184 = vadd.f32 0.0, %v183
    %v185 = vpop.f32.mrb[0].mxu0
    %186 = vmatprep.mubr.f32.mxu0 0.0
    %187 = vmatmul.mubr.f32.gmra.mrb[0].mxu0 %v50
    %v188 = vpop.f32.mrb[0].mxu0
    %v189 = vadd.f32 0.0, %v188
    %v190 = vpop.f32.mrb[0].mxu0
    %191 = vmatprep.mubr.f32.mxu0 0.0
    %192 = vmatmul.mubr.f32.gmra.mrb[0].mxu0 %v51
    %v193 = vpop.f32.mrb[0].mxu0
    %v194 = vadd.f32 0.0, %v193
    %v195 = vpop.f32.mrb[0].mxu0
    %196 = vmatprep.mubr.f32.mxu0 0.0
    %197 = vmatmul.mubr.f32.gmra.mrb[0].mxu0 %v52
    %v198 = vpop.f32.mrb[0].mxu0
    %v199 = vadd.f32 0.0, %v198
    %v200 = vpop.f32.mrb[0].mxu0
    %201 = vmatprep.mubr.f32.mxu0 0.0
    %202 = vmatmul.mubr.f32.gmra.mrb[0].mxu0 %v53
    %v203 = vpop.f32.mrb[0].mxu0
    %v204 = vadd.f32 0.0, %v203
    %v205 = vpop.f32.mrb[0].mxu0
    %206 = vmatprep.mubr.f32.mxu0 0.0
    %207 = vmatmul.mubr.f32.gmra.mrb[0].mxu0 %v54
    %v208 = vpop.f32.mrb[0].mxu0
    %v209 = vadd.f32 0.0, %v208
    %v210 = vpop.f32.mrb[0].mxu0
    %211 = vmatprep.mubr.f32.mxu0 0.0
    %212 = vmatmul.mubr.f32.gmra.mrb[0].mxu0 %v55
    %v213 = vpop.f32.mrb[0].mxu0
    %v214 = vadd.f32 0.0, %v213
    %v215 = vpop.f32.mrb[0].mxu0
    %216 = vdwg.mxu0
    %217 = vst [vmem:[#allocation2] sm:$0xff] %v139
    %218 = vst [vmem:[#allocation2 + $0x8] sm:$0xff] %v144
    %219 = vst [vmem:[#allocation2 + $0x10] sm:$0xff] %v149
    %220 = vst [vmem:[#allocation2 + $0x18] sm:$0xff] %v154
    %221 = vst [vmem:[#allocation2 + $0x20] sm:$0xff] %v159
    %222 = vst [vmem:[#allocation2 + $0x28] sm:$0xff] %v164
    %223 = vst [vmem:[#allocation2 + $0x30] sm:$0xff] %v169
    %224 = vst [vmem:[#allocation2 + $0x38] sm:$0xff] %v174
    %225 = vst [vmem:[#allocation2 + $0x40] sm:$0xff] %v179
    %226 = vst [vmem:[#allocation2 + $0x48] sm:$0xff] %v184
    %227 = vst [vmem:[#allocation2 + $0x50] sm:$0xff] %v189
    %228 = vst [vmem:[#allocation2 + $0x58] sm:$0xff] %v194
    %229 = vst [vmem:[#allocation2 + $0x60] sm:$0xff] %v199
    %230 = vst [vmem:[#allocation2 + $0x68] sm:$0xff] %v204
    %231 = vst [vmem:[#allocation2 + $0x70] sm:$0xff] %v209
    %232 = vst [vmem:[#allocation2 + $0x78] sm:$0xff] %v214
    %v233 = vld [vmem:[#allocation7 + $0x80] sm:$0xff]
    %v234 = vld [vmem:[#allocation7 + $0x88] sm:$0xff]
    %v235 = vld [vmem:[#allocation7 + $0x90] sm:$0xff]
    %v236 = vld [vmem:[#allocation7 + $0x98] sm:$0xff]
    %v237 = vld [vmem:[#allocation2] sm:$0xff]
    %vm238 = vcmask 261120
    %v240 = vsel %vm238, 0.0, 0
    %242 = vmatprep.subr.mxu0 0.0
    %243 = vmatpush1.msra.mxu0 %v233
    %244 = vmatprep.subr.mxu0 0.0
    %245 = vmatpush1.msra.mxu0 %v234
    %246 = vmatprep.subr.mxu0 0.0
    %247 = vmatpush1.msra.mxu0 %v235
    %248 = vmatprep.subr.mxu0 0.0
    %249 = vmatpush1.msra.mxu0 %v236
    %250 = vmatprep.subr.mxu0 0.0
    %251 = vmatpush1.msra.mxu0 0.0
    %252 = vmatprep.subr.mxu0 0.0
    %253 = vmatpush1.msra.mxu0 0.0
    %254 = vmatprep.subr.mxu0 0.0
    %255 = vmatpush1.msra.mxu0 0.0
    %256 = vmatprep.subr.mxu0 0.0
    %257 = vmatpush1.msra.mxu0 0.0
    %258 = vmatprep.subr.mxu0 0.0
    %259 = vmatpush1.msra.mxu0 0.0
    %260 = vmatprep.subr.mxu0 0.0
    %261 = vmatpush1.msra.mxu0 0.0
    %262 = vmatprep.subr.mxu0 0.0
    %263 = vmatpush1.msra.mxu0 0.0
    %264 = vmatprep.subr.mxu0 0.0
    %265 = vmatpush1.msra.mxu0 0.0
    %266 = vmatprep.subr.mxu0 0.0
    %267 = vmatpush1.msra.mxu0 0.0
    %268 = vmatprep.subr.mxu0 0.0
    %269 = vmatpush1.msra.mxu0 0.0
    %270 = vmatprep.subr.mxu0 0.0
    %271 = vmatpush1.msra.mxu0 0.0
    %272 = vmatprep.subr.mxu0 0.0
    %273 = vmatpush1.msra.mxu0 0.0
    %274 = vmatprep.subr.mxu0 0.0
    %275 = vmatpush1.msra.mxu0 0.0
    %276 = vmatprep.subr.mxu0 0.0
    %277 = vmatpush1.msra.mxu0 0.0
    %278 = vmatprep.subr.mxu0 0.0
    %279 = vmatpush1.msra.mxu0 0.0
    %280 = vmatprep.subr.mxu0 0.0
    %281 = vmatpush1.msra.mxu0 0.0
    %282 = vmatprep.subr.mxu0 0.0
    %283 = vmatpush1.msra.mxu0 0.0
    %284 = vmatprep.subr.mxu0 0.0
    %285 = vmatpush1.msra.mxu0 0.0
    %286 = vmatprep.subr.mxu0 0.0
    %287 = vmatpush1.msra.mxu0 0.0
    %288 = vmatprep.subr.mxu0 0.0
    %289 = vmatpush1.msra.mxu0 0.0
    %290 = vmatprep.subr.mxu0 0.0
    %291 = vmatpush1.msra.mxu0 0.0
    %292 = vmatprep.subr.mxu0 0.0
    %293 = vmatpush1.msra.mxu0 0.0
    %294 = vmatprep.subr.mxu0 0.0
    %295 = vmatpush1.msra.mxu0 0.0
    %296 = vmatprep.subr.mxu0 0.0
    %297 = vmatpush1.msra.mxu0 0.0
    %298 = vmatprep.subr.mxu0 0.0
    %299 = vmatpush1.msra.mxu0 0.0
    %300 = vmatprep.subr.mxu0 0.0
    %301 = vmatpush1.msra.mxu0 0.0
    %302 = vmatprep.subr.mxu0 0.0
    %303 = vmatpush1.msra.mxu0 0.0
    %304 = vmatprep.subr.mxu0 0.0
    %305 = vmatpush1.msra.mxu0 0.0
    %306 = vmatprep.mubr.f32.mxu0 0.0
    %307 = vmatmul.mubr.f32.gmra.mrb[0].mxu0 %v240
    %v308 = vpop.f32.mrb[0].mxu0
    %v309 = vadd.f32 0.0, %v308
    %v310 = vpop.f32.mrb[0].mxu0
    %311 = vdwg.mxu0
    %v312 = vadd.f32 %v237, %v309
    %v313 = vsub.f32 0.0, %v312
    %v314 = vmul.f32 %v313, 1.442695
    %v315 = vpow.pop %v314
    %v316 = vadd.f32 %v315, 1.0
    %v317 = vrcp.pop %v316
    %v318 = vmul.f32 1.0, %v317
    %v319 = vtanh.pop %v312
    %v320 = vmul.f32 %v318, 0.0
    %322 = vrot.lane.b32.xlu0 %v319, 32
    %v323 = vpop.permute.xlu0 %322
    %v325 = vmul.f32 %v318, %v323
    %327 = vrot.lane.b32.xlu0 %v325, 32
    %v328 = vpop.permute.xlu0 %327
    %v330 = vadd.f32 %v320, %v328
    %v331 = vtanh.pop %v330
    %333 = vrot.lane.b32.xlu0 %v331, 32
    %v334 = vpop.permute.xlu0 %333
    %v336 = vmul.f32 %v318, %v334
    %338 = vrot.lane.b32.xlu0 %v336, 64
    %v339 = vpop.permute.xlu0 %338
    %vm341 = vcmask 130048
    %342 = vst.msk [vmem:[#allocation3] sm:$0xff] %vm341, %v339
    %s343 = scalar_lea.vmem [#allocation3], 120
    %vm344 = vcmask 261248
    %345 = vst.msk [vmem:[%s343] sm:$0xff] %vm344, %v339
    %v346 = vld [vmem:[#allocation2 + $0x8] sm:$0xff]
    %v347 = vsel %vm238, %v339, 0
    %349 = vmatprep.subr.mxu0 0.0
    %350 = vmatpush1.msra.mxu0 %v233
    %351 = vmatprep.subr.mxu0 0.0
    %352 = vmatpush1.msra.mxu0 %v234
    %353 = vmatprep.subr.mxu0 0.0
    %354 = vmatpush1.msra.mxu0 %v235
    %355 = vmatprep.subr.mxu0 0.0
    %356 = vmatpush1.msra.mxu0 %v236
    %357 = vmatprep.subr.mxu0 0.0
    %358 = vmatpush1.msra.mxu0 0.0
    %359 = vmatprep.subr.mxu0 0.0
    %360 = vmatpush1.msra.mxu0 0.0
    %361 = vmatprep.subr.mxu0 0.0
    %362 = vmatpush1.msra.mxu0 0.0
    %363 = vmatprep.subr.mxu0 0.0
    %364 = vmatpush1.msra.mxu0 0.0
    %365 = vmatprep.subr.mxu0 0.0
    %366 = vmatpush1.msra.mxu0 0.0
    %367 = vmatprep.subr.mxu0 0.0
    %368 = vmatpush1.msra.mxu0 0.0
    %369 = vmatprep.subr.mxu0 0.0
    %370 = vmatpush1.msra.mxu0 0.0
    %371 = vmatprep.subr.mxu0 0.0
    %372 = vmatpush1.msra.mxu0 0.0
    %373 = vmatprep.subr.mxu0 0.0
    %374 = vmatpush1.msra.mxu0 0.0
    %375 = vmatprep.subr.mxu0 0.0
    %376 = vmatpush1.msra.mxu0 0.0
    %377 = vmatprep.subr.mxu0 0.0
    %378 = vmatpush1.msra.mxu0 0.0
    %379 = vmatprep.subr.mxu0 0.0
    %380 = vmatpush1.msra.mxu0 0.0
    %381 = vmatprep.subr.mxu0 0.0
    %382 = vmatpush1.msra.mxu0 0.0
    %383 = vmatprep.subr.mxu0 0.0
    %384 = vmatpush1.msra.mxu0 0.0
    %385 = vmatprep.subr.mxu0 0.0
    %386 = vmatpush1.msra.mxu0 0.0
    %387 = vmatprep.subr.mxu0 0.0
    %388 = vmatpush1.msra.mxu0 0.0
    %389 = vmatprep.subr.mxu0 0.0
    %390 = vmatpush1.msra.mxu0 0.0
    %391 = vmatprep.subr.mxu0 0.0
    %392 = vmatpush1.msra.mxu0 0.0
    %393 = vmatprep.subr.mxu0 0.0
    %394 = vmatpush1.msra.mxu0 0.0
    %395 = vmatprep.subr.mxu0 0.0
    %396 = vmatpush1.msra.mxu0 0.0
    %397 = vmatprep.subr.mxu0 0.0
    %398 = vmatpush1.msra.mxu0 0.0
    %399 = vmatprep.subr.mxu0 0.0
    %400 = vmatpush1.msra.mxu0 0.0
    %401 = vmatprep.subr.mxu0 0.0
    %402 = vmatpush1.msra.mxu0 0.0
    %403 = vmatprep.subr.mxu0 0.0
    %404 = vmatpush1.msra.mxu0 0.0
    %405 = vmatprep.subr.mxu0 0.0
    %406 = vmatpush1.msra.mxu0 0.0
    %407 = vmatprep.subr.mxu0 0.0
    %408 = vmatpush1.msra.mxu0 0.0
    %409 = vmatprep.subr.mxu0 0.0
    %410 = vmatpush1.msra.mxu0 0.0
    %411 = vmatprep.subr.mxu0 0.0
    %412 = vmatpush1.msra.mxu0 0.0
    %413 = vmatprep.mubr.f32.mxu0 0.0
    %414 = vmatmul.mubr.f32.gmra.mrb[0].mxu0 %v347
    %v415 = vpop.f32.mrb[0].mxu0
    %v416 = vadd.f32 0.0, %v415
    %v417 = vpop.f32.mrb[0].mxu0
    %418 = vdwg.mxu0
    %v419 = vadd.f32 %v346, %v416
    %v420 = vsub.f32 0.0, %v419
    %v421 = vmul.f32 %v420, 1.442695
    %v422 = vpow.pop %v421
    %v423 = vadd.f32 %v422, 1.0
    %v424 = vrcp.pop %v423
    %v425 = vmul.f32 1.0, %v424
    %v426 = vtanh.pop %v419
    %v427 = vmul.f32 %v425, %v330
    %429 = vrot.lane.b32.xlu0 %v426, 32
    %v430 = vpop.permute.xlu0 %429
    %v432 = vmul.f32 %v425, %v430
    %434 = vrot.lane.b32.xlu0 %v432, 32
    %v435 = vpop.permute.xlu0 %434
    %v437 = vadd.f32 %v427, %v435
    %v438 = vtanh.pop %v437
    %440 = vrot.lane.b32.xlu0 %v438, 32
    %v441 = vpop.permute.xlu0 %440
    %v443 = vmul.f32 %v425, %v441
    %445 = vrot.lane.b32.xlu0 %v443, 64
    %v446 = vpop.permute.xlu0 %445
    %s448 = scalar_lea.vmem [#allocation3], 8
    %449 = vst.msk [vmem:[%s448] sm:$0xff] %vm341, %v446
    %s450 = scalar_lea.vmem [#allocation3], 112
    %451 = vst.msk [vmem:[%s450] sm:$0xff] %vm344, %v446
    %v452 = vld [vmem:[#allocation2 + $0x10] sm:$0xff]
    %v453 = vsel %vm238, %v446, 0
    %455 = vmatprep.subr.mxu0 0.0
    %456 = vmatpush1.msra.mxu0 %v233
    %457 = vmatprep.subr.mxu0 0.0
    %458 = vmatpush1.msra.mxu0 %v234
    %459 = vmatprep.subr.mxu0 0.0
    %460 = vmatpush1.msra.mxu0 %v235
    %461 = vmatprep.subr.mxu0 0.0
    %462 = vmatpush1.msra.mxu0 %v236
    %463 = vmatprep.subr.mxu0 0.0
    %464 = vmatpush1.msra.mxu0 0.0
    %465 = vmatprep.subr.mxu0 0.0
    %466 = vmatpush1.msra.mxu0 0.0
    %467 = vmatprep.subr.mxu0 0.0
    %468 = vmatpush1.msra.mxu0 0.0
    %469 = vmatprep.subr.mxu0 0.0
    %470 = vmatpush1.msra.mxu0 0.0
    %471 = vmatprep.subr.mxu0 0.0
    %472 = vmatpush1.msra.mxu0 0.0
    %473 = vmatprep.subr.mxu0 0.0
    %474 = vmatpush1.msra.mxu0 0.0
    %475 = vmatprep.subr.mxu0 0.0
    %476 = vmatpush1.msra.mxu0 0.0
    %477 = vmatprep.subr.mxu0 0.0
    %478 = vmatpush1.msra.mxu0 0.0
    %479 = vmatprep.subr.mxu0 0.0
    %480 = vmatpush1.msra.mxu0 0.0
    %481 = vmatprep.subr.mxu0 0.0
    %482 = vmatpush1.msra.mxu0 0.0
    %483 = vmatprep.subr.mxu0 0.0
    %484 = vmatpush1.msra.mxu0 0.0
    %485 = vmatprep.subr.mxu0 0.0
    %486 = vmatpush1.msra.mxu0 0.0
    %487 = vmatprep.subr.mxu0 0.0
    %488 = vmatpush1.msra.mxu0 0.0
    %489 = vmatprep.subr.mxu0 0.0
    %490 = vmatpush1.msra.mxu0 0.0
    %491 = vmatprep.subr.mxu0 0.0
    %492 = vmatpush1.msra.mxu0 0.0
    %493 = vmatprep.subr.mxu0 0.0
    %494 = vmatpush1.msra.mxu0 0.0
    %495 = vmatprep.subr.mxu0 0.0
    %496 = vmatpush1.msra.mxu0 0.0
    %497 = vmatprep.subr.mxu0 0.0
    %498 = vmatpush1.msra.mxu0 0.0
    %499 = vmatprep.subr.mxu0 0.0
    %500 = vmatpush1.msra.mxu0 0.0
    %501 = vmatprep.subr.mxu0 0.0
    %502 = vmatpush1.msra.mxu0 0.0
    %503 = vmatprep.subr.mxu0 0.0
    %504 = vmatpush1.msra.mxu0 0.0
    %505 = vmatprep.subr.mxu0 0.0
    %506 = vmatpush1.msra.mxu0 0.0
    %507 = vmatprep.subr.mxu0 0.0
    %508 = vmatpush1.msra.mxu0 0.0
    %509 = vmatprep.subr.mxu0 0.0
    %510 = vmatpush1.msra.mxu0 0.0
    %511 = vmatprep.subr.mxu0 0.0
    %512 = vmatpush1.msra.mxu0 0.0
    %513 = vmatprep.subr.mxu0 0.0
    %514 = vmatpush1.msra.mxu0 0.0
    %515 = vmatprep.subr.mxu0 0.0
    %516 = vmatpush1.msra.mxu0 0.0
    %517 = vmatprep.subr.mxu0 0.0
    %518 = vmatpush1.msra.mxu0 0.0
    %519 = vmatprep.mubr.f32.mxu0 0.0
    %520 = vmatmul.mubr.f32.gmra.mrb[0].mxu0 %v453
    %v521 = vpop.f32.mrb[0].mxu0
    %v522 = vadd.f32 0.0, %v521
    %v523 = vpop.f32.mrb[0].mxu0
    %524 = vdwg.mxu0
    %v525 = vadd.f32 %v452, %v522
    %v526 = vsub.f32 0.0, %v525
    %v527 = vmul.f32 %v526, 1.442695
    %v528 = vpow.pop %v527
    %v529 = vadd.f32 %v528, 1.0
    %v530 = vrcp.pop %v529
    %v531 = vmul.f32 1.0, %v530
    %v532 = vtanh.pop %v525
    %v533 = vmul.f32 %v531, %v437
    %535 = vrot.lane.b32.xlu0 %v532, 32
    %v536 = vpop.permute.xlu0 %535
    %v538 = vmul.f32 %v531, %v536
    %540 = vrot.lane.b32.xlu0 %v538, 32
    %v541 = vpop.permute.xlu0 %540
    %v543 = vadd.f32 %v533, %v541
    %v544 = vtanh.pop %v543
    %546 = vrot.lane.b32.xlu0 %v544, 32
    %v547 = vpop.permute.xlu0 %546
    %v549 = vmul.f32 %v531, %v547
    %551 = vrot.lane.b32.xlu0 %v549, 64
    %v552 = vpop.permute.xlu0 %551
    %s554 = scalar_lea.vmem [#allocation3], 16
    %555 = vst.msk [vmem:[%s554] sm:$0xff] %vm341, %v552
    %s556 = scalar_lea.vmem [#allocation3], 104
    %557 = vst.msk [vmem:[%s556] sm:$0xff] %vm344, %v552
    %v558 = vld [vmem:[#allocation2 + $0x18] sm:$0xff]
    %v559 = vsel %vm238, %v552, 0
    %561 = vmatprep.subr.mxu0 0.0
    %562 = vmatpush1.msra.mxu0 %v233
    %563 = vmatprep.subr.mxu0 0.0
    %564 = vmatpush1.msra.mxu0 %v234
    %565 = vmatprep.subr.mxu0 0.0
    %566 = vmatpush1.msra.mxu0 %v235
    %567 = vmatprep.subr.mxu0 0.0
    %568 = vmatpush1.msra.mxu0 %v236
    %569 = vmatprep.subr.mxu0 0.0
    %570 = vmatpush1.msra.mxu0 0.0
    %571 = vmatprep.subr.mxu0 0.0
    %572 = vmatpush1.msra.mxu0 0.0
    %573 = vmatprep.subr.mxu0 0.0
    %574 = vmatpush1.msra.mxu0 0.0
    %575 = vmatprep.subr.mxu0 0.0
    %576 = vmatpush1.msra.mxu0 0.0
    %577 = vmatprep.subr.mxu0 0.0
    %578 = vmatpush1.msra.mxu0 0.0
    %579 = vmatprep.subr.mxu0 0.0
    %580 = vmatpush1.msra.mxu0 0.0
    %581 = vmatprep.subr.mxu0 0.0
    %582 = vmatpush1.msra.mxu0 0.0
    %583 = vmatprep.subr.mxu0 0.0
    %584 = vmatpush1.msra.mxu0 0.0
    %585 = vmatprep.subr.mxu0 0.0
    %586 = vmatpush1.msra.mxu0 0.0
    %587 = vmatprep.subr.mxu0 0.0
    %588 = vmatpush1.msra.mxu0 0.0
    %589 = vmatprep.subr.mxu0 0.0
    %590 = vmatpush1.msra.mxu0 0.0
    %591 = vmatprep.subr.mxu0 0.0
    %592 = vmatpush1.msra.mxu0 0.0
    %593 = vmatprep.subr.mxu0 0.0
    %594 = vmatpush1.msra.mxu0 0.0
    %595 = vmatprep.subr.mxu0 0.0
    %596 = vmatpush1.msra.mxu0 0.0
    %597 = vmatprep.subr.mxu0 0.0
    %598 = vmatpush1.msra.mxu0 0.0
    %599 = vmatprep.subr.mxu0 0.0
    %600 = vmatpush1.msra.mxu0 0.0
    %601 = vmatprep.subr.mxu0 0.0
    %602 = vmatpush1.msra.mxu0 0.0
    %603 = vmatprep.subr.mxu0 0.0
    %604 = vmatpush1.msra.mxu0 0.0
    %605 = vmatprep.subr.mxu0 0.0
    %606 = vmatpush1.msra.mxu0 0.0
    %607 = vmatprep.subr.mxu0 0.0
    %608 = vmatpush1.msra.mxu0 0.0
    %609 = vmatprep.subr.mxu0 0.0
    %610 = vmatpush1.msra.mxu0 0.0
    %611 = vmatprep.subr.mxu0 0.0
    %612 = vmatpush1.msra.mxu0 0.0
    %613 = vmatprep.subr.mxu0 0.0
    %614 = vmatpush1.msra.mxu0 0.0
    %615 = vmatprep.subr.mxu0 0.0
    %616 = vmatpush1.msra.mxu0 0.0
    %617 = vmatprep.subr.mxu0 0.0
    %618 = vmatpush1.msra.mxu0 0.0
    %619 = vmatprep.subr.mxu0 0.0
    %620 = vmatpush1.msra.mxu0 0.0
    %621 = vmatprep.subr.mxu0 0.0
    %622 = vmatpush1.msra.mxu0 0.0
    %623 = vmatprep.subr.mxu0 0.0
    %624 = vmatpush1.msra.mxu0 0.0
    %625 = vmatprep.mubr.f32.mxu0 0.0
    %626 = vmatmul.mubr.f32.gmra.mrb[0].mxu0 %v559
    %v627 = vpop.f32.mrb[0].mxu0
    %v628 = vadd.f32 0.0, %v627
    %v629 = vpop.f32.mrb[0].mxu0
    %630 = vdwg.mxu0
    %v631 = vadd.f32 %v558, %v628
    %v632 = vsub.f32 0.0, %v631
    %v633 = vmul.f32 %v632, 1.442695
    %v634 = vpow.pop %v633
    %v635 = vadd.f32 %v634, 1.0
    %v636 = vrcp.pop %v635
    %v637 = vmul.f32 1.0, %v636
    %v638 = vtanh.pop %v631
    %v639 = vmul.f32 %v637, %v543
    %641 = vrot.lane.b32.xlu0 %v638, 32
    %v642 = vpop.permute.xlu0 %641
    %v644 = vmul.f32 %v637, %v642
    %646 = vrot.lane.b32.xlu0 %v644, 32
    %v647 = vpop.permute.xlu0 %646
    %v649 = vadd.f32 %v639, %v647
    %v650 = vtanh.pop %v649
    %652 = vrot.lane.b32.xlu0 %v650, 32
    %v653 = vpop.permute.xlu0 %652
    %v655 = vmul.f32 %v637, %v653
    %657 = vrot.lane.b32.xlu0 %v655, 64
    %v658 = vpop.permute.xlu0 %657
    %s660 = scalar_lea.vmem [#allocation3], 24
    %661 = vst.msk [vmem:[%s660] sm:$0xff] %vm341, %v658
    %s662 = scalar_lea.vmem [#allocation3], 96
    %663 = vst.msk [vmem:[%s662] sm:$0xff] %vm344, %v658
    %v664 = vld [vmem:[#allocation2 + $0x20] sm:$0xff]
    %v665 = vsel %vm238, %v658, 0
    %667 = vmatprep.subr.mxu0 0.0
    %668 = vmatpush1.msra.mxu0 %v233
    %669 = vmatprep.subr.mxu0 0.0
    %670 = vmatpush1.msra.mxu0 %v234
    %671 = vmatprep.subr.mxu0 0.0
    %672 = vmatpush1.msra.mxu0 %v235
    %673 = vmatprep.subr.mxu0 0.0
    %674 = vmatpush1.msra.mxu0 %v236
    %675 = vmatprep.subr.mxu0 0.0
    %676 = vmatpush1.msra.mxu0 0.0
    %677 = vmatprep.subr.mxu0 0.0
    %678 = vmatpush1.msra.mxu0 0.0
    %679 = vmatprep.subr.mxu0 0.0
    %680 = vmatpush1.msra.mxu0 0.0
    %681 = vmatprep.subr.mxu0 0.0
    %682 = vmatpush1.msra.mxu0 0.0
    %683 = vmatprep.subr.mxu0 0.0
    %684 = vmatpush1.msra.mxu0 0.0
    %685 = vmatprep.subr.mxu0 0.0
    %686 = vmatpush1.msra.mxu0 0.0
    %687 = vmatprep.subr.mxu0 0.0
    %688 = vmatpush1.msra.mxu0 0.0
    %689 = vmatprep.subr.mxu0 0.0
    %690 = vmatpush1.msra.mxu0 0.0
    %691 = vmatprep.subr.mxu0 0.0
    %692 = vmatpush1.msra.mxu0 0.0
    %693 = vmatprep.subr.mxu0 0.0
    %694 = vmatpush1.msra.mxu0 0.0
    %695 = vmatprep.subr.mxu0 0.0
    %696 = vmatpush1.msra.mxu0 0.0
    %697 = vmatprep.subr.mxu0 0.0
    %698 = vmatpush1.msra.mxu0 0.0
    %699 = vmatprep.subr.mxu0 0.0
    %700 = vmatpush1.msra.mxu0 0.0
    %701 = vmatprep.subr.mxu0 0.0
    %702 = vmatpush1.msra.mxu0 0.0
    %703 = vmatprep.subr.mxu0 0.0
    %704 = vmatpush1.msra.mxu0 0.0
    %705 = vmatprep.subr.mxu0 0.0
    %706 = vmatpush1.msra.mxu0 0.0
    %707 = vmatprep.subr.mxu0 0.0
    %708 = vmatpush1.msra.mxu0 0.0
    %709 = vmatprep.subr.mxu0 0.0
    %710 = vmatpush1.msra.mxu0 0.0
    %711 = vmatprep.subr.mxu0 0.0
    %712 = vmatpush1.msra.mxu0 0.0
    %713 = vmatprep.subr.mxu0 0.0
    %714 = vmatpush1.msra.mxu0 0.0
    %715 = vmatprep.subr.mxu0 0.0
    %716 = vmatpush1.msra.mxu0 0.0
    %717 = vmatprep.subr.mxu0 0.0
    %718 = vmatpush1.msra.mxu0 0.0
    %719 = vmatprep.subr.mxu0 0.0
    %720 = vmatpush1.msra.mxu0 0.0
    %721 = vmatprep.subr.mxu0 0.0
    %722 = vmatpush1.msra.mxu0 0.0
    %723 = vmatprep.subr.mxu0 0.0
    %724 = vmatpush1.msra.mxu0 0.0
    %725 = vmatprep.subr.mxu0 0.0
    %726 = vmatpush1.msra.mxu0 0.0
    %727 = vmatprep.subr.mxu0 0.0
    %728 = vmatpush1.msra.mxu0 0.0
    %729 = vmatprep.subr.mxu0 0.0
    %730 = vmatpush1.msra.mxu0 0.0
    %731 = vmatprep.mubr.f32.mxu0 0.0
    %732 = vmatmul.mubr.f32.gmra.mrb[0].mxu0 %v665
    %v733 = vpop.f32.mrb[0].mxu0
    %v734 = vadd.f32 0.0, %v733
    %v735 = vpop.f32.mrb[0].mxu0
    %736 = vdwg.mxu0
    %v737 = vadd.f32 %v664, %v734
    %v738 = vsub.f32 0.0, %v737
    %v739 = vmul.f32 %v738, 1.442695
    %v740 = vpow.pop %v739
    %v741 = vadd.f32 %v740, 1.0
    %v742 = vrcp.pop %v741
    %v743 = vmul.f32 1.0, %v742
    %v744 = vtanh.pop %v737
    %v745 = vmul.f32 %v743, %v649
    %747 = vrot.lane.b32.xlu0 %v744, 32
    %v748 = vpop.permute.xlu0 %747
    %v750 = vmul.f32 %v743, %v748
    %752 = vrot.lane.b32.xlu0 %v750, 32
    %v753 = vpop.permute.xlu0 %752
    %v755 = vadd.f32 %v745, %v753
    %v756 = vtanh.pop %v755
    %758 = vrot.lane.b32.xlu0 %v756, 32
    %v759 = vpop.permute.xlu0 %758
    %v761 = vmul.f32 %v743, %v759
    %763 = vrot.lane.b32.xlu0 %v761, 64
    %v764 = vpop.permute.xlu0 %763
    %s766 = scalar_lea.vmem [#allocation3], 32
    %767 = vst.msk [vmem:[%s766] sm:$0xff] %vm341, %v764
    %s768 = scalar_lea.vmem [#allocation3], 88
    %769 = vst.msk [vmem:[%s768] sm:$0xff] %vm344, %v764
    %v770 = vld [vmem:[#allocation2 + $0x28] sm:$0xff]
    %v771 = vsel %vm238, %v764, 0
    %773 = vmatprep.subr.mxu0 0.0
    %774 = vmatpush1.msra.mxu0 %v233
    %775 = vmatprep.subr.mxu0 0.0
    %776 = vmatpush1.msra.mxu0 %v234
    %777 = vmatprep.subr.mxu0 0.0
    %778 = vmatpush1.msra.mxu0 %v235
    %779 = vmatprep.subr.mxu0 0.0
    %780 = vmatpush1.msra.mxu0 %v236
    %781 = vmatprep.subr.mxu0 0.0
    %782 = vmatpush1.msra.mxu0 0.0
    %783 = vmatprep.subr.mxu0 0.0
    %784 = vmatpush1.msra.mxu0 0.0
    %785 = vmatprep.subr.mxu0 0.0
    %786 = vmatpush1.msra.mxu0 0.0
    %787 = vmatprep.subr.mxu0 0.0
    %788 = vmatpush1.msra.mxu0 0.0
    %789 = vmatprep.subr.mxu0 0.0
    %790 = vmatpush1.msra.mxu0 0.0
    %791 = vmatprep.subr.mxu0 0.0
    %792 = vmatpush1.msra.mxu0 0.0
    %793 = vmatprep.subr.mxu0 0.0
    %794 = vmatpush1.msra.mxu0 0.0
    %795 = vmatprep.subr.mxu0 0.0
    %796 = vmatpush1.msra.mxu0 0.0
    %797 = vmatprep.subr.mxu0 0.0
    %798 = vmatpush1.msra.mxu0 0.0
    %799 = vmatprep.subr.mxu0 0.0
    %800 = vmatpush1.msra.mxu0 0.0
    %801 = vmatprep.subr.mxu0 0.0
    %802 = vmatpush1.msra.mxu0 0.0
    %803 = vmatprep.subr.mxu0 0.0
    %804 = vmatpush1.msra.mxu0 0.0
    %805 = vmatprep.subr.mxu0 0.0
    %806 = vmatpush1.msra.mxu0 0.0
    %807 = vmatprep.subr.mxu0 0.0
    %808 = vmatpush1.msra.mxu0 0.0
    %809 = vmatprep.subr.mxu0 0.0
    %810 = vmatpush1.msra.mxu0 0.0
    %811 = vmatprep.subr.mxu0 0.0
    %812 = vmatpush1.msra.mxu0 0.0
    %813 = vmatprep.subr.mxu0 0.0
    %814 = vmatpush1.msra.mxu0 0.0
    %815 = vmatprep.subr.mxu0 0.0
    %816 = vmatpush1.msra.mxu0 0.0
    %817 = vmatprep.subr.mxu0 0.0
    %818 = vmatpush1.msra.mxu0 0.0
    %819 = vmatprep.subr.mxu0 0.0
    %820 = vmatpush1.msra.mxu0 0.0
    %821 = vmatprep.subr.mxu0 0.0
    %822 = vmatpush1.msra.mxu0 0.0
    %823 = vmatprep.subr.mxu0 0.0
    %824 = vmatpush1.msra.mxu0 0.0
    %825 = vmatprep.subr.mxu0 0.0
    %826 = vmatpush1.msra.mxu0 0.0
    %827 = vmatprep.subr.mxu0 0.0
    %828 = vmatpush1.msra.mxu0 0.0
    %829 = vmatprep.subr.mxu0 0.0
    %830 = vmatpush1.msra.mxu0 0.0
    %831 = vmatprep.subr.mxu0 0.0
    %832 = vmatpush1.msra.mxu0 0.0
    %833 = vmatprep.subr.mxu0 0.0
    %834 = vmatpush1.msra.mxu0 0.0
    %835 = vmatprep.subr.mxu0 0.0
    %836 = vmatpush1.msra.mxu0 0.0
    %837 = vmatprep.mubr.f32.mxu0 0.0
    %838 = vmatmul.mubr.f32.gmra.mrb[0].mxu0 %v771
    %v839 = vpop.f32.mrb[0].mxu0
    %v840 = vadd.f32 0.0, %v839
    %v841 = vpop.f32.mrb[0].mxu0
    %842 = vdwg.mxu0
    %v843 = vadd.f32 %v770, %v840
    %v844 = vsub.f32 0.0, %v843
    %v845 = vmul.f32 %v844, 1.442695
    %v846 = vpow.pop %v845
    %v847 = vadd.f32 %v846, 1.0
    %v848 = vrcp.pop %v847
    %v849 = vmul.f32 1.0, %v848
    %v850 = vtanh.pop %v843
    %v851 = vmul.f32 %v849, %v755
    %853 = vrot.lane.b32.xlu0 %v850, 32
    %v854 = vpop.permute.xlu0 %853
    %v856 = vmul.f32 %v849, %v854
    %858 = vrot.lane.b32.xlu0 %v856, 32
    %v859 = vpop.permute.xlu0 %858
    %v861 = vadd.f32 %v851, %v859
    %v862 = vtanh.pop %v861
    %864 = vrot.lane.b32.xlu0 %v862, 32
    %v865 = vpop.permute.xlu0 %864
    %v867 = vmul.f32 %v849, %v865
    %869 = vrot.lane.b32.xlu0 %v867, 64
    %v870 = vpop.permute.xlu0 %869
    %s872 = scalar_lea.vmem [#allocation3], 40
    %873 = vst.msk [vmem:[%s872] sm:$0xff] %vm341, %v870
    %s874 = scalar_lea.vmem [#allocation3], 80
    %875 = vst.msk [vmem:[%s874] sm:$0xff] %vm344, %v870
    %v876 = vld [vmem:[#allocation2 + $0x30] sm:$0xff]
    %v877 = vsel %vm238, %v870, 0
    %879 = vmatprep.subr.mxu0 0.0
    %880 = vmatpush1.msra.mxu0 %v233
    %881 = vmatprep.subr.mxu0 0.0
    %882 = vmatpush1.msra.mxu0 %v234
    %883 = vmatprep.subr.mxu0 0.0
    %884 = vmatpush1.msra.mxu0 %v235
    %885 = vmatprep.subr.mxu0 0.0
    %886 = vmatpush1.msra.mxu0 %v236
    %887 = vmatprep.subr.mxu0 0.0
    %888 = vmatpush1.msra.mxu0 0.0
    %889 = vmatprep.subr.mxu0 0.0
    %890 = vmatpush1.msra.mxu0 0.0
    %891 = vmatprep.subr.mxu0 0.0
    %892 = vmatpush1.msra.mxu0 0.0
    %893 = vmatprep.subr.mxu0 0.0
    %894 = vmatpush1.msra.mxu0 0.0
    %895 = vmatprep.subr.mxu0 0.0
    %896 = vmatpush1.msra.mxu0 0.0
    %897 = vmatprep.subr.mxu0 0.0
    %898 = vmatpush1.msra.mxu0 0.0
    %899 = vmatprep.subr.mxu0 0.0
    %900 = vmatpush1.msra.mxu0 0.0
    %901 = vmatprep.subr.mxu0 0.0
    %902 = vmatpush1.msra.mxu0 0.0
    %903 = vmatprep.subr.mxu0 0.0
    %904 = vmatpush1.msra.mxu0 0.0
    %905 = vmatprep.subr.mxu0 0.0
    %906 = vmatpush1.msra.mxu0 0.0
    %907 = vmatprep.subr.mxu0 0.0
    %908 = vmatpush1.msra.mxu0 0.0
    %909 = vmatprep.subr.mxu0 0.0
    %910 = vmatpush1.msra.mxu0 0.0
    %911 = vmatprep.subr.mxu0 0.0
    %912 = vmatpush1.msra.mxu0 0.0
    %913 = vmatprep.subr.mxu0 0.0
    %914 = vmatpush1.msra.mxu0 0.0
    %915 = vmatprep.subr.mxu0 0.0
    %916 = vmatpush1.msra.mxu0 0.0
    %917 = vmatprep.subr.mxu0 0.0
    %918 = vmatpush1.msra.mxu0 0.0
    %919 = vmatprep.subr.mxu0 0.0
    %920 = vmatpush1.msra.mxu0 0.0
    %921 = vmatprep.subr.mxu0 0.0
    %922 = vmatpush1.msra.mxu0 0.0
    %923 = vmatprep.subr.mxu0 0.0
    %924 = vmatpush1.msra.mxu0 0.0
    %925 = vmatprep.subr.mxu0 0.0
    %926 = vmatpush1.msra.mxu0 0.0
    %927 = vmatprep.subr.mxu0 0.0
    %928 = vmatpush1.msra.mxu0 0.0
    %929 = vmatprep.subr.mxu0 0.0
    %930 = vmatpush1.msra.mxu0 0.0
    %931 = vmatprep.subr.mxu0 0.0
    %932 = vmatpush1.msra.mxu0 0.0
    %933 = vmatprep.subr.mxu0 0.0
    %934 = vmatpush1.msra.mxu0 0.0
    %935 = vmatprep.subr.mxu0 0.0
    %936 = vmatpush1.msra.mxu0 0.0
    %937 = vmatprep.subr.mxu0 0.0
    %938 = vmatpush1.msra.mxu0 0.0
    %939 = vmatprep.subr.mxu0 0.0
    %940 = vmatpush1.msra.mxu0 0.0
    %941 = vmatprep.subr.mxu0 0.0
    %942 = vmatpush1.msra.mxu0 0.0
    %943 = vmatprep.mubr.f32.mxu0 0.0
    %944 = vmatmul.mubr.f32.gmra.mrb[0].mxu0 %v877
    %v945 = vpop.f32.mrb[0].mxu0
    %v946 = vadd.f32 0.0, %v945
    %v947 = vpop.f32.mrb[0].mxu0
    %948 = vdwg.mxu0
    %v949 = vadd.f32 %v876, %v946
    %v950 = vsub.f32 0.0, %v949
    %v951 = vmul.f32 %v950, 1.442695
    %v952 = vpow.pop %v951
    %v953 = vadd.f32 %v952, 1.0
    %v954 = vrcp.pop %v953
    %v955 = vmul.f32 1.0, %v954
    %v956 = vtanh.pop %v949
    %v957 = vmul.f32 %v955, %v861
    %959 = vrot.lane.b32.xlu0 %v956, 32
    %v960 = vpop.permute.xlu0 %959
    %v962 = vmul.f32 %v955, %v960
    %964 = vrot.lane.b32.xlu0 %v962, 32
    %v965 = vpop.permute.xlu0 %964
    %v967 = vadd.f32 %v957, %v965
    %v968 = vtanh.pop %v967
    %970 = vrot.lane.b32.xlu0 %v968, 32
    %v971 = vpop.permute.xlu0 %970
    %v973 = vmul.f32 %v955, %v971
    %975 = vrot.lane.b32.xlu0 %v973, 64
    %v976 = vpop.permute.xlu0 %975
    %s978 = scalar_lea.vmem [#allocation3], 48
    %979 = vst.msk [vmem:[%s978] sm:$0xff] %vm341, %v976
    %s980 = scalar_lea.vmem [#allocation3], 72
    %981 = vst.msk [vmem:[%s980] sm:$0xff] %vm344, %v976
    %v982 = vld [vmem:[#allocation2 + $0x38] sm:$0xff]
    %v983 = vsel %vm238, %v976, 0
    %985 = vmatprep.subr.mxu0 0.0
    %986 = vmatpush1.msra.mxu0 %v233
    %987 = vmatprep.subr.mxu0 0.0
    %988 = vmatpush1.msra.mxu0 %v234
    %989 = vmatprep.subr.mxu0 0.0
    %990 = vmatpush1.msra.mxu0 %v235
    %991 = vmatprep.subr.mxu0 0.0
    %992 = vmatpush1.msra.mxu0 %v236
    %993 = vmatprep.subr.mxu0 0.0
    %994 = vmatpush1.msra.mxu0 0.0
    %995 = vmatprep.subr.mxu0 0.0
    %996 = vmatpush1.msra.mxu0 0.0
    %997 = vmatprep.subr.mxu0 0.0
    %998 = vmatpush1.msra.mxu0 0.0
    %999 = vmatprep.subr.mxu0 0.0
    %1000 = vmatpush1.msra.mxu0 0.0
    %1001 = vmatprep.subr.mxu0 0.0
    %1002 = vmatpush1.msra.mxu0 0.0
    %1003 = vmatprep.subr.mxu0 0.0
    %1004 = vmatpush1.msra.mxu0 0.0
    %1005 = vmatprep.subr.mxu0 0.0
    %1006 = vmatpush1.msra.mxu0 0.0
    %1007 = vmatprep.subr.mxu0 0.0
    %1008 = vmatpush1.msra.mxu0 0.0
    %1009 = vmatprep.subr.mxu0 0.0
    %1010 = vmatpush1.msra.mxu0 0.0
    %1011 = vmatprep.subr.mxu0 0.0
    %1012 = vmatpush1.msra.mxu0 0.0
    %1013 = vmatprep.subr.mxu0 0.0
    %1014 = vmatpush1.msra.mxu0 0.0
    %1015 = vmatprep.subr.mxu0 0.0
    %1016 = vmatpush1.msra.mxu0 0.0
    %1017 = vmatprep.subr.mxu0 0.0
    %1018 = vmatpush1.msra.mxu0 0.0
    %1019 = vmatprep.subr.mxu0 0.0
    %1020 = vmatpush1.msra.mxu0 0.0
    %1021 = vmatprep.subr.mxu0 0.0
    %1022 = vmatpush1.msra.mxu0 0.0
    %1023 = vmatprep.subr.mxu0 0.0
    %1024 = vmatpush1.msra.mxu0 0.0
    %1025 = vmatprep.subr.mxu0 0.0
    %1026 = vmatpush1.msra.mxu0 0.0
    %1027 = vmatprep.subr.mxu0 0.0
    %1028 = vmatpush1.msra.mxu0 0.0
    %1029 = vmatprep.subr.mxu0 0.0
    %1030 = vmatpush1.msra.mxu0 0.0
    %1031 = vmatprep.subr.mxu0 0.0
    %1032 = vmatpush1.msra.mxu0 0.0
    %1033 = vmatprep.subr.mxu0 0.0
    %1034 = vmatpush1.msra.mxu0 0.0
    %1035 = vmatprep.subr.mxu0 0.0
    %1036 = vmatpush1.msra.mxu0 0.0
    %1037 = vmatprep.subr.mxu0 0.0
    %1038 = vmatpush1.msra.mxu0 0.0
    %1039 = vmatprep.subr.mxu0 0.0
    %1040 = vmatpush1.msra.mxu0 0.0
    %1041 = vmatprep.subr.mxu0 0.0
    %1042 = vmatpush1.msra.mxu0 0.0
    %1043 = vmatprep.subr.mxu0 0.0
    %1044 = vmatpush1.msra.mxu0 0.0
    %1045 = vmatprep.subr.mxu0 0.0
    %1046 = vmatpush1.msra.mxu0 0.0
    %1047 = vmatprep.subr.mxu0 0.0
    %1048 = vmatpush1.msra.mxu0 0.0
    %1049 = vmatprep.mubr.f32.mxu0 0.0
    %1050 = vmatmul.mubr.f32.gmra.mrb[0].mxu0 %v983
    %v1051 = vpop.f32.mrb[0].mxu0
    %v1052 = vadd.f32 0.0, %v1051
    %v1053 = vpop.f32.mrb[0].mxu0
    %1054 = vdwg.mxu0
    %v1055 = vadd.f32 %v982, %v1052
    %v1056 = vsub.f32 0.0, %v1055
    %v1057 = vmul.f32 %v1056, 1.442695
    %v1058 = vpow.pop %v1057
    %v1059 = vadd.f32 %v1058, 1.0
    %v1060 = vrcp.pop %v1059
    %v1061 = vmul.f32 1.0, %v1060
    %v1062 = vtanh.pop %v1055
    %v1063 = vmul.f32 %v1061, %v967
    %1065 = vrot.lane.b32.xlu0 %v1062, 32
    %v1066 = vpop.permute.xlu0 %1065
    %v1068 = vmul.f32 %v1061, %v1066
    %1070 = vrot.lane.b32.xlu0 %v1068, 32
    %v1071 = vpop.permute.xlu0 %1070
    %v1073 = vadd.f32 %v1063, %v1071
    %v1074 = vtanh.pop %v1073
    %1076 = vrot.lane.b32.xlu0 %v1074, 32
    %v1077 = vpop.permute.xlu0 %1076
    %v1079 = vmul.f32 %v1061, %v1077
    %1081 = vrot.lane.b32.xlu0 %v1079, 64
    %v1082 = vpop.permute.xlu0 %1081
    %s1084 = scalar_lea.vmem [#allocation3], 56
    %1085 = vst.msk [vmem:[%s1084] sm:$0xff] %vm341, %v1082
    %s1086 = scalar_lea.vmem [#allocation3], 64
    %1087 = vst.msk [vmem:[%s1086] sm:$0xff] %vm344, %v1082
    %v1088 = vld [vmem:[#allocation2 + $0x40] sm:$0xff]
    %v1089 = vsel %vm238, %v1082, 0
    %1091 = vmatprep.subr.mxu0 0.0
    %1092 = vmatpush1.msra.mxu0 %v233
    %1093 = vmatprep.subr.mxu0 0.0
    %1094 = vmatpush1.msra.mxu0 %v234
    %1095 = vmatprep.subr.mxu0 0.0
    %1096 = vmatpush1.msra.mxu0 %v235
    %1097 = vmatprep.subr.mxu0 0.0
    %1098 = vmatpush1.msra.mxu0 %v236
    %1099 = vmatprep.subr.mxu0 0.0
    %1100 = vmatpush1.msra.mxu0 0.0
    %1101 = vmatprep.subr.mxu0 0.0
    %1102 = vmatpush1.msra.mxu0 0.0
    %1103 = vmatprep.subr.mxu0 0.0
    %1104 = vmatpush1.msra.mxu0 0.0
    %1105 = vmatprep.subr.mxu0 0.0
    %1106 = vmatpush1.msra.mxu0 0.0
    %1107 = vmatprep.subr.mxu0 0.0
    %1108 = vmatpush1.msra.mxu0 0.0
    %1109 = vmatprep.subr.mxu0 0.0
    %1110 = vmatpush1.msra.mxu0 0.0
    %1111 = vmatprep.subr.mxu0 0.0
    %1112 = vmatpush1.msra.mxu0 0.0
    %1113 = vmatprep.subr.mxu0 0.0
    %1114 = vmatpush1.msra.mxu0 0.0
    %1115 = vmatprep.subr.mxu0 0.0
    %1116 = vmatpush1.msra.mxu0 0.0
    %1117 = vmatprep.subr.mxu0 0.0
    %1118 = vmatpush1.msra.mxu0 0.0
    %1119 = vmatprep.subr.mxu0 0.0
    %1120 = vmatpush1.msra.mxu0 0.0
    %1121 = vmatprep.subr.mxu0 0.0
    %1122 = vmatpush1.msra.mxu0 0.0
    %1123 = vmatprep.subr.mxu0 0.0
    %1124 = vmatpush1.msra.mxu0 0.0
    %1125 = vmatprep.subr.mxu0 0.0
    %1126 = vmatpush1.msra.mxu0 0.0
    %1127 = vmatprep.subr.mxu0 0.0
    %1128 = vmatpush1.msra.mxu0 0.0
    %1129 = vmatprep.subr.mxu0 0.0
    %1130 = vmatpush1.msra.mxu0 0.0
    %1131 = vmatprep.subr.mxu0 0.0
    %1132 = vmatpush1.msra.mxu0 0.0
    %1133 = vmatprep.subr.mxu0 0.0
    %1134 = vmatpush1.msra.mxu0 0.0
    %1135 = vmatprep.subr.mxu0 0.0
    %1136 = vmatpush1.msra.mxu0 0.0
    %1137 = vmatprep.subr.mxu0 0.0
    %1138 = vmatpush1.msra.mxu0 0.0
    %1139 = vmatprep.subr.mxu0 0.0
    %1140 = vmatpush1.msra.mxu0 0.0
    %1141 = vmatprep.subr.mxu0 0.0
    %1142 = vmatpush1.msra.mxu0 0.0
    %1143 = vmatprep.subr.mxu0 0.0
    %1144 = vmatpush1.msra.mxu0 0.0
    %1145 = vmatprep.subr.mxu0 0.0
    %1146 = vmatpush1.msra.mxu0 0.0
    %1147 = vmatprep.subr.mxu0 0.0
    %1148 = vmatpush1.msra.mxu0 0.0
    %1149 = vmatprep.subr.mxu0 0.0
    %1150 = vmatpush1.msra.mxu0 0.0
    %1151 = vmatprep.subr.mxu0 0.0
    %1152 = vmatpush1.msra.mxu0 0.0
    %1153 = vmatprep.subr.mxu0 0.0
    %1154 = vmatpush1.msra.mxu0 0.0
    %1155 = vmatprep.mubr.f32.mxu0 0.0
    %1156 = vmatmul.mubr.f32.gmra.mrb[0].mxu0 %v1089
    %v1157 = vpop.f32.mrb[0].mxu0
    %v1158 = vadd.f32 0.0, %v1157
    %v1159 = vpop.f32.mrb[0].mxu0
    %1160 = vdwg.mxu0
    %v1161 = vadd.f32 %v1088, %v1158
    %v1162 = vsub.f32 0.0, %v1161
    %v1163 = vmul.f32 %v1162, 1.442695
    %v1164 = vpow.pop %v1163
    %v1165 = vadd.f32 %v1164, 1.0
    %v1166 = vrcp.pop %v1165
    %v1167 = vmul.f32 1.0, %v1166
    %v1168 = vtanh.pop %v1161
    %v1169 = vmul.f32 %v1167, %v1073
    %1171 = vrot.lane.b32.xlu0 %v1168, 32
    %v1172 = vpop.permute.xlu0 %1171
    %v1174 = vmul.f32 %v1167, %v1172
    %1176 = vrot.lane.b32.xlu0 %v1174, 32
    %v1177 = vpop.permute.xlu0 %1176
    %v1179 = vadd.f32 %v1169, %v1177
    %v1180 = vtanh.pop %v1179
    %1182 = vrot.lane.b32.xlu0 %v1180, 32
    %v1183 = vpop.permute.xlu0 %1182
    %v1185 = vmul.f32 %v1167, %v1183
    %1187 = vrot.lane.b32.xlu0 %v1185, 64
    %v1188 = vpop.permute.xlu0 %1187
    %1190 = vst.msk [vmem:[%s1086] sm:$0xff] %vm341, %v1188
    %1191 = vst.msk [vmem:[%s1084] sm:$0xff] %vm344, %v1188
    %v1192 = vld [vmem:[#allocation2 + $0x48] sm:$0xff]
    %v1193 = vsel %vm238, %v1188, 0
    %1195 = vmatprep.subr.mxu0 0.0
    %1196 = vmatpush1.msra.mxu0 %v233
    %1197 = vmatprep.subr.mxu0 0.0
    %1198 = vmatpush1.msra.mxu0 %v234
    %1199 = vmatprep.subr.mxu0 0.0
    %1200 = vmatpush1.msra.mxu0 %v235
    %1201 = vmatprep.subr.mxu0 0.0
    %1202 = vmatpush1.msra.mxu0 %v236
    %1203 = vmatprep.subr.mxu0 0.0
    %1204 = vmatpush1.msra.mxu0 0.0
    %1205 = vmatprep.subr.mxu0 0.0
    %1206 = vmatpush1.msra.mxu0 0.0
    %1207 = vmatprep.subr.mxu0 0.0
    %1208 = vmatpush1.msra.mxu0 0.0
    %1209 = vmatprep.subr.mxu0 0.0
    %1210 = vmatpush1.msra.mxu0 0.0
    %1211 = vmatprep.subr.mxu0 0.0
    %1212 = vmatpush1.msra.mxu0 0.0
    %1213 = vmatprep.subr.mxu0 0.0
    %1214 = vmatpush1.msra.mxu0 0.0
    %1215 = vmatprep.subr.mxu0 0.0
    %1216 = vmatpush1.msra.mxu0 0.0
    %1217 = vmatprep.subr.mxu0 0.0
    %1218 = vmatpush1.msra.mxu0 0.0
    %1219 = vmatprep.subr.mxu0 0.0
    %1220 = vmatpush1.msra.mxu0 0.0
    %1221 = vmatprep.subr.mxu0 0.0
    %1222 = vmatpush1.msra.mxu0 0.0
    %1223 = vmatprep.subr.mxu0 0.0
    %1224 = vmatpush1.msra.mxu0 0.0
    %1225 = vmatprep.subr.mxu0 0.0
    %1226 = vmatpush1.msra.mxu0 0.0
    %1227 = vmatprep.subr.mxu0 0.0
    %1228 = vmatpush1.msra.mxu0 0.0
    %1229 = vmatprep.subr.mxu0 0.0
    %1230 = vmatpush1.msra.mxu0 0.0
    %1231 = vmatprep.subr.mxu0 0.0
    %1232 = vmatpush1.msra.mxu0 0.0
    %1233 = vmatprep.subr.mxu0 0.0
    %1234 = vmatpush1.msra.mxu0 0.0
    %1235 = vmatprep.subr.mxu0 0.0
    %1236 = vmatpush1.msra.mxu0 0.0
    %1237 = vmatprep.subr.mxu0 0.0
    %1238 = vmatpush1.msra.mxu0 0.0
    %1239 = vmatprep.subr.mxu0 0.0
    %1240 = vmatpush1.msra.mxu0 0.0
    %1241 = vmatprep.subr.mxu0 0.0
    %1242 = vmatpush1.msra.mxu0 0.0
    %1243 = vmatprep.subr.mxu0 0.0
    %1244 = vmatpush1.msra.mxu0 0.0
    %1245 = vmatprep.subr.mxu0 0.0
    %1246 = vmatpush1.msra.mxu0 0.0
    %1247 = vmatprep.subr.mxu0 0.0
    %1248 = vmatpush1.msra.mxu0 0.0
    %1249 = vmatprep.subr.mxu0 0.0
    %1250 = vmatpush1.msra.mxu0 0.0
    %1251 = vmatprep.subr.mxu0 0.0
    %1252 = vmatpush1.msra.mxu0 0.0
    %1253 = vmatprep.subr.mxu0 0.0
    %1254 = vmatpush1.msra.mxu0 0.0
    %1255 = vmatprep.subr.mxu0 0.0
    %1256 = vmatpush1.msra.mxu0 0.0
    %1257 = vmatprep.subr.mxu0 0.0
    %1258 = vmatpush1.msra.mxu0 0.0
    %1259 = vmatprep.mubr.f32.mxu0 0.0
    %1260 = vmatmul.mubr.f32.gmra.mrb[0].mxu0 %v1193
    %v1261 = vpop.f32.mrb[0].mxu0
    %v1262 = vadd.f32 0.0, %v1261
    %v1263 = vpop.f32.mrb[0].mxu0
    %1264 = vdwg.mxu0
    %v1265 = vadd.f32 %v1192, %v1262
    %v1266 = vsub.f32 0.0, %v1265
    %v1267 = vmul.f32 %v1266, 1.442695
    %v1268 = vpow.pop %v1267
    %v1269 = vadd.f32 %v1268, 1.0
    %v1270 = vrcp.pop %v1269
    %v1271 = vmul.f32 1.0, %v1270
    %v1272 = vtanh.pop %v1265
    %v1273 = vmul.f32 %v1271, %v1179
    %1275 = vrot.lane.b32.xlu0 %v1272, 32
    %v1276 = vpop.permute.xlu0 %1275
    %v1278 = vmul.f32 %v1271, %v1276
    %1280 = vrot.lane.b32.xlu0 %v1278, 32
    %v1281 = vpop.permute.xlu0 %1280
    %v1283 = vadd.f32 %v1273, %v1281
    %v1284 = vtanh.pop %v1283
    %1286 = vrot.lane.b32.xlu0 %v1284, 32
    %v1287 = vpop.permute.xlu0 %1286
    %v1289 = vmul.f32 %v1271, %v1287
    %1291 = vrot.lane.b32.xlu0 %v1289, 64
    %v1292 = vpop.permute.xlu0 %1291
    %1294 = vst.msk [vmem:[%s980] sm:$0xff] %vm341, %v1292
    %1295 = vst.msk [vmem:[%s978] sm:$0xff] %vm344, %v1292
    %v1296 = vld [vmem:[#allocation2 + $0x50] sm:$0xff]
    %v1297 = vsel %vm238, %v1292, 0
    %1299 = vmatprep.subr.mxu0 0.0
    %1300 = vmatpush1.msra.mxu0 %v233
    %1301 = vmatprep.subr.mxu0 0.0
    %1302 = vmatpush1.msra.mxu0 %v234
    %1303 = vmatprep.subr.mxu0 0.0
    %1304 = vmatpush1.msra.mxu0 %v235
    %1305 = vmatprep.subr.mxu0 0.0
    %1306 = vmatpush1.msra.mxu0 %v236
    %1307 = vmatprep.subr.mxu0 0.0
    %1308 = vmatpush1.msra.mxu0 0.0
    %1309 = vmatprep.subr.mxu0 0.0
    %1310 = vmatpush1.msra.mxu0 0.0
    %1311 = vmatprep.subr.mxu0 0.0
    %1312 = vmatpush1.msra.mxu0 0.0
    %1313 = vmatprep.subr.mxu0 0.0
    %1314 = vmatpush1.msra.mxu0 0.0
    %1315 = vmatprep.subr.mxu0 0.0
    %1316 = vmatpush1.msra.mxu0 0.0
    %1317 = vmatprep.subr.mxu0 0.0
    %1318 = vmatpush1.msra.mxu0 0.0
    %1319 = vmatprep.subr.mxu0 0.0
    %1320 = vmatpush1.msra.mxu0 0.0
    %1321 = vmatprep.subr.mxu0 0.0
    %1322 = vmatpush1.msra.mxu0 0.0
    %1323 = vmatprep.subr.mxu0 0.0
    %1324 = vmatpush1.msra.mxu0 0.0
    %1325 = vmatprep.subr.mxu0 0.0
    %1326 = vmatpush1.msra.mxu0 0.0
    %1327 = vmatprep.subr.mxu0 0.0
    %1328 = vmatpush1.msra.mxu0 0.0
    %1329 = vmatprep.subr.mxu0 0.0
    %1330 = vmatpush1.msra.mxu0 0.0
    %1331 = vmatprep.subr.mxu0 0.0
    %1332 = vmatpush1.msra.mxu0 0.0
    %1333 = vmatprep.subr.mxu0 0.0
    %1334 = vmatpush1.msra.mxu0 0.0
    %1335 = vmatprep.subr.mxu0 0.0
    %1336 = vmatpush1.msra.mxu0 0.0
    %1337 = vmatprep.subr.mxu0 0.0
    %1338 = vmatpush1.msra.mxu0 0.0
    %1339 = vmatprep.subr.mxu0 0.0
    %1340 = vmatpush1.msra.mxu0 0.0
    %1341 = vmatprep.subr.mxu0 0.0
    %1342 = vmatpush1.msra.mxu0 0.0
    %1343 = vmatprep.subr.mxu0 0.0
    %1344 = vmatpush1.msra.mxu0 0.0
    %1345 = vmatprep.subr.mxu0 0.0
    %1346 = vmatpush1.msra.mxu0 0.0
    %1347 = vmatprep.subr.mxu0 0.0
    %1348 = vmatpush1.msra.mxu0 0.0
    %1349 = vmatprep.subr.mxu0 0.0
    %1350 = vmatpush1.msra.mxu0 0.0
    %1351 = vmatprep.subr.mxu0 0.0
    %1352 = vmatpush1.msra.mxu0 0.0
    %1353 = vmatprep.subr.mxu0 0.0
    %1354 = vmatpush1.msra.mxu0 0.0
    %1355 = vmatprep.subr.mxu0 0.0
    %1356 = vmatpush1.msra.mxu0 0.0
    %1357 = vmatprep.subr.mxu0 0.0
    %1358 = vmatpush1.msra.mxu0 0.0
    %1359 = vmatprep.subr.mxu0 0.0
    %1360 = vmatpush1.msra.mxu0 0.0
    %1361 = vmatprep.subr.mxu0 0.0
    %1362 = vmatpush1.msra.mxu0 0.0
    %1363 = vmatprep.mubr.f32.mxu0 0.0
    %1364 = vmatmul.mubr.f32.gmra.mrb[0].mxu0 %v1297
    %v1365 = vpop.f32.mrb[0].mxu0
    %v1366 = vadd.f32 0.0, %v1365
    %v1367 = vpop.f32.mrb[0].mxu0
    %1368 = vdwg.mxu0
    %v1369 = vadd.f32 %v1296, %v1366
    %v1370 = vsub.f32 0.0, %v1369
    %v1371 = vmul.f32 %v1370, 1.442695
    %v1372 = vpow.pop %v1371
    %v1373 = vadd.f32 %v1372, 1.0
    %v1374 = vrcp.pop %v1373
    %v1375 = vmul.f32 1.0, %v1374
    %v1376 = vtanh.pop %v1369
    %v1377 = vmul.f32 %v1375, %v1283
    %1379 = vrot.lane.b32.xlu0 %v1376, 32
    %v1380 = vpop.permute.xlu0 %1379
    %v1382 = vmul.f32 %v1375, %v1380
    %1384 = vrot.lane.b32.xlu0 %v1382, 32
    %v1385 = vpop.permute.xlu0 %1384
    %v1387 = vadd.f32 %v1377, %v1385
    %v1388 = vtanh.pop %v1387
    %1390 = vrot.lane.b32.xlu0 %v1388, 32
    %v1391 = vpop.permute.xlu0 %1390
    %v1393 = vmul.f32 %v1375, %v1391
    %1395 = vrot.lane.b32.xlu0 %v1393, 64
    %v1396 = vpop.permute.xlu0 %1395
    %1398 = vst.msk [vmem:[%s874] sm:$0xff] %vm341, %v1396
    %1399 = vst.msk [vmem:[%s872] sm:$0xff] %vm344, %v1396
    %v1400 = vld [vmem:[#allocation2 + $0x58] sm:$0xff]
    %v1401 = vsel %vm238, %v1396, 0
    %1403 = vmatprep.subr.mxu0 0.0
    %1404 = vmatpush1.msra.mxu0 %v233
    %1405 = vmatprep.subr.mxu0 0.0
    %1406 = vmatpush1.msra.mxu0 %v234
    %1407 = vmatprep.subr.mxu0 0.0
    %1408 = vmatpush1.msra.mxu0 %v235
    %1409 = vmatprep.subr.mxu0 0.0
    %1410 = vmatpush1.msra.mxu0 %v236
    %1411 = vmatprep.subr.mxu0 0.0
    %1412 = vmatpush1.msra.mxu0 0.0
    %1413 = vmatprep.subr.mxu0 0.0
    %1414 = vmatpush1.msra.mxu0 0.0
    %1415 = vmatprep.subr.mxu0 0.0
    %1416 = vmatpush1.msra.mxu0 0.0
    %1417 = vmatprep.subr.mxu0 0.0
    %1418 = vmatpush1.msra.mxu0 0.0
    %1419 = vmatprep.subr.mxu0 0.0
    %1420 = vmatpush1.msra.mxu0 0.0
    %1421 = vmatprep.subr.mxu0 0.0
    %1422 = vmatpush1.msra.mxu0 0.0
    %1423 = vmatprep.subr.mxu0 0.0
    %1424 = vmatpush1.msra.mxu0 0.0
    %1425 = vmatprep.subr.mxu0 0.0
    %1426 = vmatpush1.msra.mxu0 0.0
    %1427 = vmatprep.subr.mxu0 0.0
    %1428 = vmatpush1.msra.mxu0 0.0
    %1429 = vmatprep.subr.mxu0 0.0
    %1430 = vmatpush1.msra.mxu0 0.0
    %1431 = vmatprep.subr.mxu0 0.0
    %1432 = vmatpush1.msra.mxu0 0.0
    %1433 = vmatprep.subr.mxu0 0.0
    %1434 = vmatpush1.msra.mxu0 0.0
    %1435 = vmatprep.subr.mxu0 0.0
    %1436 = vmatpush1.msra.mxu0 0.0
    %1437 = vmatprep.subr.mxu0 0.0
    %1438 = vmatpush1.msra.mxu0 0.0
    %1439 = vmatprep.subr.mxu0 0.0
    %1440 = vmatpush1.msra.mxu0 0.0
    %1441 = vmatprep.subr.mxu0 0.0
    %1442 = vmatpush1.msra.mxu0 0.0
    %1443 = vmatprep.subr.mxu0 0.0
    %1444 = vmatpush1.msra.mxu0 0.0
    %1445 = vmatprep.subr.mxu0 0.0
    %1446 = vmatpush1.msra.mxu0 0.0
    %1447 = vmatprep.subr.mxu0 0.0
    %1448 = vmatpush1.msra.mxu0 0.0
    %1449 = vmatprep.subr.mxu0 0.0
    %1450 = vmatpush1.msra.mxu0 0.0
    %1451 = vmatprep.subr.mxu0 0.0
    %1452 = vmatpush1.msra.mxu0 0.0
    %1453 = vmatprep.subr.mxu0 0.0
    %1454 = vmatpush1.msra.mxu0 0.0
    %1455 = vmatprep.subr.mxu0 0.0
    %1456 = vmatpush1.msra.mxu0 0.0
    %1457 = vmatprep.subr.mxu0 0.0
    %1458 = vmatpush1.msra.mxu0 0.0
    %1459 = vmatprep.subr.mxu0 0.0
    %1460 = vmatpush1.msra.mxu0 0.0
    %1461 = vmatprep.subr.mxu0 0.0
    %1462 = vmatpush1.msra.mxu0 0.0
    %1463 = vmatprep.subr.mxu0 0.0
    %1464 = vmatpush1.msra.mxu0 0.0
    %1465 = vmatprep.subr.mxu0 0.0
    %1466 = vmatpush1.msra.mxu0 0.0
    %1467 = vmatprep.mubr.f32.mxu0 0.0
    %1468 = vmatmul.mubr.f32.gmra.mrb[0].mxu0 %v1401
    %v1469 = vpop.f32.mrb[0].mxu0
    %v1470 = vadd.f32 0.0, %v1469
    %v1471 = vpop.f32.mrb[0].mxu0
    %1472 = vdwg.mxu0
    %v1473 = vadd.f32 %v1400, %v1470
    %v1474 = vsub.f32 0.0, %v1473
    %v1475 = vmul.f32 %v1474, 1.442695
    %v1476 = vpow.pop %v1475
    %v1477 = vadd.f32 %v1476, 1.0
    %v1478 = vrcp.pop %v1477
    %v1479 = vmul.f32 1.0, %v1478
    %v1480 = vtanh.pop %v1473
    %v1481 = vmul.f32 %v1479, %v1387
    %1483 = vrot.lane.b32.xlu0 %v1480, 32
    %v1484 = vpop.permute.xlu0 %1483
    %v1486 = vmul.f32 %v1479, %v1484
    %1488 = vrot.lane.b32.xlu0 %v1486, 32
    %v1489 = vpop.permute.xlu0 %1488
    %v1491 = vadd.f32 %v1481, %v1489
    %v1492 = vtanh.pop %v1491
    %1494 = vrot.lane.b32.xlu0 %v1492, 32
    %v1495 = vpop.permute.xlu0 %1494
    %v1497 = vmul.f32 %v1479, %v1495
    %1499 = vrot.lane.b32.xlu0 %v1497, 64
    %v1500 = vpop.permute.xlu0 %1499
    %1502 = vst.msk [vmem:[%s768] sm:$0xff] %vm341, %v1500
    %1503 = vst.msk [vmem:[%s766] sm:$0xff] %vm344, %v1500
    %v1504 = vld [vmem:[#allocation2 + $0x60] sm:$0xff]
    %v1505 = vsel %vm238, %v1500, 0
    %1507 = vmatprep.subr.mxu0 0.0
    %1508 = vmatpush1.msra.mxu0 %v233
    %1509 = vmatprep.subr.mxu0 0.0
    %1510 = vmatpush1.msra.mxu0 %v234
    %1511 = vmatprep.subr.mxu0 0.0
    %1512 = vmatpush1.msra.mxu0 %v235
    %1513 = vmatprep.subr.mxu0 0.0
    %1514 = vmatpush1.msra.mxu0 %v236
    %1515 = vmatprep.subr.mxu0 0.0
    %1516 = vmatpush1.msra.mxu0 0.0
    %1517 = vmatprep.subr.mxu0 0.0
    %1518 = vmatpush1.msra.mxu0 0.0
    %1519 = vmatprep.subr.mxu0 0.0
    %1520 = vmatpush1.msra.mxu0 0.0
    %1521 = vmatprep.subr.mxu0 0.0
    %1522 = vmatpush1.msra.mxu0 0.0
    %1523 = vmatprep.subr.mxu0 0.0
    %1524 = vmatpush1.msra.mxu0 0.0
    %1525 = vmatprep.subr.mxu0 0.0
    %1526 = vmatpush1.msra.mxu0 0.0
    %1527 = vmatprep.subr.mxu0 0.0
    %1528 = vmatpush1.msra.mxu0 0.0
    %1529 = vmatprep.subr.mxu0 0.0
    %1530 = vmatpush1.msra.mxu0 0.0
    %1531 = vmatprep.subr.mxu0 0.0
    %1532 = vmatpush1.msra.mxu0 0.0
    %1533 = vmatprep.subr.mxu0 0.0
    %1534 = vmatpush1.msra.mxu0 0.0
    %1535 = vmatprep.subr.mxu0 0.0
    %1536 = vmatpush1.msra.mxu0 0.0
    %1537 = vmatprep.subr.mxu0 0.0
    %1538 = vmatpush1.msra.mxu0 0.0
    %1539 = vmatprep.subr.mxu0 0.0
    %1540 = vmatpush1.msra.mxu0 0.0
    %1541 = vmatprep.subr.mxu0 0.0
    %1542 = vmatpush1.msra.mxu0 0.0
    %1543 = vmatprep.subr.mxu0 0.0
    %1544 = vmatpush1.msra.mxu0 0.0
    %1545 = vmatprep.subr.mxu0 0.0
    %1546 = vmatpush1.msra.mxu0 0.0
    %1547 = vmatprep.subr.mxu0 0.0
    %1548 = vmatpush1.msra.mxu0 0.0
    %1549 = vmatprep.subr.mxu0 0.0
    %1550 = vmatpush1.msra.mxu0 0.0
    %1551 = vmatprep.subr.mxu0 0.0
    %1552 = vmatpush1.msra.mxu0 0.0
    %1553 = vmatprep.subr.mxu0 0.0
    %1554 = vmatpush1.msra.mxu0 0.0
    %1555 = vmatprep.subr.mxu0 0.0
    %1556 = vmatpush1.msra.mxu0 0.0
    %1557 = vmatprep.subr.mxu0 0.0
    %1558 = vmatpush1.msra.mxu0 0.0
    %1559 = vmatprep.subr.mxu0 0.0
    %1560 = vmatpush1.msra.mxu0 0.0
    %1561 = vmatprep.subr.mxu0 0.0
    %1562 = vmatpush1.msra.mxu0 0.0
    %1563 = vmatprep.subr.mxu0 0.0
    %1564 = vmatpush1.msra.mxu0 0.0
    %1565 = vmatprep.subr.mxu0 0.0
    %1566 = vmatpush1.msra.mxu0 0.0
    %1567 = vmatprep.subr.mxu0 0.0
    %1568 = vmatpush1.msra.mxu0 0.0
    %1569 = vmatprep.subr.mxu0 0.0
    %1570 = vmatpush1.msra.mxu0 0.0
    %1571 = vmatprep.mubr.f32.mxu0 0.0
    %1572 = vmatmul.mubr.f32.gmra.mrb[0].mxu0 %v1505
    %v1573 = vpop.f32.mrb[0].mxu0
    %v1574 = vadd.f32 0.0, %v1573
    %v1575 = vpop.f32.mrb[0].mxu0
    %1576 = vdwg.mxu0
    %v1577 = vadd.f32 %v1504, %v1574
    %v1578 = vsub.f32 0.0, %v1577
    %v1579 = vmul.f32 %v1578, 1.442695
    %v1580 = vpow.pop %v1579
    %v1581 = vadd.f32 %v1580, 1.0
    %v1582 = vrcp.pop %v1581
    %v1583 = vmul.f32 1.0, %v1582
    %v1584 = vtanh.pop %v1577
    %v1585 = vmul.f32 %v1583, %v1491
    %1587 = vrot.lane.b32.xlu0 %v1584, 32
    %v1588 = vpop.permute.xlu0 %1587
    %v1590 = vmul.f32 %v1583, %v1588
    %1592 = vrot.lane.b32.xlu0 %v1590, 32
    %v1593 = vpop.permute.xlu0 %1592
    %v1595 = vadd.f32 %v1585, %v1593
    %v1596 = vtanh.pop %v1595
    %1598 = vrot.lane.b32.xlu0 %v1596, 32
    %v1599 = vpop.permute.xlu0 %1598
    %v1601 = vmul.f32 %v1583, %v1599
    %1603 = vrot.lane.b32.xlu0 %v1601, 64
    %v1604 = vpop.permute.xlu0 %1603
    %1606 = vst.msk [vmem:[%s662] sm:$0xff] %vm341, %v1604
    %1607 = vst.msk [vmem:[%s660] sm:$0xff] %vm344, %v1604
    %v1608 = vld [vmem:[#allocation2 + $0x68] sm:$0xff]
    %v1609 = vsel %vm238, %v1604, 0
    %1611 = vmatprep.subr.mxu0 0.0
    %1612 = vmatpush1.msra.mxu0 %v233
    %1613 = vmatprep.subr.mxu0 0.0
    %1614 = vmatpush1.msra.mxu0 %v234
    %1615 = vmatprep.subr.mxu0 0.0
    %1616 = vmatpush1.msra.mxu0 %v235
    %1617 = vmatprep.subr.mxu0 0.0
    %1618 = vmatpush1.msra.mxu0 %v236
    %1619 = vmatprep.subr.mxu0 0.0
    %1620 = vmatpush1.msra.mxu0 0.0
    %1621 = vmatprep.subr.mxu0 0.0
    %1622 = vmatpush1.msra.mxu0 0.0
    %1623 = vmatprep.subr.mxu0 0.0
    %1624 = vmatpush1.msra.mxu0 0.0
    %1625 = vmatprep.subr.mxu0 0.0
    %1626 = vmatpush1.msra.mxu0 0.0
    %1627 = vmatprep.subr.mxu0 0.0
    %1628 = vmatpush1.msra.mxu0 0.0
    %1629 = vmatprep.subr.mxu0 0.0
    %1630 = vmatpush1.msra.mxu0 0.0
    %1631 = vmatprep.subr.mxu0 0.0
    %1632 = vmatpush1.msra.mxu0 0.0
    %1633 = vmatprep.subr.mxu0 0.0
    %1634 = vmatpush1.msra.mxu0 0.0
    %1635 = vmatprep.subr.mxu0 0.0
    %1636 = vmatpush1.msra.mxu0 0.0
    %1637 = vmatprep.subr.mxu0 0.0
    %1638 = vmatpush1.msra.mxu0 0.0
    %1639 = vmatprep.subr.mxu0 0.0
    %1640 = vmatpush1.msra.mxu0 0.0
    %1641 = vmatprep.subr.mxu0 0.0
    %1642 = vmatpush1.msra.mxu0 0.0
    %1643 = vmatprep.subr.mxu0 0.0
    %1644 = vmatpush1.msra.mxu0 0.0
    %1645 = vmatprep.subr.mxu0 0.0
    %1646 = vmatpush1.msra.mxu0 0.0
    %1647 = vmatprep.subr.mxu0 0.0
    %1648 = vmatpush1.msra.mxu0 0.0
    %1649 = vmatprep.subr.mxu0 0.0
    %1650 = vmatpush1.msra.mxu0 0.0
    %1651 = vmatprep.subr.mxu0 0.0
    %1652 = vmatpush1.msra.mxu0 0.0
    %1653 = vmatprep.subr.mxu0 0.0
    %1654 = vmatpush1.msra.mxu0 0.0
    %1655 = vmatprep.subr.mxu0 0.0
    %1656 = vmatpush1.msra.mxu0 0.0
    %1657 = vmatprep.subr.mxu0 0.0
    %1658 = vmatpush1.msra.mxu0 0.0
    %1659 = vmatprep.subr.mxu0 0.0
    %1660 = vmatpush1.msra.mxu0 0.0
    %1661 = vmatprep.subr.mxu0 0.0
    %1662 = vmatpush1.msra.mxu0 0.0
    %1663 = vmatprep.subr.mxu0 0.0
    %1664 = vmatpush1.msra.mxu0 0.0
    %1665 = vmatprep.subr.mxu0 0.0
    %1666 = vmatpush1.msra.mxu0 0.0
    %1667 = vmatprep.subr.mxu0 0.0
    %1668 = vmatpush1.msra.mxu0 0.0
    %1669 = vmatprep.subr.mxu0 0.0
    %1670 = vmatpush1.msra.mxu0 0.0
    %1671 = vmatprep.subr.mxu0 0.0
    %1672 = vmatpush1.msra.mxu0 0.0
    %1673 = vmatprep.subr.mxu0 0.0
    %1674 = vmatpush1.msra.mxu0 0.0
    %1675 = vmatprep.mubr.f32.mxu0 0.0
    %1676 = vmatmul.mubr.f32.gmra.mrb[0].mxu0 %v1609
    %v1677 = vpop.f32.mrb[0].mxu0
    %v1678 = vadd.f32 0.0, %v1677
    %v1679 = vpop.f32.mrb[0].mxu0
    %1680 = vdwg.mxu0
    %v1681 = vadd.f32 %v1608, %v1678
    %v1682 = vsub.f32 0.0, %v1681
    %v1683 = vmul.f32 %v1682, 1.442695
    %v1684 = vpow.pop %v1683
    %v1685 = vadd.f32 %v1684, 1.0
    %v1686 = vrcp.pop %v1685
    %v1687 = vmul.f32 1.0, %v1686
    %v1688 = vtanh.pop %v1681
    %v1689 = vmul.f32 %v1687, %v1595
    %1691 = vrot.lane.b32.xlu0 %v1688, 32
    %v1692 = vpop.permute.xlu0 %1691
    %v1694 = vmul.f32 %v1687, %v1692
    %1696 = vrot.lane.b32.xlu0 %v1694, 32
    %v1697 = vpop.permute.xlu0 %1696
    %v1699 = vadd.f32 %v1689, %v1697
    %v1700 = vtanh.pop %v1699
    %1702 = vrot.lane.b32.xlu0 %v1700, 32
    %v1703 = vpop.permute.xlu0 %1702
    %v1705 = vmul.f32 %v1687, %v1703
    %1707 = vrot.lane.b32.xlu0 %v1705, 64
    %v1708 = vpop.permute.xlu0 %1707
    %1710 = vst.msk [vmem:[%s556] sm:$0xff] %vm341, %v1708
    %1711 = vst.msk [vmem:[%s554] sm:$0xff] %vm344, %v1708
    %v1712 = vld [vmem:[#allocation2 + $0x70] sm:$0xff]
    %v1713 = vsel %vm238, %v1708, 0
    %1715 = vmatprep.subr.mxu0 0.0
    %1716 = vmatpush1.msra.mxu0 %v233
    %1717 = vmatprep.subr.mxu0 0.0
    %1718 = vmatpush1.msra.mxu0 %v234
    %1719 = vmatprep.subr.mxu0 0.0
    %1720 = vmatpush1.msra.mxu0 %v235
    %1721 = vmatprep.subr.mxu0 0.0
    %1722 = vmatpush1.msra.mxu0 %v236
    %1723 = vmatprep.subr.mxu0 0.0
    %1724 = vmatpush1.msra.mxu0 0.0
    %1725 = vmatprep.subr.mxu0 0.0
    %1726 = vmatpush1.msra.mxu0 0.0
    %1727 = vmatprep.subr.mxu0 0.0
    %1728 = vmatpush1.msra.mxu0 0.0
    %1729 = vmatprep.subr.mxu0 0.0
    %1730 = vmatpush1.msra.mxu0 0.0
    %1731 = vmatprep.subr.mxu0 0.0
    %1732 = vmatpush1.msra.mxu0 0.0
    %1733 = vmatprep.subr.mxu0 0.0
    %1734 = vmatpush1.msra.mxu0 0.0
    %1735 = vmatprep.subr.mxu0 0.0
    %1736 = vmatpush1.msra.mxu0 0.0
    %1737 = vmatprep.subr.mxu0 0.0
    %1738 = vmatpush1.msra.mxu0 0.0
    %1739 = vmatprep.subr.mxu0 0.0
    %1740 = vmatpush1.msra.mxu0 0.0
    %1741 = vmatprep.subr.mxu0 0.0
    %1742 = vmatpush1.msra.mxu0 0.0
    %1743 = vmatprep.subr.mxu0 0.0
    %1744 = vmatpush1.msra.mxu0 0.0
    %1745 = vmatprep.subr.mxu0 0.0
    %1746 = vmatpush1.msra.mxu0 0.0
    %1747 = vmatprep.subr.mxu0 0.0
    %1748 = vmatpush1.msra.mxu0 0.0
    %1749 = vmatprep.subr.mxu0 0.0
    %1750 = vmatpush1.msra.mxu0 0.0
    %1751 = vmatprep.subr.mxu0 0.0
    %1752 = vmatpush1.msra.mxu0 0.0
    %1753 = vmatprep.subr.mxu0 0.0
    %1754 = vmatpush1.msra.mxu0 0.0
    %1755 = vmatprep.subr.mxu0 0.0
    %1756 = vmatpush1.msra.mxu0 0.0
    %1757 = vmatprep.subr.mxu0 0.0
    %1758 = vmatpush1.msra.mxu0 0.0
    %1759 = vmatprep.subr.mxu0 0.0
    %1760 = vmatpush1.msra.mxu0 0.0
    %1761 = vmatprep.subr.mxu0 0.0
    %1762 = vmatpush1.msra.mxu0 0.0
    %1763 = vmatprep.subr.mxu0 0.0
    %1764 = vmatpush1.msra.mxu0 0.0
    %1765 = vmatprep.subr.mxu0 0.0
    %1766 = vmatpush1.msra.mxu0 0.0
    %1767 = vmatprep.subr.mxu0 0.0
    %1768 = vmatpush1.msra.mxu0 0.0
    %1769 = vmatprep.subr.mxu0 0.0
    %1770 = vmatpush1.msra.mxu0 0.0
    %1771 = vmatprep.subr.mxu0 0.0
    %1772 = vmatpush1.msra.mxu0 0.0
    %1773 = vmatprep.subr.mxu0 0.0
    %1774 = vmatpush1.msra.mxu0 0.0
    %1775 = vmatprep.subr.mxu0 0.0
    %1776 = vmatpush1.msra.mxu0 0.0
    %1777 = vmatprep.subr.mxu0 0.0
    %1778 = vmatpush1.msra.mxu0 0.0
    %1779 = vmatprep.mubr.f32.mxu0 0.0
    %1780 = vmatmul.mubr.f32.gmra.mrb[0].mxu0 %v1713
    %v1781 = vpop.f32.mrb[0].mxu0
    %v1782 = vadd.f32 0.0, %v1781
    %v1783 = vpop.f32.mrb[0].mxu0
    %1784 = vdwg.mxu0
    %v1785 = vadd.f32 %v1712, %v1782
    %v1786 = vsub.f32 0.0, %v1785
    %v1787 = vmul.f32 %v1786, 1.442695
    %v1788 = vpow.pop %v1787
    %v1789 = vadd.f32 %v1788, 1.0
    %v1790 = vrcp.pop %v1789
    %v1791 = vmul.f32 1.0, %v1790
    %v1792 = vtanh.pop %v1785
    %v1793 = vmul.f32 %v1791, %v1699
    %1795 = vrot.lane.b32.xlu0 %v1792, 32
    %v1796 = vpop.permute.xlu0 %1795
    %v1798 = vmul.f32 %v1791, %v1796
    %1800 = vrot.lane.b32.xlu0 %v1798, 32
    %v1801 = vpop.permute.xlu0 %1800
    %v1803 = vadd.f32 %v1793, %v1801
    %v1804 = vtanh.pop %v1803
    %1806 = vrot.lane.b32.xlu0 %v1804, 32
    %v1807 = vpop.permute.xlu0 %1806
    %v1809 = vmul.f32 %v1791, %v1807
    %1811 = vrot.lane.b32.xlu0 %v1809, 64
    %v1812 = vpop.permute.xlu0 %1811
    %1814 = vst.msk [vmem:[%s450] sm:$0xff] %vm341, %v1812
    %1815 = vst.msk [vmem:[%s448] sm:$0xff] %vm344, %v1812
    %v1816 = vld [vmem:[#allocation2 + $0x78] sm:$0xff]
    %v1817 = vsel %vm238, %v1812, 0
    %1819 = vmatprep.subr.mxu0 0.0
    %1820 = vmatpush1.msra.mxu0 %v233
    %1821 = vmatprep.subr.mxu0 0.0
    %1822 = vmatpush1.msra.mxu0 %v234
    %1823 = vmatprep.subr.mxu0 0.0
    %1824 = vmatpush1.msra.mxu0 %v235
    %1825 = vmatprep.subr.mxu0 0.0
    %1826 = vmatpush1.msra.mxu0 %v236
    %1827 = vmatprep.subr.mxu0 0.0
    %1828 = vmatpush1.msra.mxu0 0.0
    %1829 = vmatprep.subr.mxu0 0.0
    %1830 = vmatpush1.msra.mxu0 0.0
    %1831 = vmatprep.subr.mxu0 0.0
    %1832 = vmatpush1.msra.mxu0 0.0
    %1833 = vmatprep.subr.mxu0 0.0
    %1834 = vmatpush1.msra.mxu0 0.0
    %1835 = vmatprep.subr.mxu0 0.0
    %1836 = vmatpush1.msra.mxu0 0.0
    %1837 = vmatprep.subr.mxu0 0.0
    %1838 = vmatpush1.msra.mxu0 0.0
    %1839 = vmatprep.subr.mxu0 0.0
    %1840 = vmatpush1.msra.mxu0 0.0
    %1841 = vmatprep.subr.mxu0 0.0
    %1842 = vmatpush1.msra.mxu0 0.0
    %1843 = vmatprep.subr.mxu0 0.0
    %1844 = vmatpush1.msra.mxu0 0.0
    %1845 = vmatprep.subr.mxu0 0.0
    %1846 = vmatpush1.msra.mxu0 0.0
    %1847 = vmatprep.subr.mxu0 0.0
    %1848 = vmatpush1.msra.mxu0 0.0
    %1849 = vmatprep.subr.mxu0 0.0
    %1850 = vmatpush1.msra.mxu0 0.0
    %1851 = vmatprep.subr.mxu0 0.0
    %1852 = vmatpush1.msra.mxu0 0.0
    %1853 = vmatprep.subr.mxu0 0.0
    %1854 = vmatpush1.msra.mxu0 0.0
    %1855 = vmatprep.subr.mxu0 0.0
    %1856 = vmatpush1.msra.mxu0 0.0
    %1857 = vmatprep.subr.mxu0 0.0
    %1858 = vmatpush1.msra.mxu0 0.0
    %1859 = vmatprep.subr.mxu0 0.0
    %1860 = vmatpush1.msra.mxu0 0.0
    %1861 = vmatprep.subr.mxu0 0.0
    %1862 = vmatpush1.msra.mxu0 0.0
    %1863 = vmatprep.subr.mxu0 0.0
    %1864 = vmatpush1.msra.mxu0 0.0
    %1865 = vmatprep.subr.mxu0 0.0
    %1866 = vmatpush1.msra.mxu0 0.0
    %1867 = vmatprep.subr.mxu0 0.0
    %1868 = vmatpush1.msra.mxu0 0.0
    %1869 = vmatprep.subr.mxu0 0.0
    %1870 = vmatpush1.msra.mxu0 0.0
    %1871 = vmatprep.subr.mxu0 0.0
    %1872 = vmatpush1.msra.mxu0 0.0
    %1873 = vmatprep.subr.mxu0 0.0
    %1874 = vmatpush1.msra.mxu0 0.0
    %1875 = vmatprep.subr.mxu0 0.0
    %1876 = vmatpush1.msra.mxu0 0.0
    %1877 = vmatprep.subr.mxu0 0.0
    %1878 = vmatpush1.msra.mxu0 0.0
    %1879 = vmatprep.subr.mxu0 0.0
    %1880 = vmatpush1.msra.mxu0 0.0
    %1881 = vmatprep.subr.mxu0 0.0
    %1882 = vmatpush1.msra.mxu0 0.0
    %1883 = vmatprep.mubr.f32.mxu0 0.0
    %1884 = vmatmul.mubr.f32.gmra.mrb[0].mxu0 %v1817
    %v1885 = vpop.f32.mrb[0].mxu0
    %v1886 = vadd.f32 0.0, %v1885
    %v1887 = vpop.f32.mrb[0].mxu0
    %1888 = vdwg.mxu0
    %v1889 = vadd.f32 %v1816, %v1886
    %v1890 = vsub.f32 0.0, %v1889
    %v1891 = vmul.f32 %v1890, 1.442695
    %v1892 = vpow.pop %v1891
    %v1893 = vadd.f32 %v1892, 1.0
    %v1894 = vrcp.pop %v1893
    %v1895 = vmul.f32 1.0, %v1894
    %v1896 = vtanh.pop %v1889
    %v1897 = vmul.f32 %v1895, %v1803
    %1899 = vrot.lane.b32.xlu0 %v1896, 32
    %v1900 = vpop.permute.xlu0 %1899
    %v1902 = vmul.f32 %v1895, %v1900
    %1904 = vrot.lane.b32.xlu0 %v1902, 32
    %v1905 = vpop.permute.xlu0 %1904
    %v1907 = vadd.f32 %v1897, %v1905
    %v1908 = vtanh.pop %v1907
    %1910 = vrot.lane.b32.xlu0 %v1908, 32
    %v1911 = vpop.permute.xlu0 %1910
    %v1913 = vmul.f32 %v1895, %v1911
    %1915 = vrot.lane.b32.xlu0 %v1913, 64
    %v1916 = vpop.permute.xlu0 %1915
    %1918 = vst.msk [vmem:[%s343] sm:$0xff] %vm341, %v1916
    %1919 = vst.msk [vmem:[#allocation3] sm:$0xff] %vm344, %v1916
    %v1920 = vld [vmem:[#allocation3] sm:$0xff]
    %v1921 = vld [vmem:[#allocation3 + $0x8] sm:$0xff]
    %v1922 = vld [vmem:[#allocation3 + $0x10] sm:$0xff]
    %v1923 = vld [vmem:[#allocation3 + $0x18] sm:$0xff]
    %v1924 = vld [vmem:[#allocation3 + $0x20] sm:$0xff]
    %v1925 = vld [vmem:[#allocation3 + $0x28] sm:$0xff]
    %v1926 = vld [vmem:[#allocation3 + $0x30] sm:$0xff]
    %v1927 = vld [vmem:[#allocation3 + $0x38] sm:$0xff]
    %v1928 = vld [vmem:[#allocation3 + $0x40] sm:$0xff]
    %v1929 = vld [vmem:[#allocation3 + $0x48] sm:$0xff]
    %v1930 = vld [vmem:[#allocation3 + $0x50] sm:$0xff]
    %v1931 = vld [vmem:[#allocation3 + $0x58] sm:$0xff]
    %v1932 = vld [vmem:[#allocation3 + $0x60] sm:$0xff]
    %v1933 = vld [vmem:[#allocation3 + $0x68] sm:$0xff]
    %v1934 = vld [vmem:[#allocation3 + $0x70] sm:$0xff]
    %v1935 = vld [vmem:[#allocation3 + $0x78] sm:$0xff]
    %v1936 = vld [vmem:[#allocation7 + $0xa0] sm:$0x1]
    %v1937 = vlaneseq
    %v1938 = vshrl.u32 %v1937, 7
    %v1939 = vsub.s32 0, %v1938
    %v1940 = vrot.slane %v1936, %v1939
    %v1941 = vmul.f32 %v1920, %v1940
    %v1942 = vmul.f32 %v1921, %v1940
    %v1943 = vmul.f32 %v1922, %v1940
    %v1944 = vmul.f32 %v1923, %v1940
    %v1945 = vmul.f32 %v1924, %v1940
    %v1946 = vmul.f32 %v1925, %v1940
    %v1947 = vmul.f32 %v1926, %v1940
    %v1948 = vmul.f32 %v1927, %v1940
    %v1949 = vmul.f32 %v1928, %v1940
    %v1950 = vmul.f32 %v1929, %v1940
    %v1951 = vmul.f32 %v1930, %v1940
    %v1952 = vmul.f32 %v1931, %v1940
    %v1953 = vmul.f32 %v1932, %v1940
    %v1954 = vmul.f32 %v1933, %v1940
    %v1955 = vmul.f32 %v1934, %v1940
    %v1956 = vmul.f32 %v1935, %v1940
    %v1957 = vsel %vm238, %v1941, 0.0
    %1958 = vadd.xlane.f32.xlu0 %v1957
    %v1959 = vpop.xlane.xlu0 %1958
    %v1960 = vsel %vm238, %v1942, 0.0
    %1961 = vadd.xlane.f32.xlu0 %v1960
    %v1962 = vpop.xlane.xlu0 %1961
    %v1963 = vsel %vm238, %v1943, 0.0
    %1964 = vadd.xlane.f32.xlu0 %v1963
    %v1965 = vpop.xlane.xlu0 %1964
    %v1966 = vsel %vm238, %v1944, 0.0
    %1967 = vadd.xlane.f32.xlu0 %v1966
    %v1968 = vpop.xlane.xlu0 %1967
    %v1969 = vsel %vm238, %v1945, 0.0
    %1970 = vadd.xlane.f32.xlu0 %v1969
    %v1971 = vpop.xlane.xlu0 %1970
    %v1972 = vsel %vm238, %v1946, 0.0
    %1973 = vadd.xlane.f32.xlu0 %v1972
    %v1974 = vpop.xlane.xlu0 %1973
    %v1975 = vsel %vm238, %v1947, 0.0
    %1976 = vadd.xlane.f32.xlu0 %v1975
    %v1977 = vpop.xlane.xlu0 %1976
    %v1978 = vsel %vm238, %v1948, 0.0
    %1979 = vadd.xlane.f32.xlu0 %v1978
    %v1980 = vpop.xlane.xlu0 %1979
    %v1981 = vsel %vm238, %v1949, 0.0
    %1982 = vadd.xlane.f32.xlu0 %v1981
    %v1983 = vpop.xlane.xlu0 %1982
    %v1984 = vsel %vm238, %v1950, 0.0
    %1985 = vadd.xlane.f32.xlu0 %v1984
    %v1986 = vpop.xlane.xlu0 %1985
    %v1987 = vsel %vm238, %v1951, 0.0
    %1988 = vadd.xlane.f32.xlu0 %v1987
    %v1989 = vpop.xlane.xlu0 %1988
    %v1990 = vsel %vm238, %v1952, 0.0
    %1991 = vadd.xlane.f32.xlu0 %v1990
    %v1992 = vpop.xlane.xlu0 %1991
    %v1993 = vsel %vm238, %v1953, 0.0
    %1994 = vadd.xlane.f32.xlu0 %v1993
    %v1995 = vpop.xlane.xlu0 %1994
    %v1996 = vsel %vm238, %v1954, 0.0
    %1997 = vadd.xlane.f32.xlu0 %v1996
    %v1998 = vpop.xlane.xlu0 %1997
    %v1999 = vsel %vm238, %v1955, 0.0
    %2000 = vadd.xlane.f32.xlu0 %v1999
    %v2001 = vpop.xlane.xlu0 %2000
    %v2002 = vsel %vm238, %v1956, 0.0
    %2003 = vadd.xlane.f32.xlu0 %v2002
    %v2004 = vpop.xlane.xlu0 %2003
    %v2005 = vmax.f32 %v1959, %v1971
    %v2006 = vmax.f32 %v1962, %v1974
    %v2007 = vmax.f32 %v1965, %v1977
    %v2008 = vmax.f32 %v1968, %v1980
    %v2009 = vmax.f32 %v2005, %v1983
    %v2010 = vmax.f32 %v2006, %v1986
    %v2011 = vmax.f32 %v2007, %v1989
    %v2012 = vmax.f32 %v2008, %v1992
    %v2013 = vmax.f32 %v2009, %v1995
    %v2014 = vmax.f32 %v2010, %v1998
    %v2015 = vmax.f32 %v2011, %v2001
    %v2016 = vmax.f32 %v2012, %v2004
    %v2017 = vmax.f32 %v2013, %v2014
    %v2018 = vmax.f32 %v2015, %v2016
    %v2019 = vmax.f32 %v2017, %v2018
    %v2020 = vsub.f32 %v1959, %v2019
    %v2021 = vsub.f32 %v1962, %v2019
    %v2022 = vsub.f32 %v1965, %v2019
    %v2023 = vsub.f32 %v1968, %v2019
    %v2024 = vsub.f32 %v1971, %v2019
    %v2025 = vsub.f32 %v1974, %v2019
    %v2026 = vsub.f32 %v1977, %v2019
    %v2027 = vsub.f32 %v1980, %v2019
    %v2028 = vsub.f32 %v1983, %v2019
    %v2029 = vsub.f32 %v1986, %v2019
    %v2030 = vsub.f32 %v1989, %v2019
    %v2031 = vsub.f32 %v1992, %v2019
    %v2032 = vsub.f32 %v1995, %v2019
    %v2033 = vsub.f32 %v1998, %v2019
    %v2034 = vsub.f32 %v2001, %v2019
    %v2035 = vsub.f32 %v2004, %v2019
    %v2036 = vmul.f32 %v2020, 1.442695
    %v2037 = vpow.pop %v2036
    %v2038 = vmul.f32 %v2021, 1.442695
    %v2039 = vpow.pop %v2038
    %v2040 = vmul.f32 %v2022, 1.442695
    %v2041 = vpow.pop %v2040
    %v2042 = vmul.f32 %v2023, 1.442695
    %v2043 = vpow.pop %v2042
    %v2044 = vmul.f32 %v2024, 1.442695
    %v2045 = vpow.pop %v2044
    %v2046 = vmul.f32 %v2025, 1.442695
    %v2047 = vpow.pop %v2046
    %v2048 = vmul.f32 %v2026, 1.442695
    %v2049 = vpow.pop %v2048
    %v2050 = vmul.f32 %v2027, 1.442695
    %v2051 = vpow.pop %v2050
    %v2052 = vmul.f32 %v2028, 1.442695
    %v2053 = vpow.pop %v2052
    %v2054 = vmul.f32 %v2029, 1.442695
    %v2055 = vpow.pop %v2054
    %v2056 = vmul.f32 %v2030, 1.442695
    %v2057 = vpow.pop %v2056
    %v2058 = vmul.f32 %v2031, 1.442695
    %v2059 = vpow.pop %v2058
    %v2060 = vmul.f32 %v2032, 1.442695
    %v2061 = vpow.pop %v2060
    %v2062 = vmul.f32 %v2033, 1.442695
    %v2063 = vpow.pop %v2062
    %v2064 = vmul.f32 %v2034, 1.442695
    %v2065 = vpow.pop %v2064
    %v2066 = vmul.f32 %v2035, 1.442695
    %v2067 = vpow.pop %v2066
    %v2068 = vadd.f32 %v2037, %v2039
    %v2069 = vadd.f32 %v2068, %v2041
    %v2070 = vadd.f32 %v2069, %v2043
    %v2071 = vadd.f32 %v2070, %v2045
    %v2072 = vadd.f32 %v2071, %v2047
    %v2073 = vadd.f32 %v2072, %v2049
    %v2074 = vadd.f32 %v2073, %v2051
    %v2075 = vadd.f32 %v2074, %v2053
    %v2076 = vadd.f32 %v2075, %v2055
    %v2077 = vadd.f32 %v2076, %v2057
    %v2078 = vadd.f32 %v2077, %v2059
    %v2079 = vadd.f32 %v2078, %v2061
    %v2080 = vadd.f32 %v2079, %v2063
    %v2081 = vadd.f32 %v2080, %v2065
    %v2082 = vadd.f32 %v2081, %v2067
    %v2083 = vrcp.pop %v2082
    %v2084 = vmul.f32 %v2037, %v2083
    %v2085 = vmul.f32 %v2039, %v2083
    %v2086 = vmul.f32 %v2041, %v2083
    %v2087 = vmul.f32 %v2043, %v2083
    %v2088 = vmul.f32 %v2045, %v2083
    %v2089 = vmul.f32 %v2047, %v2083
    %v2090 = vmul.f32 %v2049, %v2083
    %v2091 = vmul.f32 %v2051, %v2083
    %v2092 = vmul.f32 %v2053, %v2083
    %v2093 = vmul.f32 %v2055, %v2083
    %v2094 = vmul.f32 %v2057, %v2083
    %v2095 = vmul.f32 %v2059, %v2083
    %v2096 = vmul.f32 %v2061, %v2083
    %v2097 = vmul.f32 %v2063, %v2083
    %v2098 = vmul.f32 %v2065, %v2083
    %v2099 = vmul.f32 %v2067, %v2083
    %v2100 = vmul.f32 %v2084, %v1920
    %v2101 = vmul.f32 %v2085, %v1921
    %v2102 = vmul.f32 %v2086, %v1922
    %v2103 = vmul.f32 %v2087, %v1923
    %v2104 = vmul.f32 %v2088, %v1924
    %v2105 = vmul.f32 %v2089, %v1925
    %v2106 = vmul.f32 %v2090, %v1926
    %v2107 = vmul.f32 %v2091, %v1927
    %v2108 = vmul.f32 %v2092, %v1928
    %v2109 = vmul.f32 %v2093, %v1929
    %v2110 = vmul.f32 %v2094, %v1930
    %v2111 = vmul.f32 %v2095, %v1931
    %v2112 = vmul.f32 %v2096, %v1932
    %v2113 = vmul.f32 %v2097, %v1933
    %v2114 = vmul.f32 %v2098, %v1934
    %v2115 = vmul.f32 %v2099, %v1935
    %v2116 = vsel %vm238, %v2100, 0.0
    %v2117 = vsel %vm238, %v2101, 0.0
    %v2118 = vadd.f32 %v2116, %v2117
    %v2119 = vsel %vm238, %v2102, 0.0
    %v2120 = vadd.f32 %v2118, %v2119
    %v2121 = vsel %vm238, %v2103, 0.0
    %v2122 = vadd.f32 %v2120, %v2121
    %v2123 = vsel %vm238, %v2104, 0.0
    %v2124 = vadd.f32 %v2122, %v2123
    %v2125 = vsel %vm238, %v2105, 0.0
    %v2126 = vadd.f32 %v2124, %v2125
    %v2127 = vsel %vm238, %v2106, 0.0
    %v2128 = vadd.f32 %v2126, %v2127
    %v2129 = vsel %vm238, %v2107, 0.0
    %v2130 = vadd.f32 %v2128, %v2129
    %v2131 = vsel %vm238, %v2108, 0.0
    %v2132 = vadd.f32 %v2130, %v2131
    %v2133 = vsel %vm238, %v2109, 0.0
    %v2134 = vadd.f32 %v2132, %v2133
    %v2135 = vsel %vm238, %v2110, 0.0
    %v2136 = vadd.f32 %v2134, %v2135
    %v2137 = vsel %vm238, %v2111, 0.0
    %v2138 = vadd.f32 %v2136, %v2137
    %v2139 = vsel %vm238, %v2112, 0.0
    %v2140 = vadd.f32 %v2138, %v2139
    %v2141 = vsel %vm238, %v2113, 0.0
    %v2142 = vadd.f32 %v2140, %v2141
    %v2143 = vsel %vm238, %v2114, 0.0
    %v2144 = vadd.f32 %v2142, %v2143
    %v2145 = vsel %vm238, %v2115, 0.0
    %v2146 = vadd.f32 %v2144, %v2145
    %v2147 = vld [vmem:[#allocation7 + $0xa8] sm:$0xff]
    %v2148 = vld [vmem:[#allocation7 + $0xb0] sm:$0xff]
    %v2149 = vld [vmem:[#allocation7 + $0xb8] sm:$0xff]
    %v2150 = vld [vmem:[#allocation7 + $0xc0] sm:$0xff]
    %v2151 = vld [vmem:[#allocation7 + $0xc8] sm:$0x1]
    %v2152 = vlaneseq
    %v2153 = vshrl.u32 %v2152, 7
    %v2154 = vsub.s32 0, %v2153
    %v2155 = vrot.slane %v2151, %v2154
    %v2157 = vsel %vm238, %v2146, 0
    %2159 = vmatprep.subr.mxu0 0.0
    %2160 = vmatpush1.msra.mxu0 %v2147
    %2161 = vmatprep.subr.mxu0 0.0
    %2162 = vmatpush1.msra.mxu0 %v2148
    %2163 = vmatprep.subr.mxu0 0.0
    %2164 = vmatpush1.msra.mxu0 %v2149
    %2165 = vmatprep.subr.mxu0 0.0
    %2166 = vmatpush1.msra.mxu0 %v2150
    %2167 = vmatprep.subr.mxu0 0.0
    %2168 = vmatpush1.msra.mxu0 0.0
    %2169 = vmatprep.subr.mxu0 0.0
    %2170 = vmatpush1.msra.mxu0 0.0
    %2171 = vmatprep.subr.mxu0 0.0
    %2172 = vmatpush1.msra.mxu0 0.0
    %2173 = vmatprep.subr.mxu0 0.0
    %2174 = vmatpush1.msra.mxu0 0.0
    %2175 = vmatprep.subr.mxu0 0.0
    %2176 = vmatpush1.msra.mxu0 0.0
    %2177 = vmatprep.subr.mxu0 0.0
    %2178 = vmatpush1.msra.mxu0 0.0
    %2179 = vmatprep.subr.mxu0 0.0
    %2180 = vmatpush1.msra.mxu0 0.0
    %2181 = vmatprep.subr.mxu0 0.0
    %2182 = vmatpush1.msra.mxu0 0.0
    %2183 = vmatprep.subr.mxu0 0.0
    %2184 = vmatpush1.msra.mxu0 0.0
    %2185 = vmatprep.subr.mxu0 0.0
    %2186 = vmatpush1.msra.mxu0 0.0
    %2187 = vmatprep.subr.mxu0 0.0
    %2188 = vmatpush1.msra.mxu0 0.0
    %2189 = vmatprep.subr.mxu0 0.0
    %2190 = vmatpush1.msra.mxu0 0.0
    %2191 = vmatprep.subr.mxu0 0.0
    %2192 = vmatpush1.msra.mxu0 0.0
    %2193 = vmatprep.subr.mxu0 0.0
    %2194 = vmatpush1.msra.mxu0 0.0
    %2195 = vmatprep.subr.mxu0 0.0
    %2196 = vmatpush1.msra.mxu0 0.0
    %2197 = vmatprep.subr.mxu0 0.0
    %2198 = vmatpush1.msra.mxu0 0.0
    %2199 = vmatprep.subr.mxu0 0.0
    %2200 = vmatpush1.msra.mxu0 0.0
    %2201 = vmatprep.subr.mxu0 0.0
    %2202 = vmatpush1.msra.mxu0 0.0
    %2203 = vmatprep.subr.mxu0 0.0
    %2204 = vmatpush1.msra.mxu0 0.0
    %2205 = vmatprep.subr.mxu0 0.0
    %2206 = vmatpush1.msra.mxu0 0.0
    %2207 = vmatprep.subr.mxu0 0.0
    %2208 = vmatpush1.msra.mxu0 0.0
    %2209 = vmatprep.subr.mxu0 0.0
    %2210 = vmatpush1.msra.mxu0 0.0
    %2211 = vmatprep.subr.mxu0 0.0
    %2212 = vmatpush1.msra.mxu0 0.0
    %2213 = vmatprep.subr.mxu0 0.0
    %2214 = vmatpush1.msra.mxu0 0.0
    %2215 = vmatprep.subr.mxu0 0.0
    %2216 = vmatpush1.msra.mxu0 0.0
    %2217 = vmatprep.subr.mxu0 0.0
    %2218 = vmatpush1.msra.mxu0 0.0
    %2219 = vmatprep.subr.mxu0 0.0
    %2220 = vmatpush1.msra.mxu0 0.0
    %2221 = vmatprep.subr.mxu0 0.0
    %2222 = vmatpush1.msra.mxu0 0.0
    %2223 = vmatprep.mubr.f32.mxu0 0.0
    %2224 = vmatmul.mubr.f32.gmra.mrb[0].mxu0 %v2157
    %v2225 = vpop.f32.mrb[0].mxu0
    %v2226 = vadd.f32 %v2155, %v2225
    %v2227 = vpop.f32.mrb[0].mxu0
    %2228 = vdwg.mxu0
    %vm2229 = vcmask 17408
    %2230 = vst.msk [vmem:[#allocation9] sm:$0x3] %vm2229, %v2226
    // Predicated region
    $region18: #{tpu_custom_call.1} parent=1 // pred_check
      _
    $region19: #{tpu_custom_call.1} parent=1 // pred_check_branch
      %2232 = sbr.rel (0) target = $region21
    $region20: #{tpu_custom_call.1} parent=1 // pred_region
      %s2234 = ssub.s32 32, 32
      %2235 = vsyncadd [#allocation6], %s2234
      %s2237 = sshll.u32 [#allocation9], 4
      %s2238 = int_to_ptr.vmem [resolvable:$true] %s2237
      %2240 = dma.vmem_to_hbm [thread:$0]  %s2238, 32, %s2, [#allocation6]
    $region21: #{tpu_custom_call.1} parent=1 // pred_fallthru
      _
    // Predicated region
    $region22: #{tpu_custom_call.1} parent=1 // pred_check
      _
    $region23: #{tpu_custom_call.1} parent=1 // pred_check_branch
      %2242 = sbr.rel (0) target = $region25
    $region24: #{tpu_custom_call.1} parent=1 // pred_region
      %2243 = dma.done [#allocation6], 32
    $region25: #{tpu_custom_call.1} parent=1 // pred_fallthru
      _
    %2244 = vsyncpa [#allocation5], 1
    %2245 = vsyncpa [#allocation8], 1
    %2246 = vsyncpa [#allocation6], 1

</llo_original>
